<compile_context>
chip_gen: v7x
topology: tpu7x:2x2x1
jax: 0.10.0
libtpu: 0.0.40
codegen_flags: <defaults>
</compile_context>

<pallas_src>
import jax
import jax.numpy as jnp
from jax.experimental import pallas as pl
from jax.experimental.pallas import tpu as pltpu

EPS = 1e-5


# ---------------------------------------------------------------------------
# Pallas kernels
# ---------------------------------------------------------------------------
def _conv_bn_relu_pool_kernel(x_ref, w_ref, scale_ref, shift_ref, o_ref):
    """Fused conv (im2col matmul) + eval-BN + ReLU + 2x2 maxpool.

    x_ref:     (1, 4*OWp, K)  bf16  -- patch rows for one (image, pooled-row)
                                       pair, grouped as 4 contiguous blocks of
                                       OWp rows = the 4 taps of each 2x2 window
    w_ref:     (K, C)         bf16
    scale_ref: (1, C)         f32   -- gamma * rsqrt(rv + eps)
    shift_ref: (1, C)         f32   -- (conv_bias - rm) * scale + beta
    o_ref:     (1, OWp, C)    bf16
    """
    acc = jnp.dot(x_ref[0], w_ref[...], preferred_element_type=jnp.float32)  # (4*OWp, C) f32
    y = jnp.maximum(acc * scale_ref[...] + shift_ref[...], 0.0)              # BN -> ReLU (f32)
    q = y.shape[0] // 4
    pooled = jnp.maximum(jnp.maximum(y[0:q], y[q:2 * q]),
                         jnp.maximum(y[2 * q:3 * q], y[3 * q:4 * q]))        # 2x2 maxpool
    o_ref[0] = pooled.astype(o_ref.dtype)


def _linear_kernel(x_ref, w_ref, b_ref, o_ref):
    o_ref[...] = (
        jnp.dot(x_ref[...], w_ref[...], preferred_element_type=jnp.float32) + b_ref[...]
    ).astype(o_ref.dtype)


# ---------------------------------------------------------------------------
# Wrappers (pallas_call + BlockSpecs)
# ---------------------------------------------------------------------------
def conv_bn_relu_pool(patches, w2d, scale, shift, out_dtype=jnp.bfloat16):
    """patches: (G, 4*OWp, K) with G = B * OHp; w2d: (K, C). Returns (G, OWp, C)."""
    G, R, K = patches.shape
    C = w2d.shape[1]
    OWp = R // 4
    return pl.pallas_call(
        _conv_bn_relu_pool_kernel,
        out_shape=jax.ShapeDtypeStruct((G, OWp, C), out_dtype),
        grid=(G,),
        in_specs=[
            pl.BlockSpec((1, R, K), lambda i: (i, 0, 0)),   # patch rows for this pooled row
            pl.BlockSpec((K, C), lambda i: (0, 0)),          # full weight (resident)
            pl.BlockSpec((1, C), lambda i: (0, 0)),          # BN scale
            pl.BlockSpec((1, C), lambda i: (0, 0)),          # BN shift (conv bias folded in)
        ],
        out_specs=pl.BlockSpec((1, OWp, C), lambda i: (i, 0, 0)),
        compiler_params=pltpu.CompilerParams(dimension_semantics=("parallel",)),
    )(
        patches.astype(jnp.bfloat16),
        w2d.astype(jnp.bfloat16),
        scale.reshape(1, C).astype(jnp.float32),
        shift.reshape(1, C).astype(jnp.float32),
    )


def linear(x, w2d, bias):
    """x: (M, K) @ w2d: (K, N) + bias. N is lane-dense (padded to 128 by caller)."""
    M, K = x.shape
    N = w2d.shape[1]
    return pl.pallas_call(
        _linear_kernel,
        out_shape=jax.ShapeDtypeStruct((M, N), jnp.float32),
        grid=(1,),
        in_specs=[
            pl.BlockSpec((M, K), lambda i: (0, 0)),
            pl.BlockSpec((K, N), lambda i: (0, 0)),
            pl.BlockSpec((1, N), lambda i: (0, 0)),
        ],
        out_specs=pl.BlockSpec((M, N), lambda i: (0, 0)),
    )(x.astype(jnp.bfloat16), w2d.astype(jnp.bfloat16), bias.reshape(1, N).astype(jnp.float32))


# ---------------------------------------------------------------------------
# Glue: im2col (pool-grouped), BN folding, parameter setup, forward
# ---------------------------------------------------------------------------
def _im2col_pool_rows(x_nhwc, kh, kw):
    """im2col patches grouped for the fused pool epilogue.

    Returns (B*OHp, 4*OWp, kh*kw*C): each leading index is one (image,
    pooled-output-row) pair; its 4 contiguous row-blocks of OWp are the four
    taps (row0/col-even, row0/col-odd, row1/col-even, row1/col-odd) of every
    2x2 pool window along that row.
    """
    B, H, W, C = x_nhwc.shape
    OH, OW = H - kh + 1, W - kw + 1
    assert OH % 2 == 0 and OW % 2 == 0, "fused 2x2 pool needs even conv output dims"
    K = kh * kw * C
    cols = [x_nhwc[:, i:i + OH, j:j + OW, :] for i in range(kh) for j in range(kw)]
    p = jnp.stack(cols, axis=3).reshape(B, OH, OW, K)
    OHp, OWp = OH // 2, OW // 2
    p = p.reshape(B, OHp, 2, OWp, 2, K).transpose(0, 1, 2, 4, 3, 5)  # (B, OHp, 2, 2, OWp, K)
    return p.reshape(B * OHp, 4 * OWp, K), (OHp, OWp)


def _bn_scale_shift(conv_bias, gamma, beta, rm, rv):
    """Fold eval-BatchNorm (and the conv bias) into a per-channel scale/shift."""
    inv = jax.lax.rsqrt(rv + EPS)
    scale = gamma * inv
    shift = (conv_bias - rm) * scale + beta
    return scale, shift


def init_params(channels, key):
    ks = jax.random.split(key, 6)
    s = 0.05
    return {
        "conv1_w": s * jax.random.normal(ks[0], (128, channels, 5, 5), jnp.float32),
        "conv1_b": s * jax.random.normal(ks[1], (128,), jnp.float32),
        # NOTE: the spec's custom BatchNorm2d registers running_mean=ones and
        # running_var=zeros (unlike standard nn.BatchNorm2d). Kept as-is.
        "bn1_g": jnp.ones((128,), jnp.float32),
        "bn1_b": jnp.zeros((128,), jnp.float32),
        "bn1_rm": jnp.ones((128,), jnp.float32),
        "bn1_rv": jnp.zeros((128,), jnp.float32),
        "conv2_w": s * jax.random.normal(ks[2], (128, 128, 5, 5), jnp.float32),
        "conv2_b": s * jax.random.normal(ks[3], (128,), jnp.float32),
        "bn2_g": jnp.ones((128,), jnp.float32),
        "bn2_b": jnp.zeros((128,), jnp.float32),
        "bn2_rm": jnp.ones((128,), jnp.float32),
        "bn2_rv": jnp.zeros((128,), jnp.float32),
        "fc_w": s * jax.random.normal(ks[4], (10, 128 * 5 * 5), jnp.float32),
        "fc_b": s * jax.random.normal(ks[5], (10,), jnp.float32),
    }


def model_switch2_forward(params, x_nchw):
    B, C_in = x_nchw.shape[0], x_nchw.shape[1]
    x = jnp.transpose(x_nchw, (0, 2, 3, 1))  # NCHW -> NHWC

    # ---- stage 1: conv1 -> bn1(eval) -> relu1 -> maxpool2 -> dropout1(identity)
    p1, (oh1p, ow1p) = _im2col_pool_rows(x, 5, 5)
    k1 = 5 * 5 * C_in
    k1p = 128                                   # pad contraction dim to lane width
    p1 = jnp.pad(p1, ((0, 0), (0, 0), (0, k1p - k1)))
    w1 = jnp.transpose(params["conv1_w"], (2, 3, 1, 0)).reshape(k1, 128)
    w1 = jnp.pad(w1, ((0, k1p - k1), (0, 0)))
    s1, t1 = _bn_scale_shift(params["conv1_b"], params["bn1_g"], params["bn1_b"],
                             params["bn1_rm"], params["bn1_rv"])
    y = conv_bn_relu_pool(p1, w1, s1, t1)       # (B*14, 14, 128) bf16
    y = y.reshape(B, oh1p, ow1p, 128)

    # ---- stage 2: conv2 -> bn2(eval) -> relu2 -> maxpool2 -> dropout2(identity)
    p2, (oh2p, ow2p) = _im2col_pool_rows(y, 5, 5)
    w2 = jnp.transpose(params["conv2_w"], (2, 3, 1, 0)).reshape(5 * 5 * 128, 128)
    s2, t2 = _bn_scale_shift(params["conv2_b"], params["bn2_g"], params["bn2_b"],
                             params["bn2_rm"], params["bn2_rv"])
    y = conv_bn_relu_pool(p2, w2, s2, t2)       # (B*5, 5, 128) bf16

    # ---- flatten + fc + argmax
    # Runtime flatten is a free NHWC reshape; the NCHW-order semantics of the
    # PyTorch `reshape(B, -1)` are absorbed into a one-time reorder of fc_w
    # rows (c*25+h*5+w  ->  h*640+w*128+c), and N is padded 10 -> 128 so the
    # FC output tile is lane-dense.
    flat = y.reshape(B, oh2p * ow2p * 128)
    wf = params["fc_w"].reshape(10, 128, 5, 5).transpose(2, 3, 1, 0).reshape(3200, 10)
    wf = jnp.pad(wf, ((0, 0), (0, 128 - 10)))
    bf = jnp.pad(params["fc_b"], (0, 128 - 10))
    logits = linear(flat, wf, bf)[:, :10]
    pred = jnp.argmax(logits, axis=1)
    return pred, logits


if __name__ == "__main__":
    key = jax.random.PRNGKey(0)
    k_params, k_x = jax.random.split(key)

    B, C, H, W = 2, 3, 32, 32  # fc(128*5*5, 10) pins the input to 32x32 spatial
    params = init_params(C, k_params)
    x = jax.random.normal(k_x, (B, C, H, W), jnp.float32)

    pred, logits = jax.jit(model_switch2_forward)(params, x)
    jax.block_until_ready((pred, logits))
    assert pred.shape == (B,) and logits.shape == (B, 10)
    print("KERNEL_OK")
</pallas_src>

<mosaic_0001>
module attributes {stable_mosaic.version = 11 : i64} {
  func.func @_conv_bn_relu_pool_kernel(%arg0: i32, %arg1: memref<1x56x128xbf16, #tpu.memory_space<vmem>>, %arg2: memref<128x128xbf16, #tpu.memory_space<vmem>>, %arg3: memref<1x128xf32, #tpu.memory_space<vmem>>, %arg4: memref<1x128xf32, #tpu.memory_space<vmem>>, %arg5: memref<1x14x128xbf16, #tpu.memory_space<vmem>>) attributes {dimension_semantics = [#tpu.dimension_semantics<parallel>], iteration_bounds = array<i64: 28>, scalar_prefetch = 0 : i64, scratch_operands = 0 : i64, tpu.core_type = #tpu.core_type<tc>, window_params = [{transform_indices = @transform_0, window_bounds = array<i64: 1, 56, 128>}, {pipeline_mode = #tpu.pipeline_mode<synchronous>, transform_indices = @transform_1, window_bounds = array<i64: 128, 128>}, {pipeline_mode = #tpu.pipeline_mode<synchronous>, transform_indices = @transform_2, window_bounds = array<i64: 1, 128>}, {pipeline_mode = #tpu.pipeline_mode<synchronous>, transform_indices = @transform_3, window_bounds = array<i64: 1, 128>}, {transform_indices = @transform_4, window_bounds = array<i64: 1, 14, 128>}]} {
    %c0 = arith.constant 0 : index
    %c0_0 = arith.constant 0 : index
    %c0_1 = arith.constant 0 : index
    %0 = vector.load %arg1[%c0, %c0_0, %c0_1] : memref<1x56x128xbf16, #tpu.memory_space<vmem>>, vector<1x56x128xbf16>
    %1 = vector.shape_cast %0 : vector<1x56x128xbf16> to vector<56x128xbf16>
    %c0_2 = arith.constant 0 : index
    %c0_3 = arith.constant 0 : index
    %2 = vector.load %arg2[%c0_2, %c0_3] : memref<128x128xbf16, #tpu.memory_space<vmem>>, vector<128x128xbf16>
    %cst = arith.constant dense<0.000000e+00> : vector<56x128xf32>
    %3 = tpu.matmul %1, %2, %cst {dimension_numbers = #tpu.dot_dimension_numbers<[1], [0], [0], [1], [0, 0, 1, 1], [], []>} : vector<56x128xbf16>, vector<128x128xbf16>, vector<56x128xf32> -> vector<56x128xf32>
    %c0_4 = arith.constant 0 : index
    %c0_5 = arith.constant 0 : index
    %4 = vector.load %arg3[%c0_4, %c0_5] : memref<1x128xf32, #tpu.memory_space<vmem>>, vector<1x128xf32>
    %5 = vector.broadcast %4 : vector<1x128xf32> to vector<56x128xf32>
    %6 = arith.mulf %3, %5 : vector<56x128xf32>
    %c0_6 = arith.constant 0 : index
    %c0_7 = arith.constant 0 : index
    %7 = vector.load %arg4[%c0_6, %c0_7] : memref<1x128xf32, #tpu.memory_space<vmem>>, vector<1x128xf32>
    %8 = vector.broadcast %7 : vector<1x128xf32> to vector<56x128xf32>
    %9 = arith.addf %6, %8 : vector<56x128xf32>
    %cst_8 = arith.constant 0.000000e+00 : f32
    %10 = vector.broadcast %cst_8 : f32 to vector<56x128xf32>
    %11 = arith.maximumf %9, %10 : vector<56x128xf32>
    %12 = vector.extract_strided_slice %11 {offsets = [0, 0], sizes = [14, 128], strides = [1, 1]} : vector<56x128xf32> to vector<14x128xf32>
    %13 = vector.extract_strided_slice %11 {offsets = [14, 0], sizes = [14, 128], strides = [1, 1]} : vector<56x128xf32> to vector<14x128xf32>
    %14 = arith.maximumf %12, %13 : vector<14x128xf32>
    %15 = vector.extract_strided_slice %11 {offsets = [28, 0], sizes = [14, 128], strides = [1, 1]} : vector<56x128xf32> to vector<14x128xf32>
    %16 = vector.extract_strided_slice %11 {offsets = [42, 0], sizes = [14, 128], strides = [1, 1]} : vector<56x128xf32> to vector<14x128xf32>
    %17 = arith.maximumf %15, %16 : vector<14x128xf32>
    %18 = arith.maximumf %14, %17 : vector<14x128xf32>
    %19 = arith.truncf %18 : vector<14x128xf32> to vector<14x128xbf16>
    %c0_9 = arith.constant 0 : index
    %c0_10 = arith.constant 0 : index
    %c0_11 = arith.constant 0 : index
    %20 = vector.load %arg5[%c0_9, %c0_10, %c0_11] : memref<1x14x128xbf16, #tpu.memory_space<vmem>>, vector<1x14x128xbf16>
    %21 = vector.shape_cast %20 : vector<1x14x128xbf16> to vector<14x128xbf16>
    %22 = vector.shape_cast %19 : vector<14x128xbf16> to vector<1x14x128xbf16>
    tpu.vector_store %arg5[%c0_9, %c0_10, %c0_11], %22 {strides = array<i32>} : memref<1x14x128xbf16, #tpu.memory_space<vmem>>, vector<1x14x128xbf16>,
    return
  }
  func.func @transform_0(%arg0: i32) -> (i32, i32, i32) {
    %c0_i32 = arith.constant 0 : i32
    %c0_i32_0 = arith.constant 0 : i32
    %c0_i32_1 = arith.constant 0 : i32
    return %arg0, %c0_i32, %c0_i32_0 : i32, i32, i32
  }
  func.func @transform_1(%arg0: i32) -> (i32, i32) {
    %c0_i32 = arith.constant 0 : i32
    %c0_i32_0 = arith.constant 0 : i32
    %c0_i32_1 = arith.constant 0 : i32
    return %c0_i32, %c0_i32_0 : i32, i32
  }
  func.func @transform_2(%arg0: i32) -> (i32, i32) {
    %c0_i32 = arith.constant 0 : i32
    %c0_i32_0 = arith.constant 0 : i32
    %c0_i32_1 = arith.constant 0 : i32
    return %c0_i32, %c0_i32_0 : i32, i32
  }
  func.func @transform_3(%arg0: i32) -> (i32, i32) {
    %c0_i32 = arith.constant 0 : i32
    %c0_i32_0 = arith.constant 0 : i32
    %c0_i32_1 = arith.constant 0 : i32
    return %c0_i32, %c0_i32_0 : i32, i32
  }
  func.func @transform_4(%arg0: i32) -> (i32, i32, i32) {
    %c0_i32 = arith.constant 0 : i32
    %c0_i32_0 = arith.constant 0 : i32
    %c0_i32_1 = arith.constant 0 : i32
    return %arg0, %c0_i32, %c0_i32_0 : i32, i32, i32
  }
}

module attributes {stable_mosaic.version = 11 : i64} {
  func.func @_conv_bn_relu_pool_kernel(%arg0: i32, %arg1: memref<1x20x3200xbf16, #tpu.memory_space<vmem>>, %arg2: memref<3200x128xbf16, #tpu.memory_space<vmem>>, %arg3: memref<1x128xf32, #tpu.memory_space<vmem>>, %arg4: memref<1x128xf32, #tpu.memory_space<vmem>>, %arg5: memref<1x5x128xbf16, #tpu.memory_space<vmem>>) attributes {dimension_semantics = [#tpu.dimension_semantics<parallel>], iteration_bounds = array<i64: 10>, scalar_prefetch = 0 : i64, scratch_operands = 0 : i64, tpu.core_type = #tpu.core_type<tc>, window_params = [{transform_indices = @transform_0, window_bounds = array<i64: 1, 20, 3200>}, {pipeline_mode = #tpu.pipeline_mode<synchronous>, transform_indices = @transform_1, window_bounds = array<i64: 3200, 128>}, {pipeline_mode = #tpu.pipeline_mode<synchronous>, transform_indices = @transform_2, window_bounds = array<i64: 1, 128>}, {pipeline_mode = #tpu.pipeline_mode<synchronous>, transform_indices = @transform_3, window_bounds = array<i64: 1, 128>}, {transform_indices = @transform_4, window_bounds = array<i64: 1, 5, 128>}]} {
    %c0 = arith.constant 0 : index
    %c0_0 = arith.constant 0 : index
    %c0_1 = arith.constant 0 : index
    %0 = vector.load %arg1[%c0, %c0_0, %c0_1] : memref<1x20x3200xbf16, #tpu.memory_space<vmem>>, vector<1x20x3200xbf16>
    %1 = vector.shape_cast %0 : vector<1x20x3200xbf16> to vector<20x3200xbf16>
    %c0_2 = arith.constant 0 : index
    %c0_3 = arith.constant 0 : index
    %2 = vector.load %arg2[%c0_2, %c0_3] : memref<3200x128xbf16, #tpu.memory_space<vmem>>, vector<3200x128xbf16>
    %cst = arith.constant dense<0.000000e+00> : vector<20x128xf32>
    %3 = tpu.matmul %1, %2, %cst {dimension_numbers = #tpu.dot_dimension_numbers<[1], [0], [0], [1], [0, 0, 1, 1], [], []>} : vector<20x3200xbf16>, vector<3200x128xbf16>, vector<20x128xf32> -> vector<20x128xf32>
    %c0_4 = arith.constant 0 : index
    %c0_5 = arith.constant 0 : index
    %4 = vector.load %arg3[%c0_4, %c0_5] : memref<1x128xf32, #tpu.memory_space<vmem>>, vector<1x128xf32>
    %5 = vector.broadcast %4 : vector<1x128xf32> to vector<20x128xf32>
    %6 = arith.mulf %3, %5 : vector<20x128xf32>
    %c0_6 = arith.constant 0 : index
    %c0_7 = arith.constant 0 : index
    %7 = vector.load %arg4[%c0_6, %c0_7] : memref<1x128xf32, #tpu.memory_space<vmem>>, vector<1x128xf32>
    %8 = vector.broadcast %7 : vector<1x128xf32> to vector<20x128xf32>
    %9 = arith.addf %6, %8 : vector<20x128xf32>
    %cst_8 = arith.constant 0.000000e+00 : f32
    %10 = vector.broadcast %cst_8 : f32 to vector<20x128xf32>
    %11 = arith.maximumf %9, %10 : vector<20x128xf32>
    %12 = vector.extract_strided_slice %11 {offsets = [0, 0], sizes = [5, 128], strides = [1, 1]} : vector<20x128xf32> to vector<5x128xf32>
    %13 = vector.extract_strided_slice %11 {offsets = [5, 0], sizes = [5, 128], strides = [1, 1]} : vector<20x128xf32> to vector<5x128xf32>
    %14 = arith.maximumf %12, %13 : vector<5x128xf32>
    %15 = vector.extract_strided_slice %11 {offsets = [10, 0], sizes = [5, 128], strides = [1, 1]} : vector<20x128xf32> to vector<5x128xf32>
    %16 = vector.extract_strided_slice %11 {offsets = [15, 0], sizes = [5, 128], strides = [1, 1]} : vector<20x128xf32> to vector<5x128xf32>
    %17 = arith.maximumf %15, %16 : vector<5x128xf32>
    %18 = arith.maximumf %14, %17 : vector<5x128xf32>
    %19 = arith.truncf %18 : vector<5x128xf32> to vector<5x128xbf16>
    %c0_9 = arith.constant 0 : index
    %c0_10 = arith.constant 0 : index
    %c0_11 = arith.constant 0 : index
    %20 = vector.load %arg5[%c0_9, %c0_10, %c0_11] : memref<1x5x128xbf16, #tpu.memory_space<vmem>>, vector<1x5x128xbf16>
    %21 = vector.shape_cast %20 : vector<1x5x128xbf16> to vector<5x128xbf16>
    %22 = vector.shape_cast %19 : vector<5x128xbf16> to vector<1x5x128xbf16>
    tpu.vector_store %arg5[%c0_9, %c0_10, %c0_11], %22 {strides = array<i32>} : memref<1x5x128xbf16, #tpu.memory_space<vmem>>, vector<1x5x128xbf16>,
    return
  }
  func.func @transform_0(%arg0: i32) -> (i32, i32, i32) {
    %c0_i32 = arith.constant 0 : i32
    %c0_i32_0 = arith.constant 0 : i32
    %c0_i32_1 = arith.constant 0 : i32
    return %arg0, %c0_i32, %c0_i32_0 : i32, i32, i32
  }
  func.func @transform_1(%arg0: i32) -> (i32, i32) {
    %c0_i32 = arith.constant 0 : i32
    %c0_i32_0 = arith.constant 0 : i32
    %c0_i32_1 = arith.constant 0 : i32
    return %c0_i32, %c0_i32_0 : i32, i32
  }
  func.func @transform_2(%arg0: i32) -> (i32, i32) {
    %c0_i32 = arith.constant 0 : i32
    %c0_i32_0 = arith.constant 0 : i32
    %c0_i32_1 = arith.constant 0 : i32
    return %c0_i32, %c0_i32_0 : i32, i32
  }
  func.func @transform_3(%arg0: i32) -> (i32, i32) {
    %c0_i32 = arith.constant 0 : i32
    %c0_i32_0 = arith.constant 0 : i32
    %c0_i32_1 = arith.constant 0 : i32
    return %c0_i32, %c0_i32_0 : i32, i32
  }
  func.func @transform_4(%arg0: i32) -> (i32, i32, i32) {
    %c0_i32 = arith.constant 0 : i32
    %c0_i32_0 = arith.constant 0 : i32
    %c0_i32_1 = arith.constant 0 : i32
    return %arg0, %c0_i32, %c0_i32_0 : i32, i32, i32
  }
}

module attributes {stable_mosaic.version = 11 : i64} {
  func.func @_linear_kernel(%arg0: i32, %arg1: memref<2x3200xbf16, #tpu.memory_space<vmem>>, %arg2: memref<3200x128xbf16, #tpu.memory_space<vmem>>, %arg3: memref<1x128xf32, #tpu.memory_space<vmem>>, %arg4: memref<2x128xf32, #tpu.memory_space<vmem>>) attributes {dimension_semantics = [#tpu.dimension_semantics<arbitrary>], iteration_bounds = array<i64: 1>, scalar_prefetch = 0 : i64, scratch_operands = 0 : i64, tpu.core_type = #tpu.core_type<tc>, window_params = [{pipeline_mode = #tpu.pipeline_mode<synchronous>, transform_indices = @transform_0, window_bounds = array<i64: 2, 3200>}, {pipeline_mode = #tpu.pipeline_mode<synchronous>, transform_indices = @transform_1, window_bounds = array<i64: 3200, 128>}, {pipeline_mode = #tpu.pipeline_mode<synchronous>, transform_indices = @transform_2, window_bounds = array<i64: 1, 128>}, {pipeline_mode = #tpu.pipeline_mode<synchronous>, transform_indices = @transform_3, window_bounds = array<i64: 2, 128>}]} {
    %c0 = arith.constant 0 : index
    %c0_0 = arith.constant 0 : index
    %0 = vector.load %arg1[%c0, %c0_0] : memref<2x3200xbf16, #tpu.memory_space<vmem>>, vector<2x3200xbf16>
    %c0_1 = arith.constant 0 : index
    %c0_2 = arith.constant 0 : index
    %1 = vector.load %arg2[%c0_1, %c0_2] : memref<3200x128xbf16, #tpu.memory_space<vmem>>, vector<3200x128xbf16>
    %cst = arith.constant dense<0.000000e+00> : vector<2x128xf32>
    %2 = tpu.matmul %0, %1, %cst {dimension_numbers = #tpu.dot_dimension_numbers<[1], [0], [0], [1], [0, 0, 1, 1], [], []>} : vector<2x3200xbf16>, vector<3200x128xbf16>, vector<2x128xf32> -> vector<2x128xf32>
    %c0_3 = arith.constant 0 : index
    %c0_4 = arith.constant 0 : index
    %3 = vector.load %arg3[%c0_3, %c0_4] : memref<1x128xf32, #tpu.memory_space<vmem>>, vector<1x128xf32>
    %4 = vector.broadcast %3 : vector<1x128xf32> to vector<2x128xf32>
    %5 = arith.addf %2, %4 : vector<2x128xf32>
    %c0_5 = arith.constant 0 : index
    %c0_6 = arith.constant 0 : index
    %6 = vector.load %arg4[%c0_5, %c0_6] : memref<2x128xf32, #tpu.memory_space<vmem>>, vector<2x128xf32>
    tpu.vector_store %arg4[%c0_5, %c0_6], %5 {strides = array<i32>} : memref<2x128xf32, #tpu.memory_space<vmem>>, vector<2x128xf32>,
    return
  }
  func.func @transform_0(%arg0: i32) -> (i32, i32) {
    %c0_i32 = arith.constant 0 : i32
    %c0_i32_0 = arith.constant 0 : i32
    %c0_i32_1 = arith.constant 0 : i32
    return %c0_i32, %c0_i32_0 : i32, i32
  }
  func.func @transform_1(%arg0: i32) -> (i32, i32) {
    %c0_i32 = arith.constant 0 : i32
    %c0_i32_0 = arith.constant 0 : i32
    %c0_i32_1 = arith.constant 0 : i32
    return %c0_i32, %c0_i32_0 : i32, i32
  }
  func.func @transform_2(%arg0: i32) -> (i32, i32) {
    %c0_i32 = arith.constant 0 : i32
    %c0_i32_0 = arith.constant 0 : i32
    %c0_i32_1 = arith.constant 0 : i32
    return %c0_i32, %c0_i32_0 : i32, i32
  }
  func.func @transform_3(%arg0: i32) -> (i32, i32) {
    %c0_i32 = arith.constant 0 : i32
    %c0_i32_0 = arith.constant 0 : i32
    %c0_i32_1 = arith.constant 0 : i32
    return %c0_i32, %c0_i32_0 : i32, i32
  }
}

</mosaic_0001>

<llo_original>
// kernel: model_switch2_forward.3
$region0: #{model_switch2_forward.3}
  #allocation0 [shape = 'u32[]', space=smem, size = 0x4, offset = 0x4, fixed_abs, tag = 'smem constant byte address 0x4 - core index']
  #allocation1 [shape = 'u32[144,128]{1,0:T(1,128)}', space=vmem, size = 0x12000, scoped, tag = 'internal scratch']
  %s0 = inlined_call_operand.vmem [shape: bf16[28,56,128], index: 0, kind: input, shape index: {}]
  %s1 = inlined_call_operand.vmem [shape: bf16[128,128], index: 1, kind: input, shape index: {}]
  %s2 = inlined_call_operand.vmem [shape: f32[1,128], index: 2, kind: input, shape index: {}]
  %s3 = inlined_call_operand.vmem [shape: f32[1,128], index: 3, kind: input, shape index: {}]
  %s4 = inlined_call_operand.vmem [shape: bf16[28,14,128], index: 4, kind: output, shape index: {}]
  %s5 = sld [smem:[#allocation0]]
  $region49: #{model_switch2_forward.3} parent=0
    _
  %s7 = ssub.s32 1, %s5
  %s8 = scalar_select 0, %s7, %s5
  loop: start=0, step=1, limit=30
  $region2: #{model_switch2_forward.3} parent=0 // loop_pre_header
    _
  $region3: #{model_switch2_forward.3} parent=0 // loop_header
    %s10 = sphi 0, %s14
    %p11 = scmp.ge.s32.totalorder %s10, 30
    %s20 = sphi 0, %s22
    %s23 = sphi 0, %s20
    %s24 = sphi 0, %s23
    %s40 = sphi 0, %s24
    %s44 = sphi 0, %s44
    %s46 = sphi 0, %s44
    %s47 = sphi 0, %s46
    %s61 = sphi 0, %s47
    %s65 = sphi 0, %s65
    %s67 = sphi 0, %s65
    %s68 = sphi 0, %s67
    %s82 = sphi 0, %s68
    %s86 = sphi 0, %s86
    %s88 = sphi 0, %s86
    %s89 = sphi 0, %s88
    %s103 = sphi 0, %s89
    %s109 = sphi 0, %s111
    %s112 = sphi 0, %s109
    %s113 = sphi 0, %s112
    %s129 = sphi 0, %s113
  $region4: #{model_switch2_forward.3} parent=0 // loop_header_branch
    %13 = sbr.rel (%p11) target = $region8
  $region5: #{model_switch2_forward.3} parent=0 // loop_body
    %s15 = ssub.s32 %s10, 1
    %s16 = ssub.s32 %s10, 2
    %s17 = sadd.s32 %s10, 1
    %s18 = ssub.s32 %s10, %s17
    %p19 = scmp.eq.s32.totalorder %s18, 0
    %s21 = sadd.s32 %s20, 1
    %s22 = scalar_select %p19, %s20, %s21
    %p25 = pneg %p19
    %p26 = scmp.eq.s32.totalorder %s10, 27
    %p27 = por %p25, %p26
    %p28 = scmp.ne.s32.totalorder %s20, %s23
    %p29 = scmp.eq.s32.totalorder %s10, 0
    %p30 = por %p28, %p29
    %p31 = scmp.ne.s32.totalorder %s20, %s23
    %p32 = scmp.eq.s32.totalorder %s15, 27
    %p33 = por %p31, %p32
    %p34 = scmp.ne.s32.totalorder %s23, %s24
    %p35 = scmp.eq.s32.totalorder %s15, 0
    %p36 = por %p34, %p35
    %p37 = scmp.ne.s32.totalorder %s23, %s24
    %p38 = scmp.eq.s32.totalorder %s16, 27
    %p39 = por %p37, %p38
    %p41 = scmp.ne.s32.totalorder %s24, %s40
    %p42 = scmp.eq.s32.totalorder %s16, 0
    %p43 = por %p41, %p42
    %s45 = sadd.s32 %s44, 1
    %p48 = scmp.eq.s32.totalorder %s10, 27
    %p49 = scmp.ne.s32.totalorder %s44, %s46
    %p50 = scmp.eq.s32.totalorder %s10, 0
    %p51 = por %p49, %p50
    %p52 = scmp.ne.s32.totalorder %s44, %s46
    %p53 = scmp.eq.s32.totalorder %s15, 27
    %p54 = por %p52, %p53
    %p55 = scmp.ne.s32.totalorder %s46, %s47
    %p56 = scmp.eq.s32.totalorder %s15, 0
    %p57 = por %p55, %p56
    %p58 = scmp.ne.s32.totalorder %s46, %s47
    %p59 = scmp.eq.s32.totalorder %s16, 27
    %p60 = por %p58, %p59
    %p62 = scmp.ne.s32.totalorder %s47, %s61
    %p63 = scmp.eq.s32.totalorder %s16, 0
    %p64 = por %p62, %p63
    %s66 = sadd.s32 %s65, 1
    %p69 = scmp.eq.s32.totalorder %s10, 27
    %p70 = scmp.ne.s32.totalorder %s65, %s67
    %p71 = scmp.eq.s32.totalorder %s10, 0
    %p72 = por %p70, %p71
    %p73 = scmp.ne.s32.totalorder %s65, %s67
    %p74 = scmp.eq.s32.totalorder %s15, 27
    %p75 = por %p73, %p74
    %p76 = scmp.ne.s32.totalorder %s67, %s68
    %p77 = scmp.eq.s32.totalorder %s15, 0
    %p78 = por %p76, %p77
    %p79 = scmp.ne.s32.totalorder %s67, %s68
    %p80 = scmp.eq.s32.totalorder %s16, 27
    %p81 = por %p79, %p80
    %p83 = scmp.ne.s32.totalorder %s68, %s82
    %p84 = scmp.eq.s32.totalorder %s16, 0
    %p85 = por %p83, %p84
    %s87 = sadd.s32 %s86, 1
    %p90 = scmp.eq.s32.totalorder %s10, 27
    %p91 = scmp.ne.s32.totalorder %s86, %s88
    %p92 = scmp.eq.s32.totalorder %s10, 0
    %p93 = por %p91, %p92
    %p94 = scmp.ne.s32.totalorder %s86, %s88
    %p95 = scmp.eq.s32.totalorder %s15, 27
    %p96 = por %p94, %p95
    %p97 = scmp.ne.s32.totalorder %s88, %s89
    %p98 = scmp.eq.s32.totalorder %s15, 0
    %p99 = por %p97, %p98
    %p100 = scmp.ne.s32.totalorder %s88, %s89
    %p101 = scmp.eq.s32.totalorder %s16, 27
    %p102 = por %p100, %p101
    %p104 = scmp.ne.s32.totalorder %s89, %s103
    %p105 = scmp.eq.s32.totalorder %s16, 0
    %p106 = por %p104, %p105
    %s107 = ssub.s32 %s10, %s17
    %p108 = scmp.eq.s32.totalorder %s107, 0
    %s110 = sadd.s32 %s109, 1
    %s111 = scalar_select %p108, %s109, %s110
    %p114 = pneg %p108
    %p115 = scmp.eq.s32.totalorder %s10, 27
    %p116 = por %p114, %p115
    %p117 = scmp.ne.s32.totalorder %s109, %s112
    %p118 = scmp.eq.s32.totalorder %s10, 0
    %p119 = por %p117, %p118
    %p120 = scmp.ne.s32.totalorder %s109, %s112
    %p121 = scmp.eq.s32.totalorder %s15, 27
    %p122 = por %p120, %p121
    %p123 = scmp.ne.s32.totalorder %s112, %s113
    %p124 = scmp.eq.s32.totalorder %s15, 0
    %p125 = por %p123, %p124
    %p126 = scmp.ne.s32.totalorder %s112, %s113
    %p127 = scmp.eq.s32.totalorder %s16, 27
    %p128 = por %p126, %p127
    %p130 = scmp.ne.s32.totalorder %s113, %s129
    %p131 = scmp.eq.s32.totalorder %s16, 0
    %p132 = por %p130, %p131
    %p133 = scmp.le.s32.totalorder 1, %s10
    %p134 = scmp.lt.s32.totalorder %s10, 29
    %p135 = pnand %p133, %p134
    %p136 = pneg %p135
    // Predicated region
    $region9: #{model_switch2_forward.3} parent=5 // pred_check
      _
    $region10: #{model_switch2_forward.3} parent=5 // pred_check_branch
      %138 = sbr.rel (%p135) target = $region12
    $region11: #{model_switch2_forward.3} parent=5 // pred_region
      %s139 = ssub.s32 %s10, 1
      // Predicated region
      $region13: #{model_switch2_forward.3} parent=11 // pred_check
        %p140 = pneg %p57
      $region14: #{model_switch2_forward.3} parent=11 // pred_check_branch
        %142 = sbr.rel (%p140) target = $region16
      $region15: #{model_switch2_forward.3} parent=11 // pred_region
        _
      $region16: #{model_switch2_forward.3} parent=11 // pred_fallthru
        _
      // Predicated region
      $region17: #{model_switch2_forward.3} parent=11 // pred_check
        %p143 = pneg %p78
      $region18: #{model_switch2_forward.3} parent=11 // pred_check_branch
        %145 = sbr.rel (%p143) target = $region20
      $region19: #{model_switch2_forward.3} parent=11 // pred_region
        _
      $region20: #{model_switch2_forward.3} parent=11 // pred_fallthru
        _
      // Predicated region
      $region21: #{model_switch2_forward.3} parent=11 // pred_check
        %p146 = pneg %p99
      $region22: #{model_switch2_forward.3} parent=11 // pred_check_branch
        %148 = sbr.rel (%p146) target = $region24
      $region23: #{model_switch2_forward.3} parent=11 // pred_region
        _
      $region24: #{model_switch2_forward.3} parent=11 // pred_fallthru
        _
    $region12: #{model_switch2_forward.3} parent=5 // pred_fallthru
      _
    %p149 = scmp.lt.s32.totalorder %s10, 28
    // Predicated region
    $region25: #{model_switch2_forward.3} parent=5 // pred_check
      %p150 = pneg %p149
    $region26: #{model_switch2_forward.3} parent=5 // pred_check_branch
      %152 = sbr.rel (%p150) target = $region28
    $region27: #{model_switch2_forward.3} parent=5 // pred_region
      // Predicated region
      $region29: #{model_switch2_forward.3} parent=27 // pred_check
        %p153 = pneg %p30
      $region30: #{model_switch2_forward.3} parent=27 // pred_check_branch
        %155 = sbr.rel (%p153) target = $region32
      $region31: #{model_switch2_forward.3} parent=27 // pred_region
        %p156 = scmp.lt.s32.totalorder %s10, 27
        %s157 = scalar_select %p156, %s10, 27
        %s158 = smul.addr %s157, 7
        %s159 = smul.addr %s158, 4
        %s160 = scalar_lea.vmem %s0, %s159
      $region32: #{model_switch2_forward.3} parent=27 // pred_fallthru
        _
    $region28: #{model_switch2_forward.3} parent=5 // pred_fallthru
      _
    %p161 = scmp.le.s32.totalorder 1, %s10
    %p162 = scmp.lt.s32.totalorder %s10, 29
    %p163 = pnand %p161, %p162
    %p164 = pneg %p163
    // Predicated region
    $region33: #{model_switch2_forward.3} parent=5 // pred_check
      _
    $region34: #{model_switch2_forward.3} parent=5 // pred_check_branch
      %166 = sbr.rel (%p163) target = $region36
    $region35: #{model_switch2_forward.3} parent=5 // pred_region
      %s167 = ssub.s32 %s10, 1
      %p168 = scmp.lt.s32.totalorder %s15, 27
      %s169 = scalar_select %p168, %s15, 27
      %s170 = smul.addr %s169, 7
      %s171 = smul.addr %s170, 4
      %s172 = scalar_lea.vmem %s0, %s171
      %p173 = pneg %p36
      %p174 = pneg %p33
      %p175 = pneg %p57
      %p176 = pneg %p54
      %p177 = pneg %p78
      %p178 = pneg %p75
      %p179 = pneg %p99
      %p180 = pneg %p96
      %p181 = pneg %p125
      %p182 = pneg %p122
      %p183 = scmp.lt.s32.totalorder %s15, 27
      %s184 = scalar_select %p183, %s15, 27
      %s185 = smul.addr %s184, 2
      %s186 = smul.addr %s185, 4
      %s187 = scalar_lea.vmem %s4, %s186
      %p188 = scmp.lt.s32.totalorder %s15, 27
      %s189 = scalar_select %p188, %s15, 27
      %s190 = smul.addr %s189, 7
      %s191 = smul.addr %s190, 4
      %s192 = scalar_lea.vmem %s0, %s191
      %p193 = scmp.lt.s32.totalorder %s15, 27
      %s194 = scalar_select %p193, %s15, 27
      %s195 = smul.addr %s194, 2
      %s196 = smul.addr %s195, 4
      %s197 = scalar_lea.vmem %s4, %s196
      %v199 = vld [vmem:[%s192] sm:$0xf]
      %v200 = vld [vmem:[%s192 + $0x4] sm:$0xf]
      %v201 = vld [vmem:[%s192 + $0x8] sm:$0xf]
      %v202 = vld [vmem:[%s192 + $0xc] sm:$0xf]
      %v203 = vld [vmem:[%s192 + $0x10] sm:$0xf]
      %v204 = vld [vmem:[%s192 + $0x14] sm:$0xf]
      %v205 = vld [vmem:[%s192 + $0x18] sm:$0xf]
      %v206 = vld [vmem:[%s1] sm:$0xf]
      %v207 = vld [vmem:[%s1 + $0x4] sm:$0xf]
      %v208 = vld [vmem:[%s1 + $0x8] sm:$0xf]
      %v209 = vld [vmem:[%s1 + $0xc] sm:$0xf]
      %v210 = vld [vmem:[%s1 + $0x10] sm:$0xf]
      %v211 = vld [vmem:[%s1 + $0x14] sm:$0xf]
      %v212 = vld [vmem:[%s1 + $0x18] sm:$0xf]
      %v213 = vld [vmem:[%s1 + $0x1c] sm:$0xf]
      %v214 = vld [vmem:[%s1 + $0x20] sm:$0xf]
      %v215 = vld [vmem:[%s1 + $0x24] sm:$0xf]
      %v216 = vld [vmem:[%s1 + $0x28] sm:$0xf]
      %v217 = vld [vmem:[%s1 + $0x2c] sm:$0xf]
      %v218 = vld [vmem:[%s1 + $0x30] sm:$0xf]
      %v219 = vld [vmem:[%s1 + $0x34] sm:$0xf]
      %v220 = vld [vmem:[%s1 + $0x38] sm:$0xf]
      %v221 = vld [vmem:[%s1 + $0x3c] sm:$0xf]
      %v229 = vunpack.c.l.b16 %v199
      %v230 = vunpack.c.l.b16 %v200
      %v231 = vunpack.c.l.b16 %v201
      %v232 = vunpack.c.l.b16 %v202
      %v233 = vunpack.c.l.b16 %v203
      %v234 = vunpack.c.l.b16 %v204
      %v235 = vunpack.c.l.b16 %v205
      %v236 = vpack.c.b16 %v230, %v229
      %v237 = vpack.c.b16 %v232, %v231
      %v238 = vpack.c.b16 %v234, %v233
      %v239 = vpack.c.b16 %v235, %v235
      %v260 = vunpack.c.l.b16 %v206
      %v261 = vunpack.c.l.b16 %v207
      %v262 = vunpack.c.l.b16 %v208
      %v263 = vunpack.c.l.b16 %v209
      %v264 = vunpack.c.l.b16 %v210
      %v265 = vunpack.c.l.b16 %v211
      %v266 = vunpack.c.l.b16 %v212
      %v267 = vunpack.c.l.b16 %v213
      %v268 = vunpack.c.l.b16 %v214
      %v269 = vunpack.c.l.b16 %v215
      %v270 = vunpack.c.l.b16 %v216
      %v271 = vunpack.c.l.b16 %v217
      %v272 = vunpack.c.l.b16 %v218
      %v273 = vunpack.c.l.b16 %v219
      %v274 = vunpack.c.l.b16 %v220
      %v275 = vunpack.c.l.b16 %v221
      %v276 = vpack.c.b16 %v261, %v260
      %v277 = vpack.c.b16 %v263, %v262
      %v278 = vpack.c.b16 %v265, %v264
      %v279 = vpack.c.b16 %v267, %v266
      %v280 = vpack.c.b16 %v269, %v268
      %v281 = vpack.c.b16 %v271, %v270
      %v282 = vpack.c.b16 %v273, %v272
      %v283 = vpack.c.b16 %v275, %v274
      %292 = vmatprep.subr.bf16.mxu0 0
      %293 = vmatpush1.bf16.msra.mxu0 %v276
      %294 = vmatprep.subr.bf16.mxu0 0
      %295 = vmatpush1.bf16.msra.mxu0 %v277
      %296 = vmatprep.subr.bf16.mxu0 0
      %297 = vmatpush1.bf16.msra.mxu0 %v278
      %298 = vmatprep.subr.bf16.mxu0 0
      %299 = vmatpush1.bf16.msra.mxu0 %v279
      %300 = vmatprep.subr.bf16.mxu0 0
      %301 = vmatpush1.bf16.msra.mxu0 %v280
      %302 = vmatprep.subr.bf16.mxu0 0
      %303 = vmatpush1.bf16.msra.mxu0 %v281
      %304 = vmatprep.subr.bf16.mxu0 0
      %305 = vmatpush1.bf16.msra.mxu0 %v282
      %306 = vmatprep.subr.bf16.mxu0 0
      %307 = vmatpush1.bf16.msra.mxu0 %v283
      %308 = vmatprep.subr.bf16.mxu0 0
      %309 = vmatpush1.bf16.msra.mxu0 0
      %310 = vmatprep.subr.bf16.mxu0 0
      %311 = vmatpush1.bf16.msra.mxu0 0
      %312 = vmatprep.subr.bf16.mxu0 0
      %313 = vmatpush1.bf16.msra.mxu0 0
      %314 = vmatprep.subr.bf16.mxu0 0
      %315 = vmatpush1.bf16.msra.mxu0 0
      %316 = vmatprep.subr.bf16.mxu0 0
      %317 = vmatpush1.bf16.msra.mxu0 0
      %318 = vmatprep.subr.bf16.mxu0 0
      %319 = vmatpush1.bf16.msra.mxu0 0
      %320 = vmatprep.subr.bf16.mxu0 0
      %321 = vmatpush1.bf16.msra.mxu0 0
      %322 = vmatprep.subr.bf16.mxu0 0
      %323 = vmatpush1.bf16.msra.mxu0 0
      %324 = vmatprep.mubr.bf16.mxu0 0
      %325 = vmatmul.mubr.bf16.gmra.mrb[0].mxu0 %v236
      %v326 = vpop.f32.mrb[0].mxu0
      %v327 = vadd.f32 0.0, %v326
      %v328 = vpop.f32.mrb[0].mxu0
      %v329 = vpop.f32.mrb[0].mxu0
      %v330 = vadd.f32 0.0, %v329
      %v331 = vpop.f32.mrb[0].mxu0
      %332 = vmatprep.mubr.bf16.mxu0 0
      %333 = vmatmul.mubr.bf16.gmra.mrb[0].mxu0 %v237
      %v334 = vpop.f32.mrb[0].mxu0
      %v335 = vadd.f32 0.0, %v334
      %v336 = vpop.f32.mrb[0].mxu0
      %v337 = vpop.f32.mrb[0].mxu0
      %v338 = vadd.f32 0.0, %v337
      %v339 = vpop.f32.mrb[0].mxu0
      %340 = vmatprep.mubr.bf16.mxu0 0
      %341 = vmatmul.mubr.bf16.gmra.mrb[0].mxu0 %v238
      %v342 = vpop.f32.mrb[0].mxu0
      %v343 = vadd.f32 0.0, %v342
      %v344 = vpop.f32.mrb[0].mxu0
      %v345 = vpop.f32.mrb[0].mxu0
      %v346 = vadd.f32 0.0, %v345
      %v347 = vpop.f32.mrb[0].mxu0
      %348 = vmatprep.mubr.bf16.mxu0 0
      %349 = vmatmul.mubr.bf16.gmra.mrb[0].mxu0 %v239
      %v350 = vpop.f32.mrb[0].mxu0
      %v351 = vadd.f32 0.0, %v350
      %v352 = vpop.f32.mrb[0].mxu0
      %v353 = vpop.f32.mrb[0].mxu0
      %v354 = vpop.f32.mrb[0].mxu0
      %355 = vdwg.mxu0
      %v356 = vld [vmem:[%s2] sm:$0x1]
      %v358 = vlaneseq
      %v359 = vshrl.u32 %v358, 7
      %v360 = vsub.s32 0, %v359
      %v361 = vrot.slane %v356, %v360
      %v363 = vmul.f32 %v327, %v361
      %v364 = vmul.f32 %v330, %v361
      %v365 = vmul.f32 %v335, %v361
      %v366 = vmul.f32 %v338, %v361
      %v367 = vmul.f32 %v343, %v361
      %v368 = vmul.f32 %v346, %v361
      %v369 = vmul.f32 %v351, %v361
      %v370 = vld [vmem:[%s3] sm:$0x1]
      %v372 = vlaneseq
      %v373 = vshrl.u32 %v372, 7
      %v374 = vsub.s32 0, %v373
      %v375 = vrot.slane %v370, %v374
      %v377 = vadd.f32 %v363, %v375
      %v378 = vadd.f32 %v364, %v375
      %v379 = vadd.f32 %v365, %v375
      %v380 = vadd.f32 %v366, %v375
      %v381 = vadd.f32 %v367, %v375
      %v382 = vadd.f32 %v368, %v375
      %v383 = vadd.f32 %v369, %v375
      %v384 = vmax.f32 %v377, 0.0
      %v385 = vmax.f32 %v378, 0.0
      %v386 = vmax.f32 %v379, 0.0
      %v387 = vmax.f32 %v380, 0.0
      %v388 = vmax.f32 %v381, 0.0
      %v389 = vmax.f32 %v382, 0.0
      %v390 = vmax.f32 %v383, 0.0
      %vm394 = vcmask 1041408
      %v395 = vrot.slane %v385, 6
      %v396 = vrot.slane %v386, 6
      %v397 = vsel %vm394, %v395, %v396
      %v398 = vrot.slane %v387, 6
      %v399 = vsel %vm394, %v396, %v398
      %v402 = vmax.f32 %v384, %v397
      %v403 = vmax.f32 %v385, %v399
      %v406 = vrot.slane %v389, 6
      %v407 = vrot.slane %v390, 6
      %v408 = vsel %vm394, %v406, %v407
      %v412 = vmax.f32 %v387, %v406
      %v413 = vmax.f32 %v388, %v408
      %v414 = vmax.f32 %v389, %v407
      %vm418 = vcmask 1043456
      %v419 = vrot.slane %v412, 4
      %v420 = vrot.slane %v413, 4
      %v421 = vsel %vm418, %v419, %v420
      %v422 = vrot.slane %v414, 4
      %v423 = vsel %vm418, %v420, %v422
      %v426 = vmax.f32 %v402, %v421
      %v427 = vmax.f32 %v403, %v423
      %v428 = vpack.c.bf16 %v427, %v426
      %v430 = vunpack.c.l.b16 %v428
      %v431 = vunpack.c.h.b16 %v428
      %v432 = vpack.c.b16 %v430, %v430
      %v433 = vpack.c.b16 %v431, %v431
      %436 = vst [vmem:[%s197] sm:$0xf] %v432
      %437 = vst [vmem:[%s197 + $0x4] sm:$0x7] %v433
      %p438 = scmp.lt.s32.totalorder %s15, 27
      %s439 = scalar_select %p438, %s15, 27
      %s440 = smul.addr %s439, 2
      %s441 = smul.addr %s440, 4
      %s442 = scalar_lea.vmem %s4, %s441
      // Predicated region
      $region37: #{model_switch2_forward.3} parent=35 // pred_check
        %p443 = pneg %p122
      $region38: #{model_switch2_forward.3} parent=35 // pred_check_branch
        %445 = sbr.rel (%p443) target = $region40
      $region39: #{model_switch2_forward.3} parent=35 // pred_region
        _
      $region40: #{model_switch2_forward.3} parent=35 // pred_fallthru
        _
    $region36: #{model_switch2_forward.3} parent=5 // pred_fallthru
      _
    %p446 = scmp.le.s32.totalorder 2, %s10
    // Predicated region
    $region41: #{model_switch2_forward.3} parent=5 // pred_check
      %p447 = pneg %p446
    $region42: #{model_switch2_forward.3} parent=5 // pred_check_branch
      %449 = sbr.rel (%p447) target = $region44
    $region43: #{model_switch2_forward.3} parent=5 // pred_region
      %s450 = ssub.s32 %s10, 2
      // Predicated region
      $region45: #{model_switch2_forward.3} parent=43 // pred_check
        %p451 = pneg %p128
      $region46: #{model_switch2_forward.3} parent=43 // pred_check_branch
        %453 = sbr.rel (%p451) target = $region48
      $region47: #{model_switch2_forward.3} parent=43 // pred_region
        %p454 = scmp.lt.s32.totalorder %s16, 27
        %s455 = scalar_select %p454, %s16, 27
        %s456 = smul.addr %s455, 2
        %s457 = smul.addr %s456, 4
        %s458 = scalar_lea.vmem %s4, %s457
      $region48: #{model_switch2_forward.3} parent=43 // pred_fallthru
        _
    $region44: #{model_switch2_forward.3} parent=5 // pred_fallthru
      _
  $region6: #{model_switch2_forward.3} parent=0 // loop_footer
    %s14 = sadd.s32 1, %s10
  $region7: #{model_switch2_forward.3} parent=0 // loop_footer_branch
    %9 = sbr.rel target = $region3
  $region8: #{model_switch2_forward.3} parent=0 // loop_exit
    _

// kernel: model_switch2_forward.4
$region0: #{model_switch2_forward.4}
  #allocation0 [shape = 'u32[]', space=smem, size = 0x4, offset = 0x4, fixed_abs, tag = 'smem constant byte address 0x4 - core index']
  #allocation1 [shape = 'u32[144,128]{1,0:T(1,128)}', space=vmem, size = 0x12000, scoped, tag = 'internal scratch']
  %s0 = inlined_call_operand.vmem [shape: bf16[10,20,3200], index: 0, kind: input, shape index: {}]
  %s1 = inlined_call_operand.vmem [shape: bf16[3200,128], index: 1, kind: input, shape index: {}]
  %s2 = inlined_call_operand.vmem [shape: f32[1,128], index: 2, kind: input, shape index: {}]
  %s3 = inlined_call_operand.vmem [shape: f32[1,128], index: 3, kind: input, shape index: {}]
  %s4 = inlined_call_operand.vmem [shape: bf16[10,5,128], index: 4, kind: output, shape index: {}]
  %s5 = sld [smem:[#allocation0]]
  $region49: #{model_switch2_forward.4} parent=0
    _
  %s7 = ssub.s32 1, %s5
  %s8 = scalar_select 0, %s7, %s5
  loop: start=0, step=1, limit=12
  $region2: #{model_switch2_forward.4} parent=0 // loop_pre_header
    _
  $region3: #{model_switch2_forward.4} parent=0 // loop_header
    %s10 = sphi 0, %s14
    %p11 = scmp.ge.s32.totalorder %s10, 12
    %s20 = sphi 0, %s22
    %s23 = sphi 0, %s20
    %s24 = sphi 0, %s23
    %s40 = sphi 0, %s24
    %s44 = sphi 0, %s44
    %s46 = sphi 0, %s44
    %s47 = sphi 0, %s46
    %s61 = sphi 0, %s47
    %s65 = sphi 0, %s65
    %s67 = sphi 0, %s65
    %s68 = sphi 0, %s67
    %s82 = sphi 0, %s68
    %s86 = sphi 0, %s86
    %s88 = sphi 0, %s86
    %s89 = sphi 0, %s88
    %s103 = sphi 0, %s89
    %s109 = sphi 0, %s111
    %s112 = sphi 0, %s109
    %s113 = sphi 0, %s112
    %s129 = sphi 0, %s113
  $region4: #{model_switch2_forward.4} parent=0 // loop_header_branch
    %13 = sbr.rel (%p11) target = $region8
  $region5: #{model_switch2_forward.4} parent=0 // loop_body
    %s15 = ssub.s32 %s10, 1
    %s16 = ssub.s32 %s10, 2
    %s17 = sadd.s32 %s10, 1
    %s18 = ssub.s32 %s10, %s17
    %p19 = scmp.eq.s32.totalorder %s18, 0
    %s21 = sadd.s32 %s20, 1
    %s22 = scalar_select %p19, %s20, %s21
    %p25 = pneg %p19
    %p26 = scmp.eq.s32.totalorder %s10, 9
    %p27 = por %p25, %p26
    %p28 = scmp.ne.s32.totalorder %s20, %s23
    %p29 = scmp.eq.s32.totalorder %s10, 0
    %p30 = por %p28, %p29
    %p31 = scmp.ne.s32.totalorder %s20, %s23
    %p32 = scmp.eq.s32.totalorder %s15, 9
    %p33 = por %p31, %p32
    %p34 = scmp.ne.s32.totalorder %s23, %s24
    %p35 = scmp.eq.s32.totalorder %s15, 0
    %p36 = por %p34, %p35
    %p37 = scmp.ne.s32.totalorder %s23, %s24
    %p38 = scmp.eq.s32.totalorder %s16, 9
    %p39 = por %p37, %p38
    %p41 = scmp.ne.s32.totalorder %s24, %s40
    %p42 = scmp.eq.s32.totalorder %s16, 0
    %p43 = por %p41, %p42
    %s45 = sadd.s32 %s44, 1
    %p48 = scmp.eq.s32.totalorder %s10, 9
    %p49 = scmp.ne.s32.totalorder %s44, %s46
    %p50 = scmp.eq.s32.totalorder %s10, 0
    %p51 = por %p49, %p50
    %p52 = scmp.ne.s32.totalorder %s44, %s46
    %p53 = scmp.eq.s32.totalorder %s15, 9
    %p54 = por %p52, %p53
    %p55 = scmp.ne.s32.totalorder %s46, %s47
    %p56 = scmp.eq.s32.totalorder %s15, 0
    %p57 = por %p55, %p56
    %p58 = scmp.ne.s32.totalorder %s46, %s47
    %p59 = scmp.eq.s32.totalorder %s16, 9
    %p60 = por %p58, %p59
    %p62 = scmp.ne.s32.totalorder %s47, %s61
    %p63 = scmp.eq.s32.totalorder %s16, 0
    %p64 = por %p62, %p63
    %s66 = sadd.s32 %s65, 1
    %p69 = scmp.eq.s32.totalorder %s10, 9
    %p70 = scmp.ne.s32.totalorder %s65, %s67
    %p71 = scmp.eq.s32.totalorder %s10, 0
    %p72 = por %p70, %p71
    %p73 = scmp.ne.s32.totalorder %s65, %s67
    %p74 = scmp.eq.s32.totalorder %s15, 9
    %p75 = por %p73, %p74
    %p76 = scmp.ne.s32.totalorder %s67, %s68
    %p77 = scmp.eq.s32.totalorder %s15, 0
    %p78 = por %p76, %p77
    %p79 = scmp.ne.s32.totalorder %s67, %s68
    %p80 = scmp.eq.s32.totalorder %s16, 9
    %p81 = por %p79, %p80
    %p83 = scmp.ne.s32.totalorder %s68, %s82
    %p84 = scmp.eq.s32.totalorder %s16, 0
    %p85 = por %p83, %p84
    %s87 = sadd.s32 %s86, 1
    %p90 = scmp.eq.s32.totalorder %s10, 9
    %p91 = scmp.ne.s32.totalorder %s86, %s88
    %p92 = scmp.eq.s32.totalorder %s10, 0
    %p93 = por %p91, %p92
    %p94 = scmp.ne.s32.totalorder %s86, %s88
    %p95 = scmp.eq.s32.totalorder %s15, 9
    %p96 = por %p94, %p95
    %p97 = scmp.ne.s32.totalorder %s88, %s89
    %p98 = scmp.eq.s32.totalorder %s15, 0
    %p99 = por %p97, %p98
    %p100 = scmp.ne.s32.totalorder %s88, %s89
    %p101 = scmp.eq.s32.totalorder %s16, 9
    %p102 = por %p100, %p101
    %p104 = scmp.ne.s32.totalorder %s89, %s103
    %p105 = scmp.eq.s32.totalorder %s16, 0
    %p106 = por %p104, %p105
    %s107 = ssub.s32 %s10, %s17
    %p108 = scmp.eq.s32.totalorder %s107, 0
    %s110 = sadd.s32 %s109, 1
    %s111 = scalar_select %p108, %s109, %s110
    %p114 = pneg %p108
    %p115 = scmp.eq.s32.totalorder %s10, 9
    %p116 = por %p114, %p115
    %p117 = scmp.ne.s32.totalorder %s109, %s112
    %p118 = scmp.eq.s32.totalorder %s10, 0
    %p119 = por %p117, %p118
    %p120 = scmp.ne.s32.totalorder %s109, %s112
    %p121 = scmp.eq.s32.totalorder %s15, 9
    %p122 = por %p120, %p121
    %p123 = scmp.ne.s32.totalorder %s112, %s113
    %p124 = scmp.eq.s32.totalorder %s15, 0
    %p125 = por %p123, %p124
    %p126 = scmp.ne.s32.totalorder %s112, %s113
    %p127 = scmp.eq.s32.totalorder %s16, 9
    %p128 = por %p126, %p127
    %p130 = scmp.ne.s32.totalorder %s113, %s129
    %p131 = scmp.eq.s32.totalorder %s16, 0
    %p132 = por %p130, %p131
    %p133 = scmp.le.s32.totalorder 1, %s10
    %p134 = scmp.lt.s32.totalorder %s10, 11
    %p135 = pnand %p133, %p134
    %p136 = pneg %p135
    // Predicated region
    $region9: #{model_switch2_forward.4} parent=5 // pred_check
      _
    $region10: #{model_switch2_forward.4} parent=5 // pred_check_branch
      %138 = sbr.rel (%p135) target = $region12
    $region11: #{model_switch2_forward.4} parent=5 // pred_region
      %s139 = ssub.s32 %s10, 1
      // Predicated region
      $region13: #{model_switch2_forward.4} parent=11 // pred_check
        %p140 = pneg %p57
      $region14: #{model_switch2_forward.4} parent=11 // pred_check_branch
        %142 = sbr.rel (%p140) target = $region16
      $region15: #{model_switch2_forward.4} parent=11 // pred_region
        _
      $region16: #{model_switch2_forward.4} parent=11 // pred_fallthru
        _
      // Predicated region
      $region17: #{model_switch2_forward.4} parent=11 // pred_check
        %p143 = pneg %p78
      $region18: #{model_switch2_forward.4} parent=11 // pred_check_branch
        %145 = sbr.rel (%p143) target = $region20
      $region19: #{model_switch2_forward.4} parent=11 // pred_region
        _
      $region20: #{model_switch2_forward.4} parent=11 // pred_fallthru
        _
      // Predicated region
      $region21: #{model_switch2_forward.4} parent=11 // pred_check
        %p146 = pneg %p99
      $region22: #{model_switch2_forward.4} parent=11 // pred_check_branch
        %148 = sbr.rel (%p146) target = $region24
      $region23: #{model_switch2_forward.4} parent=11 // pred_region
        _
      $region24: #{model_switch2_forward.4} parent=11 // pred_fallthru
        _
    $region12: #{model_switch2_forward.4} parent=5 // pred_fallthru
      _
    %p149 = scmp.lt.s32.totalorder %s10, 10
    // Predicated region
    $region25: #{model_switch2_forward.4} parent=5 // pred_check
      %p150 = pneg %p149
    $region26: #{model_switch2_forward.4} parent=5 // pred_check_branch
      %152 = sbr.rel (%p150) target = $region28
    $region27: #{model_switch2_forward.4} parent=5 // pred_region
      // Predicated region
      $region29: #{model_switch2_forward.4} parent=27 // pred_check
        %p153 = pneg %p30
      $region30: #{model_switch2_forward.4} parent=27 // pred_check_branch
        %155 = sbr.rel (%p153) target = $region32
      $region31: #{model_switch2_forward.4} parent=27 // pred_region
        %p156 = scmp.lt.s32.totalorder %s10, 9
        %s157 = scalar_select %p156, %s10, 9
        %s158 = smul.addr %s157, 75
        %s159 = smul.addr %s158, 4
        %s160 = scalar_lea.vmem %s0, %s159
      $region32: #{model_switch2_forward.4} parent=27 // pred_fallthru
        _
    $region28: #{model_switch2_forward.4} parent=5 // pred_fallthru
      _
    %p161 = scmp.le.s32.totalorder 1, %s10
    %p162 = scmp.lt.s32.totalorder %s10, 11
    %p163 = pnand %p161, %p162
    %p164 = pneg %p163
    // Predicated region
    $region33: #{model_switch2_forward.4} parent=5 // pred_check
      _
    $region34: #{model_switch2_forward.4} parent=5 // pred_check_branch
      %166 = sbr.rel (%p163) target = $region36
    $region35: #{model_switch2_forward.4} parent=5 // pred_region
      %s167 = ssub.s32 %s10, 1
      %p168 = scmp.lt.s32.totalorder %s15, 9
      %s169 = scalar_select %p168, %s15, 9
      %s170 = smul.addr %s169, 75
      %s171 = smul.addr %s170, 4
      %s172 = scalar_lea.vmem %s0, %s171
      %p173 = pneg %p36
      %p174 = pneg %p33
      %p175 = pneg %p57
      %p176 = pneg %p54
      %p177 = pneg %p78
      %p178 = pneg %p75
      %p179 = pneg %p99
      %p180 = pneg %p96
      %p181 = pneg %p125
      %p182 = pneg %p122
      %p183 = scmp.lt.s32.totalorder %s15, 9
      %s184 = scalar_select %p183, %s15, 9
      %s185 = smul.addr %s184, 4
      %s186 = scalar_lea.vmem %s4, %s185
      %p187 = scmp.lt.s32.totalorder %s15, 9
      %s188 = scalar_select %p187, %s15, 9
      %s189 = smul.addr %s188, 75
      %s190 = smul.addr %s189, 4
      %s191 = scalar_lea.vmem %s0, %s190
      %p192 = scmp.lt.s32.totalorder %s15, 9
      %s193 = scalar_select %p192, %s15, 9
      %s194 = smul.addr %s193, 4
      %s195 = scalar_lea.vmem %s4, %s194
      %v197 = vld [vmem:[%s191] sm:$0xff]
      %v198 = vld [vmem:[%s191 + $0x8] sm:$0xff]
      %v199 = vld [vmem:[%s191 + $0x10] sm:$0xff]
      %v200 = vld [vmem:[%s191 + $0x18] sm:$0xff]
      %v201 = vld [vmem:[%s191 + $0x20] sm:$0xff]
      %v202 = vld [vmem:[%s191 + $0x28] sm:$0xff]
      %v203 = vld [vmem:[%s191 + $0x30] sm:$0xff]
      %v204 = vld [vmem:[%s191 + $0x38] sm:$0xff]
      %v205 = vld [vmem:[%s191 + $0x40] sm:$0xff]
      %v206 = vld [vmem:[%s191 + $0x48] sm:$0xff]
      %v207 = vld [vmem:[%s191 + $0x50] sm:$0xff]
      %v208 = vld [vmem:[%s191 + $0x58] sm:$0xff]
      %v209 = vld [vmem:[%s191 + $0x60] sm:$0xf]
      %v210 = vld [vmem:[%s191 + $0x64] sm:$0xff]
      %v211 = vld [vmem:[%s191 + $0x6c] sm:$0xff]
      %v212 = vld [vmem:[%s191 + $0x74] sm:$0xff]
      %v213 = vld [vmem:[%s191 + $0x7c] sm:$0xff]
      %v214 = vld [vmem:[%s191 + $0x84] sm:$0xff]
      %v215 = vld [vmem:[%s191 + $0x8c] sm:$0xff]
      %v216 = vld [vmem:[%s191 + $0x94] sm:$0xff]
      %v217 = vld [vmem:[%s191 + $0x9c] sm:$0xff]
      %v218 = vld [vmem:[%s191 + $0xa4] sm:$0xff]
      %v219 = vld [vmem:[%s191 + $0xac] sm:$0xff]
      %v220 = vld [vmem:[%s191 + $0xb4] sm:$0xff]
      %v221 = vld [vmem:[%s191 + $0xbc] sm:$0xff]
      %v222 = vld [vmem:[%s191 + $0xc4] sm:$0xf]
      %v223 = vld [vmem:[%s191 + $0xc8] sm:$0x33]
      %v224 = vld [vmem:[%s191 + $0xd0] sm:$0x33]
      %v225 = vld [vmem:[%s191 + $0xd8] sm:$0x33]
      %v226 = vld [vmem:[%s191 + $0xe0] sm:$0x33]
      %v227 = vld [vmem:[%s191 + $0xe8] sm:$0x33]
      %v228 = vld [vmem:[%s191 + $0xf0] sm:$0x33]
      %v229 = vld [vmem:[%s191 + $0xf8] sm:$0x33]
      %v230 = vld [vmem:[%s191 + $0x100] sm:$0x33]
      %v231 = vld [vmem:[%s191 + $0x108] sm:$0x33]
      %v232 = vld [vmem:[%s191 + $0x110] sm:$0x33]
      %v233 = vld [vmem:[%s191 + $0x118] sm:$0x33]
      %v234 = vld [vmem:[%s191 + $0x120] sm:$0x33]
      %v235 = vld [vmem:[%s191 + $0x128] sm:$0x3]
      %v236 = vld [vmem:[%s1] sm:$0xf]
      %v237 = vld [vmem:[%s1 + $0x4] sm:$0xf]
      %v238 = vld [vmem:[%s1 + $0x8] sm:$0xf]
      %v239 = vld [vmem:[%s1 + $0xc] sm:$0xf]
      %v240 = vld [vmem:[%s1 + $0x10] sm:$0xf]
      %v241 = vld [vmem:[%s1 + $0x14] sm:$0xf]
      %v242 = vld [vmem:[%s1 + $0x18] sm:$0xf]
      %v243 = vld [vmem:[%s1 + $0x1c] sm:$0xf]
      %v244 = vld [vmem:[%s1 + $0x20] sm:$0xf]
      %v245 = vld [vmem:[%s1 + $0x24] sm:$0xf]
      %v246 = vld [vmem:[%s1 + $0x28] sm:$0xf]
      %v247 = vld [vmem:[%s1 + $0x2c] sm:$0xf]
      %v248 = vld [vmem:[%s1 + $0x30] sm:$0xf]
      %v249 = vld [vmem:[%s1 + $0x34] sm:$0xf]
      %v250 = vld [vmem:[%s1 + $0x38] sm:$0xf]
      %v251 = vld [vmem:[%s1 + $0x3c] sm:$0xf]
      %v252 = vld [vmem:[%s1 + $0x40] sm:$0xf]
      %v253 = vld [vmem:[%s1 + $0x44] sm:$0xf]
      %v254 = vld [vmem:[%s1 + $0x48] sm:$0xf]
      %v255 = vld [vmem:[%s1 + $0x4c] sm:$0xf]
      %v256 = vld [vmem:[%s1 + $0x50] sm:$0xf]
      %v257 = vld [vmem:[%s1 + $0x54] sm:$0xf]
      %v258 = vld [vmem:[%s1 + $0x58] sm:$0xf]
      %v259 = vld [vmem:[%s1 + $0x5c] sm:$0xf]
      %v260 = vld [vmem:[%s1 + $0x60] sm:$0xf]
      %v261 = vld [vmem:[%s1 + $0x64] sm:$0xf]
      %v262 = vld [vmem:[%s1 + $0x68] sm:$0xf]
      %v263 = vld [vmem:[%s1 + $0x6c] sm:$0xf]
      %v264 = vld [vmem:[%s1 + $0x70] sm:$0xf]
      %v265 = vld [vmem:[%s1 + $0x74] sm:$0xf]
      %v266 = vld [vmem:[%s1 + $0x78] sm:$0xf]
      %v267 = vld [vmem:[%s1 + $0x7c] sm:$0xf]
      %v268 = vld [vmem:[%s1 + $0x80] sm:$0xf]
      %v269 = vld [vmem:[%s1 + $0x84] sm:$0xf]
      %v270 = vld [vmem:[%s1 + $0x88] sm:$0xf]
      %v271 = vld [vmem:[%s1 + $0x8c] sm:$0xf]
      %v272 = vld [vmem:[%s1 + $0x90] sm:$0xf]
      %v273 = vld [vmem:[%s1 + $0x94] sm:$0xf]
      %v274 = vld [vmem:[%s1 + $0x98] sm:$0xf]
      %v275 = vld [vmem:[%s1 + $0x9c] sm:$0xf]
      %v276 = vld [vmem:[%s1 + $0xa0] sm:$0xf]
      %v277 = vld [vmem:[%s1 + $0xa4] sm:$0xf]
      %v278 = vld [vmem:[%s1 + $0xa8] sm:$0xf]
      %v279 = vld [vmem:[%s1 + $0xac] sm:$0xf]
      %v280 = vld [vmem:[%s1 + $0xb0] sm:$0xf]
      %v281 = vld [vmem:[%s1 + $0xb4] sm:$0xf]
      %v282 = vld [vmem:[%s1 + $0xb8] sm:$0xf]
      %v283 = vld [vmem:[%s1 + $0xbc] sm:$0xf]
      %v284 = vld [vmem:[%s1 + $0xc0] sm:$0xf]
      %v285 = vld [vmem:[%s1 + $0xc4] sm:$0xf]
      %v286 = vld [vmem:[%s1 + $0xc8] sm:$0xf]
      %v287 = vld [vmem:[%s1 + $0xcc] sm:$0xf]
      %v288 = vld [vmem:[%s1 + $0xd0] sm:$0xf]
      %v289 = vld [vmem:[%s1 + $0xd4] sm:$0xf]
      %v290 = vld [vmem:[%s1 + $0xd8] sm:$0xf]
      %v291 = vld [vmem:[%s1 + $0xdc] sm:$0xf]
      %v292 = vld [vmem:[%s1 + $0xe0] sm:$0xf]
      %v293 = vld [vmem:[%s1 + $0xe4] sm:$0xf]
      %v294 = vld [vmem:[%s1 + $0xe8] sm:$0xf]
      %v295 = vld [vmem:[%s1 + $0xec] sm:$0xf]
      %v296 = vld [vmem:[%s1 + $0xf0] sm:$0xf]
      %v297 = vld [vmem:[%s1 + $0xf4] sm:$0xf]
      %v298 = vld [vmem:[%s1 + $0xf8] sm:$0xf]
      %v299 = vld [vmem:[%s1 + $0xfc] sm:$0xf]
      %v300 = vld [vmem:[%s1 + $0x100] sm:$0xf]
      %v301 = vld [vmem:[%s1 + $0x104] sm:$0xf]
      %v302 = vld [vmem:[%s1 + $0x108] sm:$0xf]
      %v303 = vld [vmem:[%s1 + $0x10c] sm:$0xf]
      %v304 = vld [vmem:[%s1 + $0x110] sm:$0xf]
      %v305 = vld [vmem:[%s1 + $0x114] sm:$0xf]
      %v306 = vld [vmem:[%s1 + $0x118] sm:$0xf]
      %v307 = vld [vmem:[%s1 + $0x11c] sm:$0xf]
      %v308 = vld [vmem:[%s1 + $0x120] sm:$0xf]
      %v309 = vld [vmem:[%s1 + $0x124] sm:$0xf]
      %v310 = vld [vmem:[%s1 + $0x128] sm:$0xf]
      %v311 = vld [vmem:[%s1 + $0x12c] sm:$0xf]
      %v312 = vld [vmem:[%s1 + $0x130] sm:$0xf]
      %v313 = vld [vmem:[%s1 + $0x134] sm:$0xf]
      %v314 = vld [vmem:[%s1 + $0x138] sm:$0xf]
      %v315 = vld [vmem:[%s1 + $0x13c] sm:$0xf]
      %v316 = vld [vmem:[%s1 + $0x140] sm:$0xf]
      %v317 = vld [vmem:[%s1 + $0x144] sm:$0xf]
      %v318 = vld [vmem:[%s1 + $0x148] sm:$0xf]
      %v319 = vld [vmem:[%s1 + $0x14c] sm:$0xf]
      %v320 = vld [vmem:[%s1 + $0x150] sm:$0xf]
      %v321 = vld [vmem:[%s1 + $0x154] sm:$0xf]
      %v322 = vld [vmem:[%s1 + $0x158] sm:$0xf]
      %v323 = vld [vmem:[%s1 + $0x15c] sm:$0xf]
      %v324 = vld [vmem:[%s1 + $0x160] sm:$0xf]
      %v325 = vld [vmem:[%s1 + $0x164] sm:$0xf]
      %v326 = vld [vmem:[%s1 + $0x168] sm:$0xf]
      %v327 = vld [vmem:[%s1 + $0x16c] sm:$0xf]
      %v328 = vld [vmem:[%s1 + $0x170] sm:$0xf]
      %v329 = vld [vmem:[%s1 + $0x174] sm:$0xf]
      %v330 = vld [vmem:[%s1 + $0x178] sm:$0xf]
      %v331 = vld [vmem:[%s1 + $0x17c] sm:$0xf]
      %v332 = vld [vmem:[%s1 + $0x180] sm:$0xf]
      %v333 = vld [vmem:[%s1 + $0x184] sm:$0xf]
      %v334 = vld [vmem:[%s1 + $0x188] sm:$0xf]
      %v335 = vld [vmem:[%s1 + $0x18c] sm:$0xf]
      %v336 = vld [vmem:[%s1 + $0x190] sm:$0xf]
      %v337 = vld [vmem:[%s1 + $0x194] sm:$0xf]
      %v338 = vld [vmem:[%s1 + $0x198] sm:$0xf]
      %v339 = vld [vmem:[%s1 + $0x19c] sm:$0xf]
      %v340 = vld [vmem:[%s1 + $0x1a0] sm:$0xf]
      %v341 = vld [vmem:[%s1 + $0x1a4] sm:$0xf]
      %v342 = vld [vmem:[%s1 + $0x1a8] sm:$0xf]
      %v343 = vld [vmem:[%s1 + $0x1ac] sm:$0xf]
      %v344 = vld [vmem:[%s1 + $0x1b0] sm:$0xf]
      %v345 = vld [vmem:[%s1 + $0x1b4] sm:$0xf]
      %v346 = vld [vmem:[%s1 + $0x1b8] sm:$0xf]
      %v347 = vld [vmem:[%s1 + $0x1bc] sm:$0xf]
      %v348 = vld [vmem:[%s1 + $0x1c0] sm:$0xf]
      %v349 = vld [vmem:[%s1 + $0x1c4] sm:$0xf]
      %v350 = vld [vmem:[%s1 + $0x1c8] sm:$0xf]
      %v351 = vld [vmem:[%s1 + $0x1cc] sm:$0xf]
      %v352 = vld [vmem:[%s1 + $0x1d0] sm:$0xf]
      %v353 = vld [vmem:[%s1 + $0x1d4] sm:$0xf]
      %v354 = vld [vmem:[%s1 + $0x1d8] sm:$0xf]
      %v355 = vld [vmem:[%s1 + $0x1dc] sm:$0xf]
      %v356 = vld [vmem:[%s1 + $0x1e0] sm:$0xf]
      %v357 = vld [vmem:[%s1 + $0x1e4] sm:$0xf]
      %v358 = vld [vmem:[%s1 + $0x1e8] sm:$0xf]
      %v359 = vld [vmem:[%s1 + $0x1ec] sm:$0xf]
      %v360 = vld [vmem:[%s1 + $0x1f0] sm:$0xf]
      %v361 = vld [vmem:[%s1 + $0x1f4] sm:$0xf]
      %v362 = vld [vmem:[%s1 + $0x1f8] sm:$0xf]
      %v363 = vld [vmem:[%s1 + $0x1fc] sm:$0xf]
      %v364 = vld [vmem:[%s1 + $0x200] sm:$0xf]
      %v365 = vld [vmem:[%s1 + $0x204] sm:$0xf]
      %v366 = vld [vmem:[%s1 + $0x208] sm:$0xf]
      %v367 = vld [vmem:[%s1 + $0x20c] sm:$0xf]
      %v368 = vld [vmem:[%s1 + $0x210] sm:$0xf]
      %v369 = vld [vmem:[%s1 + $0x214] sm:$0xf]
      %v370 = vld [vmem:[%s1 + $0x218] sm:$0xf]
      %v371 = vld [vmem:[%s1 + $0x21c] sm:$0xf]
      %v372 = vld [vmem:[%s1 + $0x220] sm:$0xf]
      %v373 = vld [vmem:[%s1 + $0x224] sm:$0xf]
      %v374 = vld [vmem:[%s1 + $0x228] sm:$0xf]
      %v375 = vld [vmem:[%s1 + $0x22c] sm:$0xf]
      %v376 = vld [vmem:[%s1 + $0x230] sm:$0xf]
      %v377 = vld [vmem:[%s1 + $0x234] sm:$0xf]
      %v378 = vld [vmem:[%s1 + $0x238] sm:$0xf]
      %v379 = vld [vmem:[%s1 + $0x23c] sm:$0xf]
      %v380 = vld [vmem:[%s1 + $0x240] sm:$0xf]
      %v381 = vld [vmem:[%s1 + $0x244] sm:$0xf]
      %v382 = vld [vmem:[%s1 + $0x248] sm:$0xf]
      %v383 = vld [vmem:[%s1 + $0x24c] sm:$0xf]
      %v384 = vld [vmem:[%s1 + $0x250] sm:$0xf]
      %v385 = vld [vmem:[%s1 + $0x254] sm:$0xf]
      %v386 = vld [vmem:[%s1 + $0x258] sm:$0xf]
      %v387 = vld [vmem:[%s1 + $0x25c] sm:$0xf]
      %v388 = vld [vmem:[%s1 + $0x260] sm:$0xf]
      %v389 = vld [vmem:[%s1 + $0x264] sm:$0xf]
      %v390 = vld [vmem:[%s1 + $0x268] sm:$0xf]
      %v391 = vld [vmem:[%s1 + $0x26c] sm:$0xf]
      %v392 = vld [vmem:[%s1 + $0x270] sm:$0xf]
      %v393 = vld [vmem:[%s1 + $0x274] sm:$0xf]
      %v394 = vld [vmem:[%s1 + $0x278] sm:$0xf]
      %v395 = vld [vmem:[%s1 + $0x27c] sm:$0xf]
      %v396 = vld [vmem:[%s1 + $0x280] sm:$0xf]
      %v397 = vld [vmem:[%s1 + $0x284] sm:$0xf]
      %v398 = vld [vmem:[%s1 + $0x288] sm:$0xf]
      %v399 = vld [vmem:[%s1 + $0x28c] sm:$0xf]
      %v400 = vld [vmem:[%s1 + $0x290] sm:$0xf]
      %v401 = vld [vmem:[%s1 + $0x294] sm:$0xf]
      %v402 = vld [vmem:[%s1 + $0x298] sm:$0xf]
      %v403 = vld [vmem:[%s1 + $0x29c] sm:$0xf]
      %v404 = vld [vmem:[%s1 + $0x2a0] sm:$0xf]
      %v405 = vld [vmem:[%s1 + $0x2a4] sm:$0xf]
      %v406 = vld [vmem:[%s1 + $0x2a8] sm:$0xf]
      %v407 = vld [vmem:[%s1 + $0x2ac] sm:$0xf]
      %v408 = vld [vmem:[%s1 + $0x2b0] sm:$0xf]
      %v409 = vld [vmem:[%s1 + $0x2b4] sm:$0xf]
      %v410 = vld [vmem:[%s1 + $0x2b8] sm:$0xf]
      %v411 = vld [vmem:[%s1 + $0x2bc] sm:$0xf]
      %v412 = vld [vmem:[%s1 + $0x2c0] sm:$0xf]
      %v413 = vld [vmem:[%s1 + $0x2c4] sm:$0xf]
      %v414 = vld [vmem:[%s1 + $0x2c8] sm:$0xf]
      %v415 = vld [vmem:[%s1 + $0x2cc] sm:$0xf]
      %v416 = vld [vmem:[%s1 + $0x2d0] sm:$0xf]
      %v417 = vld [vmem:[%s1 + $0x2d4] sm:$0xf]
      %v418 = vld [vmem:[%s1 + $0x2d8] sm:$0xf]
      %v419 = vld [vmem:[%s1 + $0x2dc] sm:$0xf]
      %v420 = vld [vmem:[%s1 + $0x2e0] sm:$0xf]
      %v421 = vld [vmem:[%s1 + $0x2e4] sm:$0xf]
      %v422 = vld [vmem:[%s1 + $0x2e8] sm:$0xf]
      %v423 = vld [vmem:[%s1 + $0x2ec] sm:$0xf]
      %v424 = vld [vmem:[%s1 + $0x2f0] sm:$0xf]
      %v425 = vld [vmem:[%s1 + $0x2f4] sm:$0xf]
      %v426 = vld [vmem:[%s1 + $0x2f8] sm:$0xf]
      %v427 = vld [vmem:[%s1 + $0x2fc] sm:$0xf]
      %v428 = vld [vmem:[%s1 + $0x300] sm:$0xf]
      %v429 = vld [vmem:[%s1 + $0x304] sm:$0xf]
      %v430 = vld [vmem:[%s1 + $0x308] sm:$0xf]
      %v431 = vld [vmem:[%s1 + $0x30c] sm:$0xf]
      %v432 = vld [vmem:[%s1 + $0x310] sm:$0xf]
      %v433 = vld [vmem:[%s1 + $0x314] sm:$0xf]
      %v434 = vld [vmem:[%s1 + $0x318] sm:$0xf]
      %v435 = vld [vmem:[%s1 + $0x31c] sm:$0xf]
      %v436 = vld [vmem:[%s1 + $0x320] sm:$0xf]
      %v437 = vld [vmem:[%s1 + $0x324] sm:$0xf]
      %v438 = vld [vmem:[%s1 + $0x328] sm:$0xf]
      %v439 = vld [vmem:[%s1 + $0x32c] sm:$0xf]
      %v440 = vld [vmem:[%s1 + $0x330] sm:$0xf]
      %v441 = vld [vmem:[%s1 + $0x334] sm:$0xf]
      %v442 = vld [vmem:[%s1 + $0x338] sm:$0xf]
      %v443 = vld [vmem:[%s1 + $0x33c] sm:$0xf]
      %v444 = vld [vmem:[%s1 + $0x340] sm:$0xf]
      %v445 = vld [vmem:[%s1 + $0x344] sm:$0xf]
      %v446 = vld [vmem:[%s1 + $0x348] sm:$0xf]
      %v447 = vld [vmem:[%s1 + $0x34c] sm:$0xf]
      %v448 = vld [vmem:[%s1 + $0x350] sm:$0xf]
      %v449 = vld [vmem:[%s1 + $0x354] sm:$0xf]
      %v450 = vld [vmem:[%s1 + $0x358] sm:$0xf]
      %v451 = vld [vmem:[%s1 + $0x35c] sm:$0xf]
      %v452 = vld [vmem:[%s1 + $0x360] sm:$0xf]
      %v453 = vld [vmem:[%s1 + $0x364] sm:$0xf]
      %v454 = vld [vmem:[%s1 + $0x368] sm:$0xf]
      %v455 = vld [vmem:[%s1 + $0x36c] sm:$0xf]
      %v456 = vld [vmem:[%s1 + $0x370] sm:$0xf]
      %v457 = vld [vmem:[%s1 + $0x374] sm:$0xf]
      %v458 = vld [vmem:[%s1 + $0x378] sm:$0xf]
      %v459 = vld [vmem:[%s1 + $0x37c] sm:$0xf]
      %v460 = vld [vmem:[%s1 + $0x380] sm:$0xf]
      %v461 = vld [vmem:[%s1 + $0x384] sm:$0xf]
      %v462 = vld [vmem:[%s1 + $0x388] sm:$0xf]
      %v463 = vld [vmem:[%s1 + $0x38c] sm:$0xf]
      %v464 = vld [vmem:[%s1 + $0x390] sm:$0xf]
      %v465 = vld [vmem:[%s1 + $0x394] sm:$0xf]
      %v466 = vld [vmem:[%s1 + $0x398] sm:$0xf]
      %v467 = vld [vmem:[%s1 + $0x39c] sm:$0xf]
      %v468 = vld [vmem:[%s1 + $0x3a0] sm:$0xf]
      %v469 = vld [vmem:[%s1 + $0x3a4] sm:$0xf]
      %v470 = vld [vmem:[%s1 + $0x3a8] sm:$0xf]
      %v471 = vld [vmem:[%s1 + $0x3ac] sm:$0xf]
      %v472 = vld [vmem:[%s1 + $0x3b0] sm:$0xf]
      %v473 = vld [vmem:[%s1 + $0x3b4] sm:$0xf]
      %v474 = vld [vmem:[%s1 + $0x3b8] sm:$0xf]
      %v475 = vld [vmem:[%s1 + $0x3bc] sm:$0xf]
      %v476 = vld [vmem:[%s1 + $0x3c0] sm:$0xf]
      %v477 = vld [vmem:[%s1 + $0x3c4] sm:$0xf]
      %v478 = vld [vmem:[%s1 + $0x3c8] sm:$0xf]
      %v479 = vld [vmem:[%s1 + $0x3cc] sm:$0xf]
      %v480 = vld [vmem:[%s1 + $0x3d0] sm:$0xf]
      %v481 = vld [vmem:[%s1 + $0x3d4] sm:$0xf]
      %v482 = vld [vmem:[%s1 + $0x3d8] sm:$0xf]
      %v483 = vld [vmem:[%s1 + $0x3dc] sm:$0xf]
      %v484 = vld [vmem:[%s1 + $0x3e0] sm:$0xf]
      %v485 = vld [vmem:[%s1 + $0x3e4] sm:$0xf]
      %v486 = vld [vmem:[%s1 + $0x3e8] sm:$0xf]
      %v487 = vld [vmem:[%s1 + $0x3ec] sm:$0xf]
      %v488 = vld [vmem:[%s1 + $0x3f0] sm:$0xf]
      %v489 = vld [vmem:[%s1 + $0x3f4] sm:$0xf]
      %v490 = vld [vmem:[%s1 + $0x3f8] sm:$0xf]
      %v491 = vld [vmem:[%s1 + $0x3fc] sm:$0xf]
      %v492 = vld [vmem:[%s1 + $0x400] sm:$0xf]
      %v493 = vld [vmem:[%s1 + $0x404] sm:$0xf]
      %v494 = vld [vmem:[%s1 + $0x408] sm:$0xf]
      %v495 = vld [vmem:[%s1 + $0x40c] sm:$0xf]
      %v496 = vld [vmem:[%s1 + $0x410] sm:$0xf]
      %v497 = vld [vmem:[%s1 + $0x414] sm:$0xf]
      %v498 = vld [vmem:[%s1 + $0x418] sm:$0xf]
      %v499 = vld [vmem:[%s1 + $0x41c] sm:$0xf]
      %v500 = vld [vmem:[%s1 + $0x420] sm:$0xf]
      %v501 = vld [vmem:[%s1 + $0x424] sm:$0xf]
      %v502 = vld [vmem:[%s1 + $0x428] sm:$0xf]
      %v503 = vld [vmem:[%s1 + $0x42c] sm:$0xf]
      %v504 = vld [vmem:[%s1 + $0x430] sm:$0xf]
      %v505 = vld [vmem:[%s1 + $0x434] sm:$0xf]
      %v506 = vld [vmem:[%s1 + $0x438] sm:$0xf]
      %v507 = vld [vmem:[%s1 + $0x43c] sm:$0xf]
      %v508 = vld [vmem:[%s1 + $0x440] sm:$0xf]
      %v509 = vld [vmem:[%s1 + $0x444] sm:$0xf]
      %v510 = vld [vmem:[%s1 + $0x448] sm:$0xf]
      %v511 = vld [vmem:[%s1 + $0x44c] sm:$0xf]
      %v512 = vld [vmem:[%s1 + $0x450] sm:$0xf]
      %v513 = vld [vmem:[%s1 + $0x454] sm:$0xf]
      %v514 = vld [vmem:[%s1 + $0x458] sm:$0xf]
      %v515 = vld [vmem:[%s1 + $0x45c] sm:$0xf]
      %v516 = vld [vmem:[%s1 + $0x460] sm:$0xf]
      %v517 = vld [vmem:[%s1 + $0x464] sm:$0xf]
      %v518 = vld [vmem:[%s1 + $0x468] sm:$0xf]
      %v519 = vld [vmem:[%s1 + $0x46c] sm:$0xf]
      %v520 = vld [vmem:[%s1 + $0x470] sm:$0xf]
      %v521 = vld [vmem:[%s1 + $0x474] sm:$0xf]
      %v522 = vld [vmem:[%s1 + $0x478] sm:$0xf]
      %v523 = vld [vmem:[%s1 + $0x47c] sm:$0xf]
      %v524 = vld [vmem:[%s1 + $0x480] sm:$0xf]
      %v525 = vld [vmem:[%s1 + $0x484] sm:$0xf]
      %v526 = vld [vmem:[%s1 + $0x488] sm:$0xf]
      %v527 = vld [vmem:[%s1 + $0x48c] sm:$0xf]
      %v528 = vld [vmem:[%s1 + $0x490] sm:$0xf]
      %v529 = vld [vmem:[%s1 + $0x494] sm:$0xf]
      %v530 = vld [vmem:[%s1 + $0x498] sm:$0xf]
      %v531 = vld [vmem:[%s1 + $0x49c] sm:$0xf]
      %v532 = vld [vmem:[%s1 + $0x4a0] sm:$0xf]
      %v533 = vld [vmem:[%s1 + $0x4a4] sm:$0xf]
      %v534 = vld [vmem:[%s1 + $0x4a8] sm:$0xf]
      %v535 = vld [vmem:[%s1 + $0x4ac] sm:$0xf]
      %v536 = vld [vmem:[%s1 + $0x4b0] sm:$0xf]
      %v537 = vld [vmem:[%s1 + $0x4b4] sm:$0xf]
      %v538 = vld [vmem:[%s1 + $0x4b8] sm:$0xf]
      %v539 = vld [vmem:[%s1 + $0x4bc] sm:$0xf]
      %v540 = vld [vmem:[%s1 + $0x4c0] sm:$0xf]
      %v541 = vld [vmem:[%s1 + $0x4c4] sm:$0xf]
      %v542 = vld [vmem:[%s1 + $0x4c8] sm:$0xf]
      %v543 = vld [vmem:[%s1 + $0x4cc] sm:$0xf]
      %v544 = vld [vmem:[%s1 + $0x4d0] sm:$0xf]
      %v545 = vld [vmem:[%s1 + $0x4d4] sm:$0xf]
      %v546 = vld [vmem:[%s1 + $0x4d8] sm:$0xf]
      %v547 = vld [vmem:[%s1 + $0x4dc] sm:$0xf]
      %v548 = vld [vmem:[%s1 + $0x4e0] sm:$0xf]
      %v549 = vld [vmem:[%s1 + $0x4e4] sm:$0xf]
      %v550 = vld [vmem:[%s1 + $0x4e8] sm:$0xf]
      %v551 = vld [vmem:[%s1 + $0x4ec] sm:$0xf]
      %v552 = vld [vmem:[%s1 + $0x4f0] sm:$0xf]
      %v553 = vld [vmem:[%s1 + $0x4f4] sm:$0xf]
      %v554 = vld [vmem:[%s1 + $0x4f8] sm:$0xf]
      %v555 = vld [vmem:[%s1 + $0x4fc] sm:$0xf]
      %v556 = vld [vmem:[%s1 + $0x500] sm:$0xf]
      %v557 = vld [vmem:[%s1 + $0x504] sm:$0xf]
      %v558 = vld [vmem:[%s1 + $0x508] sm:$0xf]
      %v559 = vld [vmem:[%s1 + $0x50c] sm:$0xf]
      %v560 = vld [vmem:[%s1 + $0x510] sm:$0xf]
      %v561 = vld [vmem:[%s1 + $0x514] sm:$0xf]
      %v562 = vld [vmem:[%s1 + $0x518] sm:$0xf]
      %v563 = vld [vmem:[%s1 + $0x51c] sm:$0xf]
      %v564 = vld [vmem:[%s1 + $0x520] sm:$0xf]
      %v565 = vld [vmem:[%s1 + $0x524] sm:$0xf]
      %v566 = vld [vmem:[%s1 + $0x528] sm:$0xf]
      %v567 = vld [vmem:[%s1 + $0x52c] sm:$0xf]
      %v568 = vld [vmem:[%s1 + $0x530] sm:$0xf]
      %v569 = vld [vmem:[%s1 + $0x534] sm:$0xf]
      %v570 = vld [vmem:[%s1 + $0x538] sm:$0xf]
      %v571 = vld [vmem:[%s1 + $0x53c] sm:$0xf]
      %v572 = vld [vmem:[%s1 + $0x540] sm:$0xf]
      %v573 = vld [vmem:[%s1 + $0x544] sm:$0xf]
      %v574 = vld [vmem:[%s1 + $0x548] sm:$0xf]
      %v575 = vld [vmem:[%s1 + $0x54c] sm:$0xf]
      %v576 = vld [vmem:[%s1 + $0x550] sm:$0xf]
      %v577 = vld [vmem:[%s1 + $0x554] sm:$0xf]
      %v578 = vld [vmem:[%s1 + $0x558] sm:$0xf]
      %v579 = vld [vmem:[%s1 + $0x55c] sm:$0xf]
      %v580 = vld [vmem:[%s1 + $0x560] sm:$0xf]
      %v581 = vld [vmem:[%s1 + $0x564] sm:$0xf]
      %v582 = vld [vmem:[%s1 + $0x568] sm:$0xf]
      %v583 = vld [vmem:[%s1 + $0x56c] sm:$0xf]
      %v584 = vld [vmem:[%s1 + $0x570] sm:$0xf]
      %v585 = vld [vmem:[%s1 + $0x574] sm:$0xf]
      %v586 = vld [vmem:[%s1 + $0x578] sm:$0xf]
      %v587 = vld [vmem:[%s1 + $0x57c] sm:$0xf]
      %v588 = vld [vmem:[%s1 + $0x580] sm:$0xf]
      %v589 = vld [vmem:[%s1 + $0x584] sm:$0xf]
      %v590 = vld [vmem:[%s1 + $0x588] sm:$0xf]
      %v591 = vld [vmem:[%s1 + $0x58c] sm:$0xf]
      %v592 = vld [vmem:[%s1 + $0x590] sm:$0xf]
      %v593 = vld [vmem:[%s1 + $0x594] sm:$0xf]
      %v594 = vld [vmem:[%s1 + $0x598] sm:$0xf]
      %v595 = vld [vmem:[%s1 + $0x59c] sm:$0xf]
      %v596 = vld [vmem:[%s1 + $0x5a0] sm:$0xf]
      %v597 = vld [vmem:[%s1 + $0x5a4] sm:$0xf]
      %v598 = vld [vmem:[%s1 + $0x5a8] sm:$0xf]
      %v599 = vld [vmem:[%s1 + $0x5ac] sm:$0xf]
      %v600 = vld [vmem:[%s1 + $0x5b0] sm:$0xf]
      %v601 = vld [vmem:[%s1 + $0x5b4] sm:$0xf]
      %v602 = vld [vmem:[%s1 + $0x5b8] sm:$0xf]
      %v603 = vld [vmem:[%s1 + $0x5bc] sm:$0xf]
      %v604 = vld [vmem:[%s1 + $0x5c0] sm:$0xf]
      %v605 = vld [vmem:[%s1 + $0x5c4] sm:$0xf]
      %v606 = vld [vmem:[%s1 + $0x5c8] sm:$0xf]
      %v607 = vld [vmem:[%s1 + $0x5cc] sm:$0xf]
      %v608 = vld [vmem:[%s1 + $0x5d0] sm:$0xf]
      %v609 = vld [vmem:[%s1 + $0x5d4] sm:$0xf]
      %v610 = vld [vmem:[%s1 + $0x5d8] sm:$0xf]
      %v611 = vld [vmem:[%s1 + $0x5dc] sm:$0xf]
      %v612 = vld [vmem:[%s1 + $0x5e0] sm:$0xf]
      %v613 = vld [vmem:[%s1 + $0x5e4] sm:$0xf]
      %v614 = vld [vmem:[%s1 + $0x5e8] sm:$0xf]
      %v615 = vld [vmem:[%s1 + $0x5ec] sm:$0xf]
      %v616 = vld [vmem:[%s1 + $0x5f0] sm:$0xf]
      %v617 = vld [vmem:[%s1 + $0x5f4] sm:$0xf]
      %v618 = vld [vmem:[%s1 + $0x5f8] sm:$0xf]
      %v619 = vld [vmem:[%s1 + $0x5fc] sm:$0xf]
      %v620 = vld [vmem:[%s1 + $0x600] sm:$0xf]
      %v621 = vld [vmem:[%s1 + $0x604] sm:$0xf]
      %v622 = vld [vmem:[%s1 + $0x608] sm:$0xf]
      %v623 = vld [vmem:[%s1 + $0x60c] sm:$0xf]
      %v624 = vld [vmem:[%s1 + $0x610] sm:$0xf]
      %v625 = vld [vmem:[%s1 + $0x614] sm:$0xf]
      %v626 = vld [vmem:[%s1 + $0x618] sm:$0xf]
      %v627 = vld [vmem:[%s1 + $0x61c] sm:$0xf]
      %v628 = vld [vmem:[%s1 + $0x620] sm:$0xf]
      %v629 = vld [vmem:[%s1 + $0x624] sm:$0xf]
      %v630 = vld [vmem:[%s1 + $0x628] sm:$0xf]
      %v631 = vld [vmem:[%s1 + $0x62c] sm:$0xf]
      %v632 = vld [vmem:[%s1 + $0x630] sm:$0xf]
      %v633 = vld [vmem:[%s1 + $0x634] sm:$0xf]
      %v634 = vld [vmem:[%s1 + $0x638] sm:$0xf]
      %v635 = vld [vmem:[%s1 + $0x63c] sm:$0xf]
      %v675 = vunpack.c.l.b16 %v197
      %v676 = vunpack.c.h.b16 %v197
      %v677 = vunpack.c.l.b16 %v198
      %v678 = vunpack.c.h.b16 %v198
      %v679 = vunpack.c.l.b16 %v199
      %v680 = vunpack.c.h.b16 %v199
      %v681 = vunpack.c.l.b16 %v200
      %v682 = vunpack.c.h.b16 %v200
      %v683 = vunpack.c.l.b16 %v201
      %v684 = vunpack.c.h.b16 %v201
      %v685 = vunpack.c.l.b16 %v202
      %v686 = vunpack.c.h.b16 %v202
      %v687 = vunpack.c.l.b16 %v203
      %v688 = vunpack.c.h.b16 %v203
      %v689 = vunpack.c.l.b16 %v204
      %v690 = vunpack.c.h.b16 %v204
      %v691 = vunpack.c.l.b16 %v205
      %v692 = vunpack.c.h.b16 %v205
      %v693 = vunpack.c.l.b16 %v206
      %v694 = vunpack.c.h.b16 %v206
      %v695 = vunpack.c.l.b16 %v207
      %v696 = vunpack.c.h.b16 %v207
      %v697 = vunpack.c.l.b16 %v208
      %v698 = vunpack.c.h.b16 %v208
      %v699 = vunpack.c.l.b16 %v209
      %v700 = vunpack.c.l.b16 %v210
      %v701 = vunpack.c.h.b16 %v210
      %v702 = vunpack.c.l.b16 %v211
      %v703 = vunpack.c.h.b16 %v211
      %v704 = vunpack.c.l.b16 %v212
      %v705 = vunpack.c.h.b16 %v212
      %v706 = vunpack.c.l.b16 %v213
      %v707 = vunpack.c.h.b16 %v213
      %v708 = vunpack.c.l.b16 %v214
      %v709 = vunpack.c.h.b16 %v214
      %v710 = vunpack.c.l.b16 %v215
      %v711 = vunpack.c.h.b16 %v215
      %v712 = vunpack.c.l.b16 %v216
      %v713 = vunpack.c.h.b16 %v216
      %v714 = vunpack.c.l.b16 %v217
      %v715 = vunpack.c.h.b16 %v217
      %v716 = vunpack.c.l.b16 %v218
      %v717 = vunpack.c.h.b16 %v218
      %v718 = vunpack.c.l.b16 %v219
      %v719 = vunpack.c.h.b16 %v219
      %v720 = vunpack.c.l.b16 %v220
      %v721 = vunpack.c.h.b16 %v220
      %v722 = vunpack.c.l.b16 %v221
      %v723 = vunpack.c.h.b16 %v221
      %v724 = vunpack.c.l.b16 %v222
      %v725 = vunpack.c.l.b16 %v223
      %v726 = vunpack.c.h.b16 %v223
      %v727 = vunpack.c.l.b16 %v224
      %v728 = vunpack.c.h.b16 %v224
      %v729 = vunpack.c.l.b16 %v225
      %v730 = vunpack.c.h.b16 %v225
      %v731 = vunpack.c.l.b16 %v226
      %v732 = vunpack.c.h.b16 %v226
      %v733 = vunpack.c.l.b16 %v227
      %v734 = vunpack.c.h.b16 %v227
      %v735 = vunpack.c.l.b16 %v228
      %v736 = vunpack.c.h.b16 %v228
      %v737 = vunpack.c.l.b16 %v229
      %v738 = vunpack.c.h.b16 %v229
      %v739 = vunpack.c.l.b16 %v230
      %v740 = vunpack.c.h.b16 %v230
      %v741 = vunpack.c.l.b16 %v231
      %v742 = vunpack.c.h.b16 %v231
      %v743 = vunpack.c.l.b16 %v232
      %v744 = vunpack.c.h.b16 %v232
      %v745 = vunpack.c.l.b16 %v233
      %v746 = vunpack.c.h.b16 %v233
      %v747 = vunpack.c.l.b16 %v234
      %v748 = vunpack.c.h.b16 %v234
      %v749 = vunpack.c.l.b16 %v235
      %v750 = vpack.c.b16 %v700, %v675
      %v751 = vpack.c.b16 %v701, %v676
      %v752 = vpack.c.b16 %v702, %v677
      %v753 = vpack.c.b16 %v703, %v678
      %v754 = vpack.c.b16 %v704, %v679
      %v755 = vpack.c.b16 %v705, %v680
      %v756 = vpack.c.b16 %v706, %v681
      %v757 = vpack.c.b16 %v707, %v682
      %v758 = vpack.c.b16 %v708, %v683
      %v759 = vpack.c.b16 %v709, %v684
      %v760 = vpack.c.b16 %v710, %v685
      %v761 = vpack.c.b16 %v711, %v686
      %v762 = vpack.c.b16 %v712, %v687
      %v763 = vpack.c.b16 %v713, %v688
      %v764 = vpack.c.b16 %v714, %v689
      %v765 = vpack.c.b16 %v715, %v690
      %v766 = vpack.c.b16 %v716, %v691
      %v767 = vpack.c.b16 %v717, %v692
      %v768 = vpack.c.b16 %v718, %v693
      %v769 = vpack.c.b16 %v719, %v694
      %v770 = vpack.c.b16 %v720, %v695
      %v771 = vpack.c.b16 %v721, %v696
      %v772 = vpack.c.b16 %v722, %v697
      %v773 = vpack.c.b16 %v723, %v698
      %v774 = vpack.c.b16 %v724, %v699
      %v775 = vpack.c.b16 %v725, %v725
      %v776 = vpack.c.b16 %v726, %v726
      %v777 = vpack.c.b16 %v727, %v727
      %v778 = vpack.c.b16 %v728, %v728
      %v779 = vpack.c.b16 %v729, %v729
      %v780 = vpack.c.b16 %v730, %v730
      %v781 = vpack.c.b16 %v731, %v731
      %v782 = vpack.c.b16 %v732, %v732
      %v783 = vpack.c.b16 %v733, %v733
      %v784 = vpack.c.b16 %v734, %v734
      %v785 = vpack.c.b16 %v735, %v735
      %v786 = vpack.c.b16 %v736, %v736
      %v787 = vpack.c.b16 %v737, %v737
      %v788 = vpack.c.b16 %v738, %v738
      %v789 = vpack.c.b16 %v739, %v739
      %v790 = vpack.c.b16 %v740, %v740
      %v791 = vpack.c.b16 %v741, %v741
      %v792 = vpack.c.b16 %v742, %v742
      %v793 = vpack.c.b16 %v743, %v743
      %v794 = vpack.c.b16 %v744, %v744
      %v795 = vpack.c.b16 %v745, %v745
      %v796 = vpack.c.b16 %v746, %v746
      %v797 = vpack.c.b16 %v747, %v747
      %v798 = vpack.c.b16 %v748, %v748
      %v799 = vpack.c.b16 %v749, %v749
      %v1250 = vunpack.c.l.b16 %v236
      %v1251 = vunpack.c.l.b16 %v237
      %v1252 = vunpack.c.l.b16 %v238
      %v1253 = vunpack.c.l.b16 %v239
      %v1254 = vunpack.c.l.b16 %v240
      %v1255 = vunpack.c.l.b16 %v241
      %v1256 = vunpack.c.l.b16 %v242
      %v1257 = vunpack.c.l.b16 %v243
      %v1258 = vunpack.c.l.b16 %v244
      %v1259 = vunpack.c.l.b16 %v245
      %v1260 = vunpack.c.l.b16 %v246
      %v1261 = vunpack.c.l.b16 %v247
      %v1262 = vunpack.c.l.b16 %v248
      %v1263 = vunpack.c.l.b16 %v249
      %v1264 = vunpack.c.l.b16 %v250
      %v1265 = vunpack.c.l.b16 %v251
      %v1266 = vunpack.c.l.b16 %v252
      %v1267 = vunpack.c.l.b16 %v253
      %v1268 = vunpack.c.l.b16 %v254
      %v1269 = vunpack.c.l.b16 %v255
      %v1270 = vunpack.c.l.b16 %v256
      %v1271 = vunpack.c.l.b16 %v257
      %v1272 = vunpack.c.l.b16 %v258
      %v1273 = vunpack.c.l.b16 %v259
      %v1274 = vunpack.c.l.b16 %v260
      %v1275 = vunpack.c.l.b16 %v261
      %v1276 = vunpack.c.l.b16 %v262
      %v1277 = vunpack.c.l.b16 %v263
      %v1278 = vunpack.c.l.b16 %v264
      %v1279 = vunpack.c.l.b16 %v265
      %v1280 = vunpack.c.l.b16 %v266
      %v1281 = vunpack.c.l.b16 %v267
      %v1282 = vunpack.c.l.b16 %v268
      %v1283 = vunpack.c.l.b16 %v269
      %v1284 = vunpack.c.l.b16 %v270
      %v1285 = vunpack.c.l.b16 %v271
      %v1286 = vunpack.c.l.b16 %v272
      %v1287 = vunpack.c.l.b16 %v273
      %v1288 = vunpack.c.l.b16 %v274
      %v1289 = vunpack.c.l.b16 %v275
      %v1290 = vunpack.c.l.b16 %v276
      %v1291 = vunpack.c.l.b16 %v277
      %v1292 = vunpack.c.l.b16 %v278
      %v1293 = vunpack.c.l.b16 %v279
      %v1294 = vunpack.c.l.b16 %v280
      %v1295 = vunpack.c.l.b16 %v281
      %v1296 = vunpack.c.l.b16 %v282
      %v1297 = vunpack.c.l.b16 %v283
      %v1298 = vunpack.c.l.b16 %v284
      %v1299 = vunpack.c.l.b16 %v285
      %v1300 = vunpack.c.l.b16 %v286
      %v1301 = vunpack.c.l.b16 %v287
      %v1302 = vunpack.c.l.b16 %v288
      %v1303 = vunpack.c.l.b16 %v289
      %v1304 = vunpack.c.l.b16 %v290
      %v1305 = vunpack.c.l.b16 %v291
      %v1306 = vunpack.c.l.b16 %v292
      %v1307 = vunpack.c.l.b16 %v293
      %v1308 = vunpack.c.l.b16 %v294
      %v1309 = vunpack.c.l.b16 %v295
      %v1310 = vunpack.c.l.b16 %v296
      %v1311 = vunpack.c.l.b16 %v297
      %v1312 = vunpack.c.l.b16 %v298
      %v1313 = vunpack.c.l.b16 %v299
      %v1314 = vunpack.c.l.b16 %v300
      %v1315 = vunpack.c.l.b16 %v301
      %v1316 = vunpack.c.l.b16 %v302
      %v1317 = vunpack.c.l.b16 %v303
      %v1318 = vunpack.c.l.b16 %v304
      %v1319 = vunpack.c.l.b16 %v305
      %v1320 = vunpack.c.l.b16 %v306
      %v1321 = vunpack.c.l.b16 %v307
      %v1322 = vunpack.c.l.b16 %v308
      %v1323 = vunpack.c.l.b16 %v309
      %v1324 = vunpack.c.l.b16 %v310
      %v1325 = vunpack.c.l.b16 %v311
      %v1326 = vunpack.c.l.b16 %v312
      %v1327 = vunpack.c.l.b16 %v313
      %v1328 = vunpack.c.l.b16 %v314
      %v1329 = vunpack.c.l.b16 %v315
      %v1330 = vunpack.c.l.b16 %v316
      %v1331 = vunpack.c.l.b16 %v317
      %v1332 = vunpack.c.l.b16 %v318
      %v1333 = vunpack.c.l.b16 %v319
      %v1334 = vunpack.c.l.b16 %v320
      %v1335 = vunpack.c.l.b16 %v321
      %v1336 = vunpack.c.l.b16 %v322
      %v1337 = vunpack.c.l.b16 %v323
      %v1338 = vunpack.c.l.b16 %v324
      %v1339 = vunpack.c.l.b16 %v325
      %v1340 = vunpack.c.l.b16 %v326
      %v1341 = vunpack.c.l.b16 %v327
      %v1342 = vunpack.c.l.b16 %v328
      %v1343 = vunpack.c.l.b16 %v329
      %v1344 = vunpack.c.l.b16 %v330
      %v1345 = vunpack.c.l.b16 %v331
      %v1346 = vunpack.c.l.b16 %v332
      %v1347 = vunpack.c.l.b16 %v333
      %v1348 = vunpack.c.l.b16 %v334
      %v1349 = vunpack.c.l.b16 %v335
      %v1350 = vunpack.c.l.b16 %v336
      %v1351 = vunpack.c.l.b16 %v337
      %v1352 = vunpack.c.l.b16 %v338
      %v1353 = vunpack.c.l.b16 %v339
      %v1354 = vunpack.c.l.b16 %v340
      %v1355 = vunpack.c.l.b16 %v341
      %v1356 = vunpack.c.l.b16 %v342
      %v1357 = vunpack.c.l.b16 %v343
      %v1358 = vunpack.c.l.b16 %v344
      %v1359 = vunpack.c.l.b16 %v345
      %v1360 = vunpack.c.l.b16 %v346
      %v1361 = vunpack.c.l.b16 %v347
      %v1362 = vunpack.c.l.b16 %v348
      %v1363 = vunpack.c.l.b16 %v349
      %v1364 = vunpack.c.l.b16 %v350
      %v1365 = vunpack.c.l.b16 %v351
      %v1366 = vunpack.c.l.b16 %v352
      %v1367 = vunpack.c.l.b16 %v353
      %v1368 = vunpack.c.l.b16 %v354
      %v1369 = vunpack.c.l.b16 %v355
      %v1370 = vunpack.c.l.b16 %v356
      %v1371 = vunpack.c.l.b16 %v357
      %v1372 = vunpack.c.l.b16 %v358
      %v1373 = vunpack.c.l.b16 %v359
      %v1374 = vunpack.c.l.b16 %v360
      %v1375 = vunpack.c.l.b16 %v361
      %v1376 = vunpack.c.l.b16 %v362
      %v1377 = vunpack.c.l.b16 %v363
      %v1378 = vunpack.c.l.b16 %v364
      %v1379 = vunpack.c.l.b16 %v365
      %v1380 = vunpack.c.l.b16 %v366
      %v1381 = vunpack.c.l.b16 %v367
      %v1382 = vunpack.c.l.b16 %v368
      %v1383 = vunpack.c.l.b16 %v369
      %v1384 = vunpack.c.l.b16 %v370
      %v1385 = vunpack.c.l.b16 %v371
      %v1386 = vunpack.c.l.b16 %v372
      %v1387 = vunpack.c.l.b16 %v373
      %v1388 = vunpack.c.l.b16 %v374
      %v1389 = vunpack.c.l.b16 %v375
      %v1390 = vunpack.c.l.b16 %v376
      %v1391 = vunpack.c.l.b16 %v377
      %v1392 = vunpack.c.l.b16 %v378
      %v1393 = vunpack.c.l.b16 %v379
      %v1394 = vunpack.c.l.b16 %v380
      %v1395 = vunpack.c.l.b16 %v381
      %v1396 = vunpack.c.l.b16 %v382
      %v1397 = vunpack.c.l.b16 %v383
      %v1398 = vunpack.c.l.b16 %v384
      %v1399 = vunpack.c.l.b16 %v385
      %v1400 = vunpack.c.l.b16 %v386
      %v1401 = vunpack.c.l.b16 %v387
      %v1402 = vunpack.c.l.b16 %v388
      %v1403 = vunpack.c.l.b16 %v389
      %v1404 = vunpack.c.l.b16 %v390
      %v1405 = vunpack.c.l.b16 %v391
      %v1406 = vunpack.c.l.b16 %v392
      %v1407 = vunpack.c.l.b16 %v393
      %v1408 = vunpack.c.l.b16 %v394
      %v1409 = vunpack.c.l.b16 %v395
      %v1410 = vunpack.c.l.b16 %v396
      %v1411 = vunpack.c.l.b16 %v397
      %v1412 = vunpack.c.l.b16 %v398
      %v1413 = vunpack.c.l.b16 %v399
      %v1414 = vunpack.c.l.b16 %v400
      %v1415 = vunpack.c.l.b16 %v401
      %v1416 = vunpack.c.l.b16 %v402
      %v1417 = vunpack.c.l.b16 %v403
      %v1418 = vunpack.c.l.b16 %v404
      %v1419 = vunpack.c.l.b16 %v405
      %v1420 = vunpack.c.l.b16 %v406
      %v1421 = vunpack.c.l.b16 %v407
      %v1422 = vunpack.c.l.b16 %v408
      %v1423 = vunpack.c.l.b16 %v409
      %v1424 = vunpack.c.l.b16 %v410
      %v1425 = vunpack.c.l.b16 %v411
      %v1426 = vunpack.c.l.b16 %v412
      %v1427 = vunpack.c.l.b16 %v413
      %v1428 = vunpack.c.l.b16 %v414
      %v1429 = vunpack.c.l.b16 %v415
      %v1430 = vunpack.c.l.b16 %v416
      %v1431 = vunpack.c.l.b16 %v417
      %v1432 = vunpack.c.l.b16 %v418
      %v1433 = vunpack.c.l.b16 %v419
      %v1434 = vunpack.c.l.b16 %v420
      %v1435 = vunpack.c.l.b16 %v421
      %v1436 = vunpack.c.l.b16 %v422
      %v1437 = vunpack.c.l.b16 %v423
      %v1438 = vunpack.c.l.b16 %v424
      %v1439 = vunpack.c.l.b16 %v425
      %v1440 = vunpack.c.l.b16 %v426
      %v1441 = vunpack.c.l.b16 %v427
      %v1442 = vunpack.c.l.b16 %v428
      %v1443 = vunpack.c.l.b16 %v429
      %v1444 = vunpack.c.l.b16 %v430
      %v1445 = vunpack.c.l.b16 %v431
      %v1446 = vunpack.c.l.b16 %v432
      %v1447 = vunpack.c.l.b16 %v433
      %v1448 = vunpack.c.l.b16 %v434
      %v1449 = vunpack.c.l.b16 %v435
      %v1450 = vunpack.c.l.b16 %v436
      %v1451 = vunpack.c.l.b16 %v437
      %v1452 = vunpack.c.l.b16 %v438
      %v1453 = vunpack.c.l.b16 %v439
      %v1454 = vunpack.c.l.b16 %v440
      %v1455 = vunpack.c.l.b16 %v441
      %v1456 = vunpack.c.l.b16 %v442
      %v1457 = vunpack.c.l.b16 %v443
      %v1458 = vunpack.c.l.b16 %v444
      %v1459 = vunpack.c.l.b16 %v445
      %v1460 = vunpack.c.l.b16 %v446
      %v1461 = vunpack.c.l.b16 %v447
      %v1462 = vunpack.c.l.b16 %v448
      %v1463 = vunpack.c.l.b16 %v449
      %v1464 = vunpack.c.l.b16 %v450
      %v1465 = vunpack.c.l.b16 %v451
      %v1466 = vunpack.c.l.b16 %v452
      %v1467 = vunpack.c.l.b16 %v453
      %v1468 = vunpack.c.l.b16 %v454
      %v1469 = vunpack.c.l.b16 %v455
      %v1470 = vunpack.c.l.b16 %v456
      %v1471 = vunpack.c.l.b16 %v457
      %v1472 = vunpack.c.l.b16 %v458
      %v1473 = vunpack.c.l.b16 %v459
      %v1474 = vunpack.c.l.b16 %v460
      %v1475 = vunpack.c.l.b16 %v461
      %v1476 = vunpack.c.l.b16 %v462
      %v1477 = vunpack.c.l.b16 %v463
      %v1478 = vunpack.c.l.b16 %v464
      %v1479 = vunpack.c.l.b16 %v465
      %v1480 = vunpack.c.l.b16 %v466
      %v1481 = vunpack.c.l.b16 %v467
      %v1482 = vunpack.c.l.b16 %v468
      %v1483 = vunpack.c.l.b16 %v469
      %v1484 = vunpack.c.l.b16 %v470
      %v1485 = vunpack.c.l.b16 %v471
      %v1486 = vunpack.c.l.b16 %v472
      %v1487 = vunpack.c.l.b16 %v473
      %v1488 = vunpack.c.l.b16 %v474
      %v1489 = vunpack.c.l.b16 %v475
      %v1490 = vunpack.c.l.b16 %v476
      %v1491 = vunpack.c.l.b16 %v477
      %v1492 = vunpack.c.l.b16 %v478
      %v1493 = vunpack.c.l.b16 %v479
      %v1494 = vunpack.c.l.b16 %v480
      %v1495 = vunpack.c.l.b16 %v481
      %v1496 = vunpack.c.l.b16 %v482
      %v1497 = vunpack.c.l.b16 %v483
      %v1498 = vunpack.c.l.b16 %v484
      %v1499 = vunpack.c.l.b16 %v485
      %v1500 = vunpack.c.l.b16 %v486
      %v1501 = vunpack.c.l.b16 %v487
      %v1502 = vunpack.c.l.b16 %v488
      %v1503 = vunpack.c.l.b16 %v489
      %v1504 = vunpack.c.l.b16 %v490
      %v1505 = vunpack.c.l.b16 %v491
      %v1506 = vunpack.c.l.b16 %v492
      %v1507 = vunpack.c.l.b16 %v493
      %v1508 = vunpack.c.l.b16 %v494
      %v1509 = vunpack.c.l.b16 %v495
      %v1510 = vunpack.c.l.b16 %v496
      %v1511 = vunpack.c.l.b16 %v497
      %v1512 = vunpack.c.l.b16 %v498
      %v1513 = vunpack.c.l.b16 %v499
      %v1514 = vunpack.c.l.b16 %v500
      %v1515 = vunpack.c.l.b16 %v501
      %v1516 = vunpack.c.l.b16 %v502
      %v1517 = vunpack.c.l.b16 %v503
      %v1518 = vunpack.c.l.b16 %v504
      %v1519 = vunpack.c.l.b16 %v505
      %v1520 = vunpack.c.l.b16 %v506
      %v1521 = vunpack.c.l.b16 %v507
      %v1522 = vunpack.c.l.b16 %v508
      %v1523 = vunpack.c.l.b16 %v509
      %v1524 = vunpack.c.l.b16 %v510
      %v1525 = vunpack.c.l.b16 %v511
      %v1526 = vunpack.c.l.b16 %v512
      %v1527 = vunpack.c.l.b16 %v513
      %v1528 = vunpack.c.l.b16 %v514
      %v1529 = vunpack.c.l.b16 %v515
      %v1530 = vunpack.c.l.b16 %v516
      %v1531 = vunpack.c.l.b16 %v517
      %v1532 = vunpack.c.l.b16 %v518
      %v1533 = vunpack.c.l.b16 %v519
      %v1534 = vunpack.c.l.b16 %v520
      %v1535 = vunpack.c.l.b16 %v521
      %v1536 = vunpack.c.l.b16 %v522
      %v1537 = vunpack.c.l.b16 %v523
      %v1538 = vunpack.c.l.b16 %v524
      %v1539 = vunpack.c.l.b16 %v525
      %v1540 = vunpack.c.l.b16 %v526
      %v1541 = vunpack.c.l.b16 %v527
      %v1542 = vunpack.c.l.b16 %v528
      %v1543 = vunpack.c.l.b16 %v529
      %v1544 = vunpack.c.l.b16 %v530
      %v1545 = vunpack.c.l.b16 %v531
      %v1546 = vunpack.c.l.b16 %v532
      %v1547 = vunpack.c.l.b16 %v533
      %v1548 = vunpack.c.l.b16 %v534
      %v1549 = vunpack.c.l.b16 %v535
      %v1550 = vunpack.c.l.b16 %v536
      %v1551 = vunpack.c.l.b16 %v537
      %v1552 = vunpack.c.l.b16 %v538
      %v1553 = vunpack.c.l.b16 %v539
      %v1554 = vunpack.c.l.b16 %v540
      %v1555 = vunpack.c.l.b16 %v541
      %v1556 = vunpack.c.l.b16 %v542
      %v1557 = vunpack.c.l.b16 %v543
      %v1558 = vunpack.c.l.b16 %v544
      %v1559 = vunpack.c.l.b16 %v545
      %v1560 = vunpack.c.l.b16 %v546
      %v1561 = vunpack.c.l.b16 %v547
      %v1562 = vunpack.c.l.b16 %v548
      %v1563 = vunpack.c.l.b16 %v549
      %v1564 = vunpack.c.l.b16 %v550
      %v1565 = vunpack.c.l.b16 %v551
      %v1566 = vunpack.c.l.b16 %v552
      %v1567 = vunpack.c.l.b16 %v553
      %v1568 = vunpack.c.l.b16 %v554
      %v1569 = vunpack.c.l.b16 %v555
      %v1570 = vunpack.c.l.b16 %v556
      %v1571 = vunpack.c.l.b16 %v557
      %v1572 = vunpack.c.l.b16 %v558
      %v1573 = vunpack.c.l.b16 %v559
      %v1574 = vunpack.c.l.b16 %v560
      %v1575 = vunpack.c.l.b16 %v561
      %v1576 = vunpack.c.l.b16 %v562
      %v1577 = vunpack.c.l.b16 %v563
      %v1578 = vunpack.c.l.b16 %v564
      %v1579 = vunpack.c.l.b16 %v565
      %v1580 = vunpack.c.l.b16 %v566
      %v1581 = vunpack.c.l.b16 %v567
      %v1582 = vunpack.c.l.b16 %v568
      %v1583 = vunpack.c.l.b16 %v569
      %v1584 = vunpack.c.l.b16 %v570
      %v1585 = vunpack.c.l.b16 %v571
      %v1586 = vunpack.c.l.b16 %v572
      %v1587 = vunpack.c.l.b16 %v573
      %v1588 = vunpack.c.l.b16 %v574
      %v1589 = vunpack.c.l.b16 %v575
      %v1590 = vunpack.c.l.b16 %v576
      %v1591 = vunpack.c.l.b16 %v577
      %v1592 = vunpack.c.l.b16 %v578
      %v1593 = vunpack.c.l.b16 %v579
      %v1594 = vunpack.c.l.b16 %v580
      %v1595 = vunpack.c.l.b16 %v581
      %v1596 = vunpack.c.l.b16 %v582
      %v1597 = vunpack.c.l.b16 %v583
      %v1598 = vunpack.c.l.b16 %v584
      %v1599 = vunpack.c.l.b16 %v585
      %v1600 = vunpack.c.l.b16 %v586
      %v1601 = vunpack.c.l.b16 %v587
      %v1602 = vunpack.c.l.b16 %v588
      %v1603 = vunpack.c.l.b16 %v589
      %v1604 = vunpack.c.l.b16 %v590
      %v1605 = vunpack.c.l.b16 %v591
      %v1606 = vunpack.c.l.b16 %v592
      %v1607 = vunpack.c.l.b16 %v593
      %v1608 = vunpack.c.l.b16 %v594
      %v1609 = vunpack.c.l.b16 %v595
      %v1610 = vunpack.c.l.b16 %v596
      %v1611 = vunpack.c.l.b16 %v597
      %v1612 = vunpack.c.l.b16 %v598
      %v1613 = vunpack.c.l.b16 %v599
      %v1614 = vunpack.c.l.b16 %v600
      %v1615 = vunpack.c.l.b16 %v601
      %v1616 = vunpack.c.l.b16 %v602
      %v1617 = vunpack.c.l.b16 %v603
      %v1618 = vunpack.c.l.b16 %v604
      %v1619 = vunpack.c.l.b16 %v605
      %v1620 = vunpack.c.l.b16 %v606
      %v1621 = vunpack.c.l.b16 %v607
      %v1622 = vunpack.c.l.b16 %v608
      %v1623 = vunpack.c.l.b16 %v609
      %v1624 = vunpack.c.l.b16 %v610
      %v1625 = vunpack.c.l.b16 %v611
      %v1626 = vunpack.c.l.b16 %v612
      %v1627 = vunpack.c.l.b16 %v613
      %v1628 = vunpack.c.l.b16 %v614
      %v1629 = vunpack.c.l.b16 %v615
      %v1630 = vunpack.c.l.b16 %v616
      %v1631 = vunpack.c.l.b16 %v617
      %v1632 = vunpack.c.l.b16 %v618
      %v1633 = vunpack.c.l.b16 %v619
      %v1634 = vunpack.c.l.b16 %v620
      %v1635 = vunpack.c.l.b16 %v621
      %v1636 = vunpack.c.l.b16 %v622
      %v1637 = vunpack.c.l.b16 %v623
      %v1638 = vunpack.c.l.b16 %v624
      %v1639 = vunpack.c.l.b16 %v625
      %v1640 = vunpack.c.l.b16 %v626
      %v1641 = vunpack.c.l.b16 %v627
      %v1642 = vunpack.c.l.b16 %v628
      %v1643 = vunpack.c.l.b16 %v629
      %v1644 = vunpack.c.l.b16 %v630
      %v1645 = vunpack.c.l.b16 %v631
      %v1646 = vunpack.c.l.b16 %v632
      %v1647 = vunpack.c.l.b16 %v633
      %v1648 = vunpack.c.l.b16 %v634
      %v1649 = vunpack.c.l.b16 %v635
      %v1650 = vpack.c.b16 %v1251, %v1250
      %v1651 = vpack.c.b16 %v1253, %v1252
      %v1652 = vpack.c.b16 %v1255, %v1254
      %v1653 = vpack.c.b16 %v1257, %v1256
      %v1654 = vpack.c.b16 %v1259, %v1258
      %v1655 = vpack.c.b16 %v1261, %v1260
      %v1656 = vpack.c.b16 %v1263, %v1262
      %v1657 = vpack.c.b16 %v1265, %v1264
      %v1658 = vpack.c.b16 %v1267, %v1266
      %v1659 = vpack.c.b16 %v1269, %v1268
      %v1660 = vpack.c.b16 %v1271, %v1270
      %v1661 = vpack.c.b16 %v1273, %v1272
      %v1662 = vpack.c.b16 %v1275, %v1274
      %v1663 = vpack.c.b16 %v1277, %v1276
      %v1664 = vpack.c.b16 %v1279, %v1278
      %v1665 = vpack.c.b16 %v1281, %v1280
      %v1666 = vpack.c.b16 %v1283, %v1282
      %v1667 = vpack.c.b16 %v1285, %v1284
      %v1668 = vpack.c.b16 %v1287, %v1286
      %v1669 = vpack.c.b16 %v1289, %v1288
      %v1670 = vpack.c.b16 %v1291, %v1290
      %v1671 = vpack.c.b16 %v1293, %v1292
      %v1672 = vpack.c.b16 %v1295, %v1294
      %v1673 = vpack.c.b16 %v1297, %v1296
      %v1674 = vpack.c.b16 %v1299, %v1298
      %v1675 = vpack.c.b16 %v1301, %v1300
      %v1676 = vpack.c.b16 %v1303, %v1302
      %v1677 = vpack.c.b16 %v1305, %v1304
      %v1678 = vpack.c.b16 %v1307, %v1306
      %v1679 = vpack.c.b16 %v1309, %v1308
      %v1680 = vpack.c.b16 %v1311, %v1310
      %v1681 = vpack.c.b16 %v1313, %v1312
      %v1682 = vpack.c.b16 %v1315, %v1314
      %v1683 = vpack.c.b16 %v1317, %v1316
      %v1684 = vpack.c.b16 %v1319, %v1318
      %v1685 = vpack.c.b16 %v1321, %v1320
      %v1686 = vpack.c.b16 %v1323, %v1322
      %v1687 = vpack.c.b16 %v1325, %v1324
      %v1688 = vpack.c.b16 %v1327, %v1326
      %v1689 = vpack.c.b16 %v1329, %v1328
      %v1690 = vpack.c.b16 %v1331, %v1330
      %v1691 = vpack.c.b16 %v1333, %v1332
      %v1692 = vpack.c.b16 %v1335, %v1334
      %v1693 = vpack.c.b16 %v1337, %v1336
      %v1694 = vpack.c.b16 %v1339, %v1338
      %v1695 = vpack.c.b16 %v1341, %v1340
      %v1696 = vpack.c.b16 %v1343, %v1342
      %v1697 = vpack.c.b16 %v1345, %v1344
      %v1698 = vpack.c.b16 %v1347, %v1346
      %v1699 = vpack.c.b16 %v1349, %v1348
      %v1700 = vpack.c.b16 %v1351, %v1350
      %v1701 = vpack.c.b16 %v1353, %v1352
      %v1702 = vpack.c.b16 %v1355, %v1354
      %v1703 = vpack.c.b16 %v1357, %v1356
      %v1704 = vpack.c.b16 %v1359, %v1358
      %v1705 = vpack.c.b16 %v1361, %v1360
      %v1706 = vpack.c.b16 %v1363, %v1362
      %v1707 = vpack.c.b16 %v1365, %v1364
      %v1708 = vpack.c.b16 %v1367, %v1366
      %v1709 = vpack.c.b16 %v1369, %v1368
      %v1710 = vpack.c.b16 %v1371, %v1370
      %v1711 = vpack.c.b16 %v1373, %v1372
      %v1712 = vpack.c.b16 %v1375, %v1374
      %v1713 = vpack.c.b16 %v1377, %v1376
      %v1714 = vpack.c.b16 %v1379, %v1378
      %v1715 = vpack.c.b16 %v1381, %v1380
      %v1716 = vpack.c.b16 %v1383, %v1382
      %v1717 = vpack.c.b16 %v1385, %v1384
      %v1718 = vpack.c.b16 %v1387, %v1386
      %v1719 = vpack.c.b16 %v1389, %v1388
      %v1720 = vpack.c.b16 %v1391, %v1390
      %v1721 = vpack.c.b16 %v1393, %v1392
      %v1722 = vpack.c.b16 %v1395, %v1394
      %v1723 = vpack.c.b16 %v1397, %v1396
      %v1724 = vpack.c.b16 %v1399, %v1398
      %v1725 = vpack.c.b16 %v1401, %v1400
      %v1726 = vpack.c.b16 %v1403, %v1402
      %v1727 = vpack.c.b16 %v1405, %v1404
      %v1728 = vpack.c.b16 %v1407, %v1406
      %v1729 = vpack.c.b16 %v1409, %v1408
      %v1730 = vpack.c.b16 %v1411, %v1410
      %v1731 = vpack.c.b16 %v1413, %v1412
      %v1732 = vpack.c.b16 %v1415, %v1414
      %v1733 = vpack.c.b16 %v1417, %v1416
      %v1734 = vpack.c.b16 %v1419, %v1418
      %v1735 = vpack.c.b16 %v1421, %v1420
      %v1736 = vpack.c.b16 %v1423, %v1422
      %v1737 = vpack.c.b16 %v1425, %v1424
      %v1738 = vpack.c.b16 %v1427, %v1426
      %v1739 = vpack.c.b16 %v1429, %v1428
      %v1740 = vpack.c.b16 %v1431, %v1430
      %v1741 = vpack.c.b16 %v1433, %v1432
      %v1742 = vpack.c.b16 %v1435, %v1434
      %v1743 = vpack.c.b16 %v1437, %v1436
      %v1744 = vpack.c.b16 %v1439, %v1438
      %v1745 = vpack.c.b16 %v1441, %v1440
      %v1746 = vpack.c.b16 %v1443, %v1442
      %v1747 = vpack.c.b16 %v1445, %v1444
      %v1748 = vpack.c.b16 %v1447, %v1446
      %v1749 = vpack.c.b16 %v1449, %v1448
      %v1750 = vpack.c.b16 %v1451, %v1450
      %v1751 = vpack.c.b16 %v1453, %v1452
      %v1752 = vpack.c.b16 %v1455, %v1454
      %v1753 = vpack.c.b16 %v1457, %v1456
      %v1754 = vpack.c.b16 %v1459, %v1458
      %v1755 = vpack.c.b16 %v1461, %v1460
      %v1756 = vpack.c.b16 %v1463, %v1462
      %v1757 = vpack.c.b16 %v1465, %v1464
      %v1758 = vpack.c.b16 %v1467, %v1466
      %v1759 = vpack.c.b16 %v1469, %v1468
      %v1760 = vpack.c.b16 %v1471, %v1470
      %v1761 = vpack.c.b16 %v1473, %v1472
      %v1762 = vpack.c.b16 %v1475, %v1474
      %v1763 = vpack.c.b16 %v1477, %v1476
      %v1764 = vpack.c.b16 %v1479, %v1478
      %v1765 = vpack.c.b16 %v1481, %v1480
      %v1766 = vpack.c.b16 %v1483, %v1482
      %v1767 = vpack.c.b16 %v1485, %v1484
      %v1768 = vpack.c.b16 %v1487, %v1486
      %v1769 = vpack.c.b16 %v1489, %v1488
      %v1770 = vpack.c.b16 %v1491, %v1490
      %v1771 = vpack.c.b16 %v1493, %v1492
      %v1772 = vpack.c.b16 %v1495, %v1494
      %v1773 = vpack.c.b16 %v1497, %v1496
      %v1774 = vpack.c.b16 %v1499, %v1498
      %v1775 = vpack.c.b16 %v1501, %v1500
      %v1776 = vpack.c.b16 %v1503, %v1502
      %v1777 = vpack.c.b16 %v1505, %v1504
      %v1778 = vpack.c.b16 %v1507, %v1506
      %v1779 = vpack.c.b16 %v1509, %v1508
      %v1780 = vpack.c.b16 %v1511, %v1510
      %v1781 = vpack.c.b16 %v1513, %v1512
      %v1782 = vpack.c.b16 %v1515, %v1514
      %v1783 = vpack.c.b16 %v1517, %v1516
      %v1784 = vpack.c.b16 %v1519, %v1518
      %v1785 = vpack.c.b16 %v1521, %v1520
      %v1786 = vpack.c.b16 %v1523, %v1522
      %v1787 = vpack.c.b16 %v1525, %v1524
      %v1788 = vpack.c.b16 %v1527, %v1526
      %v1789 = vpack.c.b16 %v1529, %v1528
      %v1790 = vpack.c.b16 %v1531, %v1530
      %v1791 = vpack.c.b16 %v1533, %v1532
      %v1792 = vpack.c.b16 %v1535, %v1534
      %v1793 = vpack.c.b16 %v1537, %v1536
      %v1794 = vpack.c.b16 %v1539, %v1538
      %v1795 = vpack.c.b16 %v1541, %v1540
      %v1796 = vpack.c.b16 %v1543, %v1542
      %v1797 = vpack.c.b16 %v1545, %v1544
      %v1798 = vpack.c.b16 %v1547, %v1546
      %v1799 = vpack.c.b16 %v1549, %v1548
      %v1800 = vpack.c.b16 %v1551, %v1550
      %v1801 = vpack.c.b16 %v1553, %v1552
      %v1802 = vpack.c.b16 %v1555, %v1554
      %v1803 = vpack.c.b16 %v1557, %v1556
      %v1804 = vpack.c.b16 %v1559, %v1558
      %v1805 = vpack.c.b16 %v1561, %v1560
      %v1806 = vpack.c.b16 %v1563, %v1562
      %v1807 = vpack.c.b16 %v1565, %v1564
      %v1808 = vpack.c.b16 %v1567, %v1566
      %v1809 = vpack.c.b16 %v1569, %v1568
      %v1810 = vpack.c.b16 %v1571, %v1570
      %v1811 = vpack.c.b16 %v1573, %v1572
      %v1812 = vpack.c.b16 %v1575, %v1574
      %v1813 = vpack.c.b16 %v1577, %v1576
      %v1814 = vpack.c.b16 %v1579, %v1578
      %v1815 = vpack.c.b16 %v1581, %v1580
      %v1816 = vpack.c.b16 %v1583, %v1582
      %v1817 = vpack.c.b16 %v1585, %v1584
      %v1818 = vpack.c.b16 %v1587, %v1586
      %v1819 = vpack.c.b16 %v1589, %v1588
      %v1820 = vpack.c.b16 %v1591, %v1590
      %v1821 = vpack.c.b16 %v1593, %v1592
      %v1822 = vpack.c.b16 %v1595, %v1594
      %v1823 = vpack.c.b16 %v1597, %v1596
      %v1824 = vpack.c.b16 %v1599, %v1598
      %v1825 = vpack.c.b16 %v1601, %v1600
      %v1826 = vpack.c.b16 %v1603, %v1602
      %v1827 = vpack.c.b16 %v1605, %v1604
      %v1828 = vpack.c.b16 %v1607, %v1606
      %v1829 = vpack.c.b16 %v1609, %v1608
      %v1830 = vpack.c.b16 %v1611, %v1610
      %v1831 = vpack.c.b16 %v1613, %v1612
      %v1832 = vpack.c.b16 %v1615, %v1614
      %v1833 = vpack.c.b16 %v1617, %v1616
      %v1834 = vpack.c.b16 %v1619, %v1618
      %v1835 = vpack.c.b16 %v1621, %v1620
      %v1836 = vpack.c.b16 %v1623, %v1622
      %v1837 = vpack.c.b16 %v1625, %v1624
      %v1838 = vpack.c.b16 %v1627, %v1626
      %v1839 = vpack.c.b16 %v1629, %v1628
      %v1840 = vpack.c.b16 %v1631, %v1630
      %v1841 = vpack.c.b16 %v1633, %v1632
      %v1842 = vpack.c.b16 %v1635, %v1634
      %v1843 = vpack.c.b16 %v1637, %v1636
      %v1844 = vpack.c.b16 %v1639, %v1638
      %v1845 = vpack.c.b16 %v1641, %v1640
      %v1846 = vpack.c.b16 %v1643, %v1642
      %v1847 = vpack.c.b16 %v1645, %v1644
      %v1848 = vpack.c.b16 %v1647, %v1646
      %v1849 = vpack.c.b16 %v1649, %v1648
      %2050 = vmatprep.subr.bf16.mxu0 0
      %2051 = vmatpush1.bf16.msra.mxu0 %v1650
      %2052 = vmatprep.subr.bf16.mxu0 0
      %2053 = vmatpush1.bf16.msra.mxu0 %v1651
      %2054 = vmatprep.subr.bf16.mxu0 0
      %2055 = vmatpush1.bf16.msra.mxu0 %v1652
      %2056 = vmatprep.subr.bf16.mxu0 0
      %2057 = vmatpush1.bf16.msra.mxu0 %v1653
      %2058 = vmatprep.subr.bf16.mxu0 0
      %2059 = vmatpush1.bf16.msra.mxu0 %v1654
      %2060 = vmatprep.subr.bf16.mxu0 0
      %2061 = vmatpush1.bf16.msra.mxu0 %v1655
      %2062 = vmatprep.subr.bf16.mxu0 0
      %2063 = vmatpush1.bf16.msra.mxu0 %v1656
      %2064 = vmatprep.subr.bf16.mxu0 0
      %2065 = vmatpush1.bf16.msra.mxu0 %v1657
      %2066 = vmatprep.subr.bf16.mxu0 0
      %2067 = vmatpush1.bf16.msra.mxu0 %v1658
      %2068 = vmatprep.subr.bf16.mxu0 0
      %2069 = vmatpush1.bf16.msra.mxu0 %v1659
      %2070 = vmatprep.subr.bf16.mxu0 0
      %2071 = vmatpush1.bf16.msra.mxu0 %v1660
      %2072 = vmatprep.subr.bf16.mxu0 0
      %2073 = vmatpush1.bf16.msra.mxu0 %v1661
      %2074 = vmatprep.subr.bf16.mxu0 0
      %2075 = vmatpush1.bf16.msra.mxu0 %v1662
      %2076 = vmatprep.subr.bf16.mxu0 0
      %2077 = vmatpush1.bf16.msra.mxu0 %v1663
      %2078 = vmatprep.subr.bf16.mxu0 0
      %2079 = vmatpush1.bf16.msra.mxu0 %v1664
      %2080 = vmatprep.subr.bf16.mxu0 0
      %2081 = vmatpush1.bf16.msra.mxu0 %v1665
      %2082 = vmatprep.mubr.bf16.mxu0 %v751
      %2083 = vmatmul.mubr.bf16.gmra.mrb[0].mxu0 %v750
      %v2084 = vpop.f32.mrb[0].mxu0
      %v2085 = vadd.f32 0.0, %v2084
      %v2086 = vpop.f32.mrb[0].mxu0
      %v2087 = vpop.f32.mrb[0].mxu0
      %v2088 = vadd.f32 0.0, %v2087
      %v2089 = vpop.f32.mrb[0].mxu0
      %2090 = vmatprep.mubr.bf16.mxu0 %v776
      %2091 = vmatmul.mubr.bf16.gmra.mrb[0].mxu0 %v775
      %v2092 = vpop.f32.mrb[0].mxu0
      %v2093 = vadd.f32 0.0, %v2092
      %v2094 = vpop.f32.mrb[0].mxu0
      %v2095 = vpop.f32.mrb[0].mxu0
      %v2096 = vpop.f32.mrb[0].mxu0
      %2097 = vdwg.mxu0
      %2098 = vmatprep.subr.bf16.mxu0 0
      %2099 = vmatpush1.bf16.msra.mxu0 %v1666
      %2100 = vmatprep.subr.bf16.mxu0 0
      %2101 = vmatpush1.bf16.msra.mxu0 %v1667
      %2102 = vmatprep.subr.bf16.mxu0 0
      %2103 = vmatpush1.bf16.msra.mxu0 %v1668
      %2104 = vmatprep.subr.bf16.mxu0 0
      %2105 = vmatpush1.bf16.msra.mxu0 %v1669
      %2106 = vmatprep.subr.bf16.mxu0 0
      %2107 = vmatpush1.bf16.msra.mxu0 %v1670
      %2108 = vmatprep.subr.bf16.mxu0 0
      %2109 = vmatpush1.bf16.msra.mxu0 %v1671
      %2110 = vmatprep.subr.bf16.mxu0 0
      %2111 = vmatpush1.bf16.msra.mxu0 %v1672
      %2112 = vmatprep.subr.bf16.mxu0 0
      %2113 = vmatpush1.bf16.msra.mxu0 %v1673
      %2114 = vmatprep.subr.bf16.mxu0 0
      %2115 = vmatpush1.bf16.msra.mxu0 %v1674
      %2116 = vmatprep.subr.bf16.mxu0 0
      %2117 = vmatpush1.bf16.msra.mxu0 %v1675
      %2118 = vmatprep.subr.bf16.mxu0 0
      %2119 = vmatpush1.bf16.msra.mxu0 %v1676
      %2120 = vmatprep.subr.bf16.mxu0 0
      %2121 = vmatpush1.bf16.msra.mxu0 %v1677
      %2122 = vmatprep.subr.bf16.mxu0 0
      %2123 = vmatpush1.bf16.msra.mxu0 %v1678
      %2124 = vmatprep.subr.bf16.mxu0 0
      %2125 = vmatpush1.bf16.msra.mxu0 %v1679
      %2126 = vmatprep.subr.bf16.mxu0 0
      %2127 = vmatpush1.bf16.msra.mxu0 %v1680
      %2128 = vmatprep.subr.bf16.mxu0 0
      %2129 = vmatpush1.bf16.msra.mxu0 %v1681
      %2130 = vmatprep.mubr.bf16.mxu0 %v753
      %2131 = vmatmul.mubr.bf16.gmra.mrb[0].mxu0 %v752
      %v2132 = vpop.f32.mrb[0].mxu0
      %v2133 = vadd.f32 %v2085, %v2132
      %v2134 = vpop.f32.mrb[0].mxu0
      %v2135 = vpop.f32.mrb[0].mxu0
      %v2136 = vadd.f32 %v2088, %v2135
      %v2137 = vpop.f32.mrb[0].mxu0
      %2138 = vmatprep.mubr.bf16.mxu0 %v778
      %2139 = vmatmul.mubr.bf16.gmra.mrb[0].mxu0 %v777
      %v2140 = vpop.f32.mrb[0].mxu0
      %v2141 = vadd.f32 %v2093, %v2140
      %v2142 = vpop.f32.mrb[0].mxu0
      %v2143 = vpop.f32.mrb[0].mxu0
      %v2144 = vpop.f32.mrb[0].mxu0
      %2145 = vdwg.mxu0
      %2146 = vmatprep.subr.bf16.mxu0 0
      %2147 = vmatpush1.bf16.msra.mxu0 %v1682
      %2148 = vmatprep.subr.bf16.mxu0 0
      %2149 = vmatpush1.bf16.msra.mxu0 %v1683
      %2150 = vmatprep.subr.bf16.mxu0 0
      %2151 = vmatpush1.bf16.msra.mxu0 %v1684
      %2152 = vmatprep.subr.bf16.mxu0 0
      %2153 = vmatpush1.bf16.msra.mxu0 %v1685
      %2154 = vmatprep.subr.bf16.mxu0 0
      %2155 = vmatpush1.bf16.msra.mxu0 %v1686
      %2156 = vmatprep.subr.bf16.mxu0 0
      %2157 = vmatpush1.bf16.msra.mxu0 %v1687
      %2158 = vmatprep.subr.bf16.mxu0 0
      %2159 = vmatpush1.bf16.msra.mxu0 %v1688
      %2160 = vmatprep.subr.bf16.mxu0 0
      %2161 = vmatpush1.bf16.msra.mxu0 %v1689
      %2162 = vmatprep.subr.bf16.mxu0 0
      %2163 = vmatpush1.bf16.msra.mxu0 %v1690
      %2164 = vmatprep.subr.bf16.mxu0 0
      %2165 = vmatpush1.bf16.msra.mxu0 %v1691
      %2166 = vmatprep.subr.bf16.mxu0 0
      %2167 = vmatpush1.bf16.msra.mxu0 %v1692
      %2168 = vmatprep.subr.bf16.mxu0 0
      %2169 = vmatpush1.bf16.msra.mxu0 %v1693
      %2170 = vmatprep.subr.bf16.mxu0 0
      %2171 = vmatpush1.bf16.msra.mxu0 %v1694
      %2172 = vmatprep.subr.bf16.mxu0 0
      %2173 = vmatpush1.bf16.msra.mxu0 %v1695
      %2174 = vmatprep.subr.bf16.mxu0 0
      %2175 = vmatpush1.bf16.msra.mxu0 %v1696
      %2176 = vmatprep.subr.bf16.mxu0 0
      %2177 = vmatpush1.bf16.msra.mxu0 %v1697
      %2178 = vmatprep.mubr.bf16.mxu0 %v755
      %2179 = vmatmul.mubr.bf16.gmra.mrb[0].mxu0 %v754
      %v2180 = vpop.f32.mrb[0].mxu0
      %v2181 = vadd.f32 %v2133, %v2180
      %v2182 = vpop.f32.mrb[0].mxu0
      %v2183 = vpop.f32.mrb[0].mxu0
      %v2184 = vadd.f32 %v2136, %v2183
      %v2185 = vpop.f32.mrb[0].mxu0
      %2186 = vmatprep.mubr.bf16.mxu0 %v780
      %2187 = vmatmul.mubr.bf16.gmra.mrb[0].mxu0 %v779
      %v2188 = vpop.f32.mrb[0].mxu0
      %v2189 = vadd.f32 %v2141, %v2188
      %v2190 = vpop.f32.mrb[0].mxu0
      %v2191 = vpop.f32.mrb[0].mxu0
      %v2192 = vpop.f32.mrb[0].mxu0
      %2193 = vdwg.mxu0
      %2194 = vmatprep.subr.bf16.mxu0 0
      %2195 = vmatpush1.bf16.msra.mxu0 %v1698
      %2196 = vmatprep.subr.bf16.mxu0 0
      %2197 = vmatpush1.bf16.msra.mxu0 %v1699
      %2198 = vmatprep.subr.bf16.mxu0 0
      %2199 = vmatpush1.bf16.msra.mxu0 %v1700
      %2200 = vmatprep.subr.bf16.mxu0 0
      %2201 = vmatpush1.bf16.msra.mxu0 %v1701
      %2202 = vmatprep.subr.bf16.mxu0 0
      %2203 = vmatpush1.bf16.msra.mxu0 %v1702
      %2204 = vmatprep.subr.bf16.mxu0 0
      %2205 = vmatpush1.bf16.msra.mxu0 %v1703
      %2206 = vmatprep.subr.bf16.mxu0 0
      %2207 = vmatpush1.bf16.msra.mxu0 %v1704
      %2208 = vmatprep.subr.bf16.mxu0 0
      %2209 = vmatpush1.bf16.msra.mxu0 %v1705
      %2210 = vmatprep.subr.bf16.mxu0 0
      %2211 = vmatpush1.bf16.msra.mxu0 %v1706
      %2212 = vmatprep.subr.bf16.mxu0 0
      %2213 = vmatpush1.bf16.msra.mxu0 %v1707
      %2214 = vmatprep.subr.bf16.mxu0 0
      %2215 = vmatpush1.bf16.msra.mxu0 %v1708
      %2216 = vmatprep.subr.bf16.mxu0 0
      %2217 = vmatpush1.bf16.msra.mxu0 %v1709
      %2218 = vmatprep.subr.bf16.mxu0 0
      %2219 = vmatpush1.bf16.msra.mxu0 %v1710
      %2220 = vmatprep.subr.bf16.mxu0 0
      %2221 = vmatpush1.bf16.msra.mxu0 %v1711
      %2222 = vmatprep.subr.bf16.mxu0 0
      %2223 = vmatpush1.bf16.msra.mxu0 %v1712
      %2224 = vmatprep.subr.bf16.mxu0 0
      %2225 = vmatpush1.bf16.msra.mxu0 %v1713
      %2226 = vmatprep.mubr.bf16.mxu0 %v757
      %2227 = vmatmul.mubr.bf16.gmra.mrb[0].mxu0 %v756
      %v2228 = vpop.f32.mrb[0].mxu0
      %v2229 = vadd.f32 %v2181, %v2228
      %v2230 = vpop.f32.mrb[0].mxu0
      %v2231 = vpop.f32.mrb[0].mxu0
      %v2232 = vadd.f32 %v2184, %v2231
      %v2233 = vpop.f32.mrb[0].mxu0
      %2234 = vmatprep.mubr.bf16.mxu0 %v782
      %2235 = vmatmul.mubr.bf16.gmra.mrb[0].mxu0 %v781
      %v2236 = vpop.f32.mrb[0].mxu0
      %v2237 = vadd.f32 %v2189, %v2236
      %v2238 = vpop.f32.mrb[0].mxu0
      %v2239 = vpop.f32.mrb[0].mxu0
      %v2240 = vpop.f32.mrb[0].mxu0
      %2241 = vdwg.mxu0
      %2242 = vmatprep.subr.bf16.mxu0 0
      %2243 = vmatpush1.bf16.msra.mxu0 %v1714
      %2244 = vmatprep.subr.bf16.mxu0 0
      %2245 = vmatpush1.bf16.msra.mxu0 %v1715
      %2246 = vmatprep.subr.bf16.mxu0 0
      %2247 = vmatpush1.bf16.msra.mxu0 %v1716
      %2248 = vmatprep.subr.bf16.mxu0 0
      %2249 = vmatpush1.bf16.msra.mxu0 %v1717
      %2250 = vmatprep.subr.bf16.mxu0 0
      %2251 = vmatpush1.bf16.msra.mxu0 %v1718
      %2252 = vmatprep.subr.bf16.mxu0 0
      %2253 = vmatpush1.bf16.msra.mxu0 %v1719
      %2254 = vmatprep.subr.bf16.mxu0 0
      %2255 = vmatpush1.bf16.msra.mxu0 %v1720
      %2256 = vmatprep.subr.bf16.mxu0 0
      %2257 = vmatpush1.bf16.msra.mxu0 %v1721
      %2258 = vmatprep.subr.bf16.mxu0 0
      %2259 = vmatpush1.bf16.msra.mxu0 %v1722
      %2260 = vmatprep.subr.bf16.mxu0 0
      %2261 = vmatpush1.bf16.msra.mxu0 %v1723
      %2262 = vmatprep.subr.bf16.mxu0 0
      %2263 = vmatpush1.bf16.msra.mxu0 %v1724
      %2264 = vmatprep.subr.bf16.mxu0 0
      %2265 = vmatpush1.bf16.msra.mxu0 %v1725
      %2266 = vmatprep.subr.bf16.mxu0 0
      %2267 = vmatpush1.bf16.msra.mxu0 %v1726
      %2268 = vmatprep.subr.bf16.mxu0 0
      %2269 = vmatpush1.bf16.msra.mxu0 %v1727
      %2270 = vmatprep.subr.bf16.mxu0 0
      %2271 = vmatpush1.bf16.msra.mxu0 %v1728
      %2272 = vmatprep.subr.bf16.mxu0 0
      %2273 = vmatpush1.bf16.msra.mxu0 %v1729
      %2274 = vmatprep.mubr.bf16.mxu0 %v759
      %2275 = vmatmul.mubr.bf16.gmra.mrb[0].mxu0 %v758
      %v2276 = vpop.f32.mrb[0].mxu0
      %v2277 = vadd.f32 %v2229, %v2276
      %v2278 = vpop.f32.mrb[0].mxu0
      %v2279 = vpop.f32.mrb[0].mxu0
      %v2280 = vadd.f32 %v2232, %v2279
      %v2281 = vpop.f32.mrb[0].mxu0
      %2282 = vmatprep.mubr.bf16.mxu0 %v784
      %2283 = vmatmul.mubr.bf16.gmra.mrb[0].mxu0 %v783
      %v2284 = vpop.f32.mrb[0].mxu0
      %v2285 = vadd.f32 %v2237, %v2284
      %v2286 = vpop.f32.mrb[0].mxu0
      %v2287 = vpop.f32.mrb[0].mxu0
      %v2288 = vpop.f32.mrb[0].mxu0
      %2289 = vdwg.mxu0
      %2290 = vmatprep.subr.bf16.mxu0 0
      %2291 = vmatpush1.bf16.msra.mxu0 %v1730
      %2292 = vmatprep.subr.bf16.mxu0 0
      %2293 = vmatpush1.bf16.msra.mxu0 %v1731
      %2294 = vmatprep.subr.bf16.mxu0 0
      %2295 = vmatpush1.bf16.msra.mxu0 %v1732
      %2296 = vmatprep.subr.bf16.mxu0 0
      %2297 = vmatpush1.bf16.msra.mxu0 %v1733
      %2298 = vmatprep.subr.bf16.mxu0 0
      %2299 = vmatpush1.bf16.msra.mxu0 %v1734
      %2300 = vmatprep.subr.bf16.mxu0 0
      %2301 = vmatpush1.bf16.msra.mxu0 %v1735
      %2302 = vmatprep.subr.bf16.mxu0 0
      %2303 = vmatpush1.bf16.msra.mxu0 %v1736
      %2304 = vmatprep.subr.bf16.mxu0 0
      %2305 = vmatpush1.bf16.msra.mxu0 %v1737
      %2306 = vmatprep.subr.bf16.mxu0 0
      %2307 = vmatpush1.bf16.msra.mxu0 %v1738
      %2308 = vmatprep.subr.bf16.mxu0 0
      %2309 = vmatpush1.bf16.msra.mxu0 %v1739
      %2310 = vmatprep.subr.bf16.mxu0 0
      %2311 = vmatpush1.bf16.msra.mxu0 %v1740
      %2312 = vmatprep.subr.bf16.mxu0 0
      %2313 = vmatpush1.bf16.msra.mxu0 %v1741
      %2314 = vmatprep.subr.bf16.mxu0 0
      %2315 = vmatpush1.bf16.msra.mxu0 %v1742
      %2316 = vmatprep.subr.bf16.mxu0 0
      %2317 = vmatpush1.bf16.msra.mxu0 %v1743
      %2318 = vmatprep.subr.bf16.mxu0 0
      %2319 = vmatpush1.bf16.msra.mxu0 %v1744
      %2320 = vmatprep.subr.bf16.mxu0 0
      %2321 = vmatpush1.bf16.msra.mxu0 %v1745
      %2322 = vmatprep.mubr.bf16.mxu0 %v761
      %2323 = vmatmul.mubr.bf16.gmra.mrb[0].mxu0 %v760
      %v2324 = vpop.f32.mrb[0].mxu0
      %v2325 = vadd.f32 %v2277, %v2324
      %v2326 = vpop.f32.mrb[0].mxu0
      %v2327 = vpop.f32.mrb[0].mxu0
      %v2328 = vadd.f32 %v2280, %v2327
      %v2329 = vpop.f32.mrb[0].mxu0
      %2330 = vmatprep.mubr.bf16.mxu0 %v786
      %2331 = vmatmul.mubr.bf16.gmra.mrb[0].mxu0 %v785
      %v2332 = vpop.f32.mrb[0].mxu0
      %v2333 = vadd.f32 %v2285, %v2332
      %v2334 = vpop.f32.mrb[0].mxu0
      %v2335 = vpop.f32.mrb[0].mxu0
      %v2336 = vpop.f32.mrb[0].mxu0
      %2337 = vdwg.mxu0
      %2338 = vmatprep.subr.bf16.mxu0 0
      %2339 = vmatpush1.bf16.msra.mxu0 %v1746
      %2340 = vmatprep.subr.bf16.mxu0 0
      %2341 = vmatpush1.bf16.msra.mxu0 %v1747
      %2342 = vmatprep.subr.bf16.mxu0 0
      %2343 = vmatpush1.bf16.msra.mxu0 %v1748
      %2344 = vmatprep.subr.bf16.mxu0 0
      %2345 = vmatpush1.bf16.msra.mxu0 %v1749
      %2346 = vmatprep.subr.bf16.mxu0 0
      %2347 = vmatpush1.bf16.msra.mxu0 %v1750
      %2348 = vmatprep.subr.bf16.mxu0 0
      %2349 = vmatpush1.bf16.msra.mxu0 %v1751
      %2350 = vmatprep.subr.bf16.mxu0 0
      %2351 = vmatpush1.bf16.msra.mxu0 %v1752
      %2352 = vmatprep.subr.bf16.mxu0 0
      %2353 = vmatpush1.bf16.msra.mxu0 %v1753
      %2354 = vmatprep.subr.bf16.mxu0 0
      %2355 = vmatpush1.bf16.msra.mxu0 %v1754
      %2356 = vmatprep.subr.bf16.mxu0 0
      %2357 = vmatpush1.bf16.msra.mxu0 %v1755
      %2358 = vmatprep.subr.bf16.mxu0 0
      %2359 = vmatpush1.bf16.msra.mxu0 %v1756
      %2360 = vmatprep.subr.bf16.mxu0 0
      %2361 = vmatpush1.bf16.msra.mxu0 %v1757
      %2362 = vmatprep.subr.bf16.mxu0 0
      %2363 = vmatpush1.bf16.msra.mxu0 %v1758
      %2364 = vmatprep.subr.bf16.mxu0 0
      %2365 = vmatpush1.bf16.msra.mxu0 %v1759
      %2366 = vmatprep.subr.bf16.mxu0 0
      %2367 = vmatpush1.bf16.msra.mxu0 %v1760
      %2368 = vmatprep.subr.bf16.mxu0 0
      %2369 = vmatpush1.bf16.msra.mxu0 %v1761
      %2370 = vmatprep.mubr.bf16.mxu0 %v763
      %2371 = vmatmul.mubr.bf16.gmra.mrb[0].mxu0 %v762
      %v2372 = vpop.f32.mrb[0].mxu0
      %v2373 = vadd.f32 %v2325, %v2372
      %v2374 = vpop.f32.mrb[0].mxu0
      %v2375 = vpop.f32.mrb[0].mxu0
      %v2376 = vadd.f32 %v2328, %v2375
      %v2377 = vpop.f32.mrb[0].mxu0
      %2378 = vmatprep.mubr.bf16.mxu0 %v788
      %2379 = vmatmul.mubr.bf16.gmra.mrb[0].mxu0 %v787
      %v2380 = vpop.f32.mrb[0].mxu0
      %v2381 = vadd.f32 %v2333, %v2380
      %v2382 = vpop.f32.mrb[0].mxu0
      %v2383 = vpop.f32.mrb[0].mxu0
      %v2384 = vpop.f32.mrb[0].mxu0
      %2385 = vdwg.mxu0
      %2386 = vmatprep.subr.bf16.mxu0 0
      %2387 = vmatpush1.bf16.msra.mxu0 %v1762
      %2388 = vmatprep.subr.bf16.mxu0 0
      %2389 = vmatpush1.bf16.msra.mxu0 %v1763
      %2390 = vmatprep.subr.bf16.mxu0 0
      %2391 = vmatpush1.bf16.msra.mxu0 %v1764
      %2392 = vmatprep.subr.bf16.mxu0 0
      %2393 = vmatpush1.bf16.msra.mxu0 %v1765
      %2394 = vmatprep.subr.bf16.mxu0 0
      %2395 = vmatpush1.bf16.msra.mxu0 %v1766
      %2396 = vmatprep.subr.bf16.mxu0 0
      %2397 = vmatpush1.bf16.msra.mxu0 %v1767
      %2398 = vmatprep.subr.bf16.mxu0 0
      %2399 = vmatpush1.bf16.msra.mxu0 %v1768
      %2400 = vmatprep.subr.bf16.mxu0 0
      %2401 = vmatpush1.bf16.msra.mxu0 %v1769
      %2402 = vmatprep.subr.bf16.mxu0 0
      %2403 = vmatpush1.bf16.msra.mxu0 %v1770
      %2404 = vmatprep.subr.bf16.mxu0 0
      %2405 = vmatpush1.bf16.msra.mxu0 %v1771
      %2406 = vmatprep.subr.bf16.mxu0 0
      %2407 = vmatpush1.bf16.msra.mxu0 %v1772
      %2408 = vmatprep.subr.bf16.mxu0 0
      %2409 = vmatpush1.bf16.msra.mxu0 %v1773
      %2410 = vmatprep.subr.bf16.mxu0 0
      %2411 = vmatpush1.bf16.msra.mxu0 %v1774
      %2412 = vmatprep.subr.bf16.mxu0 0
      %2413 = vmatpush1.bf16.msra.mxu0 %v1775
      %2414 = vmatprep.subr.bf16.mxu0 0
      %2415 = vmatpush1.bf16.msra.mxu0 %v1776
      %2416 = vmatprep.subr.bf16.mxu0 0
      %2417 = vmatpush1.bf16.msra.mxu0 %v1777
      %2418 = vmatprep.mubr.bf16.mxu0 %v765
      %2419 = vmatmul.mubr.bf16.gmra.mrb[0].mxu0 %v764
      %v2420 = vpop.f32.mrb[0].mxu0
      %v2421 = vadd.f32 %v2373, %v2420
      %v2422 = vpop.f32.mrb[0].mxu0
      %v2423 = vpop.f32.mrb[0].mxu0
      %v2424 = vadd.f32 %v2376, %v2423
      %v2425 = vpop.f32.mrb[0].mxu0
      %2426 = vmatprep.mubr.bf16.mxu0 %v790
      %2427 = vmatmul.mubr.bf16.gmra.mrb[0].mxu0 %v789
      %v2428 = vpop.f32.mrb[0].mxu0
      %v2429 = vadd.f32 %v2381, %v2428
      %v2430 = vpop.f32.mrb[0].mxu0
      %v2431 = vpop.f32.mrb[0].mxu0
      %v2432 = vpop.f32.mrb[0].mxu0
      %2433 = vdwg.mxu0
      %2434 = vmatprep.subr.bf16.mxu0 0
      %2435 = vmatpush1.bf16.msra.mxu0 %v1778
      %2436 = vmatprep.subr.bf16.mxu0 0
      %2437 = vmatpush1.bf16.msra.mxu0 %v1779
      %2438 = vmatprep.subr.bf16.mxu0 0
      %2439 = vmatpush1.bf16.msra.mxu0 %v1780
      %2440 = vmatprep.subr.bf16.mxu0 0
      %2441 = vmatpush1.bf16.msra.mxu0 %v1781
      %2442 = vmatprep.subr.bf16.mxu0 0
      %2443 = vmatpush1.bf16.msra.mxu0 %v1782
      %2444 = vmatprep.subr.bf16.mxu0 0
      %2445 = vmatpush1.bf16.msra.mxu0 %v1783
      %2446 = vmatprep.subr.bf16.mxu0 0
      %2447 = vmatpush1.bf16.msra.mxu0 %v1784
      %2448 = vmatprep.subr.bf16.mxu0 0
      %2449 = vmatpush1.bf16.msra.mxu0 %v1785
      %2450 = vmatprep.subr.bf16.mxu0 0
      %2451 = vmatpush1.bf16.msra.mxu0 %v1786
      %2452 = vmatprep.subr.bf16.mxu0 0
      %2453 = vmatpush1.bf16.msra.mxu0 %v1787
      %2454 = vmatprep.subr.bf16.mxu0 0
      %2455 = vmatpush1.bf16.msra.mxu0 %v1788
      %2456 = vmatprep.subr.bf16.mxu0 0
      %2457 = vmatpush1.bf16.msra.mxu0 %v1789
      %2458 = vmatprep.subr.bf16.mxu0 0
      %2459 = vmatpush1.bf16.msra.mxu0 %v1790
      %2460 = vmatprep.subr.bf16.mxu0 0
      %2461 = vmatpush1.bf16.msra.mxu0 %v1791
      %2462 = vmatprep.subr.bf16.mxu0 0
      %2463 = vmatpush1.bf16.msra.mxu0 %v1792
      %2464 = vmatprep.subr.bf16.mxu0 0
      %2465 = vmatpush1.bf16.msra.mxu0 %v1793
      %2466 = vmatprep.mubr.bf16.mxu0 %v767
      %2467 = vmatmul.mubr.bf16.gmra.mrb[0].mxu0 %v766
      %v2468 = vpop.f32.mrb[0].mxu0
      %v2469 = vadd.f32 %v2421, %v2468
      %v2470 = vpop.f32.mrb[0].mxu0
      %v2471 = vpop.f32.mrb[0].mxu0
      %v2472 = vadd.f32 %v2424, %v2471
      %v2473 = vpop.f32.mrb[0].mxu0
      %2474 = vmatprep.mubr.bf16.mxu0 %v792
      %2475 = vmatmul.mubr.bf16.gmra.mrb[0].mxu0 %v791
      %v2476 = vpop.f32.mrb[0].mxu0
      %v2477 = vadd.f32 %v2429, %v2476
      %v2478 = vpop.f32.mrb[0].mxu0
      %v2479 = vpop.f32.mrb[0].mxu0
      %v2480 = vpop.f32.mrb[0].mxu0
      %2481 = vdwg.mxu0
      %2482 = vmatprep.subr.bf16.mxu0 0
      %2483 = vmatpush1.bf16.msra.mxu0 %v1794
      %2484 = vmatprep.subr.bf16.mxu0 0
      %2485 = vmatpush1.bf16.msra.mxu0 %v1795
      %2486 = vmatprep.subr.bf16.mxu0 0
      %2487 = vmatpush1.bf16.msra.mxu0 %v1796
      %2488 = vmatprep.subr.bf16.mxu0 0
      %2489 = vmatpush1.bf16.msra.mxu0 %v1797
      %2490 = vmatprep.subr.bf16.mxu0 0
      %2491 = vmatpush1.bf16.msra.mxu0 %v1798
      %2492 = vmatprep.subr.bf16.mxu0 0
      %2493 = vmatpush1.bf16.msra.mxu0 %v1799
      %2494 = vmatprep.subr.bf16.mxu0 0
      %2495 = vmatpush1.bf16.msra.mxu0 %v1800
      %2496 = vmatprep.subr.bf16.mxu0 0
      %2497 = vmatpush1.bf16.msra.mxu0 %v1801
      %2498 = vmatprep.subr.bf16.mxu0 0
      %2499 = vmatpush1.bf16.msra.mxu0 %v1802
      %2500 = vmatprep.subr.bf16.mxu0 0
      %2501 = vmatpush1.bf16.msra.mxu0 %v1803
      %2502 = vmatprep.subr.bf16.mxu0 0
      %2503 = vmatpush1.bf16.msra.mxu0 %v1804
      %2504 = vmatprep.subr.bf16.mxu0 0
      %2505 = vmatpush1.bf16.msra.mxu0 %v1805
      %2506 = vmatprep.subr.bf16.mxu0 0
      %2507 = vmatpush1.bf16.msra.mxu0 %v1806
      %2508 = vmatprep.subr.bf16.mxu0 0
      %2509 = vmatpush1.bf16.msra.mxu0 %v1807
      %2510 = vmatprep.subr.bf16.mxu0 0
      %2511 = vmatpush1.bf16.msra.mxu0 %v1808
      %2512 = vmatprep.subr.bf16.mxu0 0
      %2513 = vmatpush1.bf16.msra.mxu0 %v1809
      %2514 = vmatprep.mubr.bf16.mxu0 %v769
      %2515 = vmatmul.mubr.bf16.gmra.mrb[0].mxu0 %v768
      %v2516 = vpop.f32.mrb[0].mxu0
      %v2517 = vadd.f32 %v2469, %v2516
      %v2518 = vpop.f32.mrb[0].mxu0
      %v2519 = vpop.f32.mrb[0].mxu0
      %v2520 = vadd.f32 %v2472, %v2519
      %v2521 = vpop.f32.mrb[0].mxu0
      %2522 = vmatprep.mubr.bf16.mxu0 %v794
      %2523 = vmatmul.mubr.bf16.gmra.mrb[0].mxu0 %v793
      %v2524 = vpop.f32.mrb[0].mxu0
      %v2525 = vadd.f32 %v2477, %v2524
      %v2526 = vpop.f32.mrb[0].mxu0
      %v2527 = vpop.f32.mrb[0].mxu0
      %v2528 = vpop.f32.mrb[0].mxu0
      %2529 = vdwg.mxu0
      %2530 = vmatprep.subr.bf16.mxu0 0
      %2531 = vmatpush1.bf16.msra.mxu0 %v1810
      %2532 = vmatprep.subr.bf16.mxu0 0
      %2533 = vmatpush1.bf16.msra.mxu0 %v1811
      %2534 = vmatprep.subr.bf16.mxu0 0
      %2535 = vmatpush1.bf16.msra.mxu0 %v1812
      %2536 = vmatprep.subr.bf16.mxu0 0
      %2537 = vmatpush1.bf16.msra.mxu0 %v1813
      %2538 = vmatprep.subr.bf16.mxu0 0
      %2539 = vmatpush1.bf16.msra.mxu0 %v1814
      %2540 = vmatprep.subr.bf16.mxu0 0
      %2541 = vmatpush1.bf16.msra.mxu0 %v1815
      %2542 = vmatprep.subr.bf16.mxu0 0
      %2543 = vmatpush1.bf16.msra.mxu0 %v1816
      %2544 = vmatprep.subr.bf16.mxu0 0
      %2545 = vmatpush1.bf16.msra.mxu0 %v1817
      %2546 = vmatprep.subr.bf16.mxu0 0
      %2547 = vmatpush1.bf16.msra.mxu0 %v1818
      %2548 = vmatprep.subr.bf16.mxu0 0
      %2549 = vmatpush1.bf16.msra.mxu0 %v1819
      %2550 = vmatprep.subr.bf16.mxu0 0
      %2551 = vmatpush1.bf16.msra.mxu0 %v1820
      %2552 = vmatprep.subr.bf16.mxu0 0
      %2553 = vmatpush1.bf16.msra.mxu0 %v1821
      %2554 = vmatprep.subr.bf16.mxu0 0
      %2555 = vmatpush1.bf16.msra.mxu0 %v1822
      %2556 = vmatprep.subr.bf16.mxu0 0
      %2557 = vmatpush1.bf16.msra.mxu0 %v1823
      %2558 = vmatprep.subr.bf16.mxu0 0
      %2559 = vmatpush1.bf16.msra.mxu0 %v1824
      %2560 = vmatprep.subr.bf16.mxu0 0
      %2561 = vmatpush1.bf16.msra.mxu0 %v1825
      %2562 = vmatprep.mubr.bf16.mxu0 %v771
      %2563 = vmatmul.mubr.bf16.gmra.mrb[0].mxu0 %v770
      %v2564 = vpop.f32.mrb[0].mxu0
      %v2565 = vadd.f32 %v2517, %v2564
      %v2566 = vpop.f32.mrb[0].mxu0
      %v2567 = vpop.f32.mrb[0].mxu0
      %v2568 = vadd.f32 %v2520, %v2567
      %v2569 = vpop.f32.mrb[0].mxu0
      %2570 = vmatprep.mubr.bf16.mxu0 %v796
      %2571 = vmatmul.mubr.bf16.gmra.mrb[0].mxu0 %v795
      %v2572 = vpop.f32.mrb[0].mxu0
      %v2573 = vadd.f32 %v2525, %v2572
      %v2574 = vpop.f32.mrb[0].mxu0
      %v2575 = vpop.f32.mrb[0].mxu0
      %v2576 = vpop.f32.mrb[0].mxu0
      %2577 = vdwg.mxu0
      %2578 = vmatprep.subr.bf16.mxu0 0
      %2579 = vmatpush1.bf16.msra.mxu0 %v1826
      %2580 = vmatprep.subr.bf16.mxu0 0
      %2581 = vmatpush1.bf16.msra.mxu0 %v1827
      %2582 = vmatprep.subr.bf16.mxu0 0
      %2583 = vmatpush1.bf16.msra.mxu0 %v1828
      %2584 = vmatprep.subr.bf16.mxu0 0
      %2585 = vmatpush1.bf16.msra.mxu0 %v1829
      %2586 = vmatprep.subr.bf16.mxu0 0
      %2587 = vmatpush1.bf16.msra.mxu0 %v1830
      %2588 = vmatprep.subr.bf16.mxu0 0
      %2589 = vmatpush1.bf16.msra.mxu0 %v1831
      %2590 = vmatprep.subr.bf16.mxu0 0
      %2591 = vmatpush1.bf16.msra.mxu0 %v1832
      %2592 = vmatprep.subr.bf16.mxu0 0
      %2593 = vmatpush1.bf16.msra.mxu0 %v1833
      %2594 = vmatprep.subr.bf16.mxu0 0
      %2595 = vmatpush1.bf16.msra.mxu0 %v1834
      %2596 = vmatprep.subr.bf16.mxu0 0
      %2597 = vmatpush1.bf16.msra.mxu0 %v1835
      %2598 = vmatprep.subr.bf16.mxu0 0
      %2599 = vmatpush1.bf16.msra.mxu0 %v1836
      %2600 = vmatprep.subr.bf16.mxu0 0
      %2601 = vmatpush1.bf16.msra.mxu0 %v1837
      %2602 = vmatprep.subr.bf16.mxu0 0
      %2603 = vmatpush1.bf16.msra.mxu0 %v1838
      %2604 = vmatprep.subr.bf16.mxu0 0
      %2605 = vmatpush1.bf16.msra.mxu0 %v1839
      %2606 = vmatprep.subr.bf16.mxu0 0
      %2607 = vmatpush1.bf16.msra.mxu0 %v1840
      %2608 = vmatprep.subr.bf16.mxu0 0
      %2609 = vmatpush1.bf16.msra.mxu0 %v1841
      %2610 = vmatprep.mubr.bf16.mxu0 %v773
      %2611 = vmatmul.mubr.bf16.gmra.mrb[0].mxu0 %v772
      %v2612 = vpop.f32.mrb[0].mxu0
      %v2613 = vadd.f32 %v2565, %v2612
      %v2614 = vpop.f32.mrb[0].mxu0
      %v2615 = vpop.f32.mrb[0].mxu0
      %v2616 = vadd.f32 %v2568, %v2615
      %v2617 = vpop.f32.mrb[0].mxu0
      %2618 = vmatprep.mubr.bf16.mxu0 %v798
      %2619 = vmatmul.mubr.bf16.gmra.mrb[0].mxu0 %v797
      %v2620 = vpop.f32.mrb[0].mxu0
      %v2621 = vadd.f32 %v2573, %v2620
      %v2622 = vpop.f32.mrb[0].mxu0
      %v2623 = vpop.f32.mrb[0].mxu0
      %v2624 = vpop.f32.mrb[0].mxu0
      %2625 = vdwg.mxu0
      %2626 = vmatprep.subr.bf16.mxu0 0
      %2627 = vmatpush1.bf16.msra.mxu0 %v1842
      %2628 = vmatprep.subr.bf16.mxu0 0
      %2629 = vmatpush1.bf16.msra.mxu0 %v1843
      %2630 = vmatprep.subr.bf16.mxu0 0
      %2631 = vmatpush1.bf16.msra.mxu0 %v1844
      %2632 = vmatprep.subr.bf16.mxu0 0
      %2633 = vmatpush1.bf16.msra.mxu0 %v1845
      %2634 = vmatprep.subr.bf16.mxu0 0
      %2635 = vmatpush1.bf16.msra.mxu0 %v1846
      %2636 = vmatprep.subr.bf16.mxu0 0
      %2637 = vmatpush1.bf16.msra.mxu0 %v1847
      %2638 = vmatprep.subr.bf16.mxu0 0
      %2639 = vmatpush1.bf16.msra.mxu0 %v1848
      %2640 = vmatprep.subr.bf16.mxu0 0
      %2641 = vmatpush1.bf16.msra.mxu0 %v1849
      %2642 = vmatprep.subr.bf16.mxu0 0
      %2643 = vmatpush1.bf16.msra.mxu0 0
      %2644 = vmatprep.subr.bf16.mxu0 0
      %2645 = vmatpush1.bf16.msra.mxu0 0
      %2646 = vmatprep.subr.bf16.mxu0 0
      %2647 = vmatpush1.bf16.msra.mxu0 0
      %2648 = vmatprep.subr.bf16.mxu0 0
      %2649 = vmatpush1.bf16.msra.mxu0 0
      %2650 = vmatprep.subr.bf16.mxu0 0
      %2651 = vmatpush1.bf16.msra.mxu0 0
      %2652 = vmatprep.subr.bf16.mxu0 0
      %2653 = vmatpush1.bf16.msra.mxu0 0
      %2654 = vmatprep.subr.bf16.mxu0 0
      %2655 = vmatpush1.bf16.msra.mxu0 0
      %2656 = vmatprep.subr.bf16.mxu0 0
      %2657 = vmatpush1.bf16.msra.mxu0 0
      %2658 = vmatprep.mubr.bf16.mxu0 0
      %2659 = vmatmul.mubr.bf16.gmra.mrb[0].mxu0 %v774
      %v2660 = vpop.f32.mrb[0].mxu0
      %v2661 = vadd.f32 %v2613, %v2660
      %v2662 = vpop.f32.mrb[0].mxu0
      %v2663 = vpop.f32.mrb[0].mxu0
      %v2664 = vadd.f32 %v2616, %v2663
      %v2665 = vpop.f32.mrb[0].mxu0
      %2666 = vmatprep.mubr.bf16.mxu0 0
      %2667 = vmatmul.mubr.bf16.gmra.mrb[0].mxu0 %v799
      %v2668 = vpop.f32.mrb[0].mxu0
      %v2669 = vadd.f32 %v2621, %v2668
      %v2670 = vpop.f32.mrb[0].mxu0
      %v2671 = vpop.f32.mrb[0].mxu0
      %v2672 = vpop.f32.mrb[0].mxu0
      %2673 = vdwg.mxu0
      %v2674 = vld [vmem:[%s2] sm:$0x1]
      %v2676 = vlaneseq
      %v2677 = vshrl.u32 %v2676, 7
      %v2678 = vsub.s32 0, %v2677
      %v2679 = vrot.slane %v2674, %v2678
      %v2681 = vmul.f32 %v2661, %v2679
      %v2682 = vmul.f32 %v2664, %v2679
      %v2683 = vmul.f32 %v2669, %v2679
      %v2684 = vld [vmem:[%s3] sm:$0x1]
      %v2686 = vlaneseq
      %v2687 = vshrl.u32 %v2686, 7
      %v2688 = vsub.s32 0, %v2687
      %v2689 = vrot.slane %v2684, %v2688
      %v2691 = vadd.f32 %v2681, %v2689
      %v2692 = vadd.f32 %v2682, %v2689
      %v2693 = vadd.f32 %v2683, %v2689
      %v2694 = vmax.f32 %v2691, 0.0
      %v2695 = vmax.f32 %v2692, 0.0
      %v2696 = vmax.f32 %v2693, 0.0
      %vm2699 = vcmask 1042432
      %v2700 = vrot.slane %v2694, 5
      %v2701 = vrot.slane %v2695, 5
      %v2702 = vsel %vm2699, %v2700, %v2701
      %v2704 = vmax.f32 %v2694, %v2702
      %v2706 = vrot.slane %v2696, 5
      %v2707 = vsel %vm2699, %v2701, %v2706
      %v2709 = vmax.f32 %v2695, %v2707
      %v2711 = vrot.slane %v2709, 2
      %v2713 = vmax.f32 %v2704, %v2711
      %v2714 = vpack.c.bf16 %v2713, %v2713
      %vm2715 = vcmask 1042432
      %vm2716 = vsmask.f32 2304
      %vm2717 = vmand %vm2715, %vm2716
      %v2718 = vld [vmem:[%s195] sm:$0x7]
      %v2719 = vsel %vm2717, %v2714, %v2718
      %2720 = vst [vmem:[%s195] sm:$0x7] %v2719
      %p2721 = scmp.lt.s32.totalorder %s15, 9
      %s2722 = scalar_select %p2721, %s15, 9
      %s2723 = smul.addr %s2722, 4
      %s2724 = scalar_lea.vmem %s4, %s2723
      // Predicated region
      $region37: #{model_switch2_forward.4} parent=35 // pred_check
        %p2725 = pneg %p122
      $region38: #{model_switch2_forward.4} parent=35 // pred_check_branch
        %2727 = sbr.rel (%p2725) target = $region40
      $region39: #{model_switch2_forward.4} parent=35 // pred_region
        _
      $region40: #{model_switch2_forward.4} parent=35 // pred_fallthru
        _
    $region36: #{model_switch2_forward.4} parent=5 // pred_fallthru
      _
    %p2728 = scmp.le.s32.totalorder 2, %s10
    // Predicated region
    $region41: #{model_switch2_forward.4} parent=5 // pred_check
      %p2729 = pneg %p2728
    $region42: #{model_switch2_forward.4} parent=5 // pred_check_branch
      %2731 = sbr.rel (%p2729) target = $region44
    $region43: #{model_switch2_forward.4} parent=5 // pred_region
      %s2732 = ssub.s32 %s10, 2
      // Predicated region
      $region45: #{model_switch2_forward.4} parent=43 // pred_check
        %p2733 = pneg %p128
      $region46: #{model_switch2_forward.4} parent=43 // pred_check_branch
        %2735 = sbr.rel (%p2733) target = $region48
      $region47: #{model_switch2_forward.4} parent=43 // pred_region
        %p2736 = scmp.lt.s32.totalorder %s16, 9
        %s2737 = scalar_select %p2736, %s16, 9
        %s2738 = smul.addr %s2737, 4
        %s2739 = scalar_lea.vmem %s4, %s2738
      $region48: #{model_switch2_forward.4} parent=43 // pred_fallthru
        _
    $region44: #{model_switch2_forward.4} parent=5 // pred_fallthru
      _
  $region6: #{model_switch2_forward.4} parent=0 // loop_footer
    %s14 = sadd.s32 1, %s10
  $region7: #{model_switch2_forward.4} parent=0 // loop_footer_branch
    %9 = sbr.rel target = $region3
  $region8: #{model_switch2_forward.4} parent=0 // loop_exit
    _

// kernel: model_switch2_forward.5
$region0: #{model_switch2_forward.5}
  #allocation0 [shape = 'u32[]', space=smem, size = 0x4, offset = 0x4, fixed_abs, tag = 'smem constant byte address 0x4 - core index']
  #allocation1 [shape = 'u32[144,128]{1,0:T(1,128)}', space=vmem, size = 0x12000, scoped, tag = 'internal scratch']
  %s0 = inlined_call_operand.vmem [shape: bf16[2,3200], index: 0, kind: input, shape index: {}]
  %s1 = inlined_call_operand.vmem [shape: bf16[3200,128], index: 1, kind: input, shape index: {}]
  %s2 = inlined_call_operand.vmem [shape: f32[1,128], index: 2, kind: input, shape index: {}]
  %s3 = inlined_call_operand.vmem [shape: f32[2,128], index: 3, kind: output, shape index: {}]
  %s4 = sld [smem:[#allocation0]]
  $region22: #{model_switch2_forward.5} parent=0
    _
  %s6 = ssub.s32 1, %s4
  %s7 = scalar_select 0, %s6, %s4
  // Predicated region
  $region2: #{model_switch2_forward.5} parent=0 // pred_check
    _
  $region3: #{model_switch2_forward.5} parent=0 // pred_check_branch
    %9 = sbr.rel (0) target = $region5
  $region4: #{model_switch2_forward.5} parent=0 // pred_region
    _
  $region5: #{model_switch2_forward.5} parent=0 // pred_fallthru
    _
  // Predicated region
  $region6: #{model_switch2_forward.5} parent=0 // pred_check
    _
  $region7: #{model_switch2_forward.5} parent=0 // pred_check_branch
    %11 = sbr.rel (0) target = $region9
  $region8: #{model_switch2_forward.5} parent=0 // pred_region
    _
  $region9: #{model_switch2_forward.5} parent=0 // pred_fallthru
    _
  // Predicated region
  $region10: #{model_switch2_forward.5} parent=0 // pred_check
    _
  $region11: #{model_switch2_forward.5} parent=0 // pred_check_branch
    %13 = sbr.rel (0) target = $region13
  $region12: #{model_switch2_forward.5} parent=0 // pred_region
    _
  $region13: #{model_switch2_forward.5} parent=0 // pred_fallthru
    _
  %v15 = vld [vmem:[%s0] sm:$0xff]
  %v16 = vld [vmem:[%s0 + $0x8] sm:$0xff]
  %v17 = vld [vmem:[%s0 + $0x10] sm:$0xff]
  %v18 = vld [vmem:[%s0 + $0x18] sm:$0x1]
  %v19 = vld [vmem:[%s1] sm:$0xf]
  %v20 = vld [vmem:[%s1 + $0x4] sm:$0xf]
  %v21 = vld [vmem:[%s1 + $0x8] sm:$0xf]
  %v22 = vld [vmem:[%s1 + $0xc] sm:$0xf]
  %v23 = vld [vmem:[%s1 + $0x10] sm:$0xf]
  %v24 = vld [vmem:[%s1 + $0x14] sm:$0xf]
  %v25 = vld [vmem:[%s1 + $0x18] sm:$0xf]
  %v26 = vld [vmem:[%s1 + $0x1c] sm:$0xf]
  %v27 = vld [vmem:[%s1 + $0x20] sm:$0xf]
  %v28 = vld [vmem:[%s1 + $0x24] sm:$0xf]
  %v29 = vld [vmem:[%s1 + $0x28] sm:$0xf]
  %v30 = vld [vmem:[%s1 + $0x2c] sm:$0xf]
  %v31 = vld [vmem:[%s1 + $0x30] sm:$0xf]
  %v32 = vld [vmem:[%s1 + $0x34] sm:$0xf]
  %v33 = vld [vmem:[%s1 + $0x38] sm:$0xf]
  %v34 = vld [vmem:[%s1 + $0x3c] sm:$0xf]
  %v35 = vld [vmem:[%s1 + $0x40] sm:$0xf]
  %v36 = vld [vmem:[%s1 + $0x44] sm:$0xf]
  %v37 = vld [vmem:[%s1 + $0x48] sm:$0xf]
  %v38 = vld [vmem:[%s1 + $0x4c] sm:$0xf]
  %v39 = vld [vmem:[%s1 + $0x50] sm:$0xf]
  %v40 = vld [vmem:[%s1 + $0x54] sm:$0xf]
  %v41 = vld [vmem:[%s1 + $0x58] sm:$0xf]
  %v42 = vld [vmem:[%s1 + $0x5c] sm:$0xf]
  %v43 = vld [vmem:[%s1 + $0x60] sm:$0xf]
  %v44 = vld [vmem:[%s1 + $0x64] sm:$0xf]
  %v45 = vld [vmem:[%s1 + $0x68] sm:$0xf]
  %v46 = vld [vmem:[%s1 + $0x6c] sm:$0xf]
  %v47 = vld [vmem:[%s1 + $0x70] sm:$0xf]
  %v48 = vld [vmem:[%s1 + $0x74] sm:$0xf]
  %v49 = vld [vmem:[%s1 + $0x78] sm:$0xf]
  %v50 = vld [vmem:[%s1 + $0x7c] sm:$0xf]
  %v51 = vld [vmem:[%s1 + $0x80] sm:$0xf]
  %v52 = vld [vmem:[%s1 + $0x84] sm:$0xf]
  %v53 = vld [vmem:[%s1 + $0x88] sm:$0xf]
  %v54 = vld [vmem:[%s1 + $0x8c] sm:$0xf]
  %v55 = vld [vmem:[%s1 + $0x90] sm:$0xf]
  %v56 = vld [vmem:[%s1 + $0x94] sm:$0xf]
  %v57 = vld [vmem:[%s1 + $0x98] sm:$0xf]
  %v58 = vld [vmem:[%s1 + $0x9c] sm:$0xf]
  %v59 = vld [vmem:[%s1 + $0xa0] sm:$0xf]
  %v60 = vld [vmem:[%s1 + $0xa4] sm:$0xf]
  %v61 = vld [vmem:[%s1 + $0xa8] sm:$0xf]
  %v62 = vld [vmem:[%s1 + $0xac] sm:$0xf]
  %v63 = vld [vmem:[%s1 + $0xb0] sm:$0xf]
  %v64 = vld [vmem:[%s1 + $0xb4] sm:$0xf]
  %v65 = vld [vmem:[%s1 + $0xb8] sm:$0xf]
  %v66 = vld [vmem:[%s1 + $0xbc] sm:$0xf]
  %v67 = vld [vmem:[%s1 + $0xc0] sm:$0xf]
  %v68 = vld [vmem:[%s1 + $0xc4] sm:$0xf]
  %v69 = vld [vmem:[%s1 + $0xc8] sm:$0xf]
  %v70 = vld [vmem:[%s1 + $0xcc] sm:$0xf]
  %v71 = vld [vmem:[%s1 + $0xd0] sm:$0xf]
  %v72 = vld [vmem:[%s1 + $0xd4] sm:$0xf]
  %v73 = vld [vmem:[%s1 + $0xd8] sm:$0xf]
  %v74 = vld [vmem:[%s1 + $0xdc] sm:$0xf]
  %v75 = vld [vmem:[%s1 + $0xe0] sm:$0xf]
  %v76 = vld [vmem:[%s1 + $0xe4] sm:$0xf]
  %v77 = vld [vmem:[%s1 + $0xe8] sm:$0xf]
  %v78 = vld [vmem:[%s1 + $0xec] sm:$0xf]
  %v79 = vld [vmem:[%s1 + $0xf0] sm:$0xf]
  %v80 = vld [vmem:[%s1 + $0xf4] sm:$0xf]
  %v81 = vld [vmem:[%s1 + $0xf8] sm:$0xf]
  %v82 = vld [vmem:[%s1 + $0xfc] sm:$0xf]
  %v83 = vld [vmem:[%s1 + $0x100] sm:$0xf]
  %v84 = vld [vmem:[%s1 + $0x104] sm:$0xf]
  %v85 = vld [vmem:[%s1 + $0x108] sm:$0xf]
  %v86 = vld [vmem:[%s1 + $0x10c] sm:$0xf]
  %v87 = vld [vmem:[%s1 + $0x110] sm:$0xf]
  %v88 = vld [vmem:[%s1 + $0x114] sm:$0xf]
  %v89 = vld [vmem:[%s1 + $0x118] sm:$0xf]
  %v90 = vld [vmem:[%s1 + $0x11c] sm:$0xf]
  %v91 = vld [vmem:[%s1 + $0x120] sm:$0xf]
  %v92 = vld [vmem:[%s1 + $0x124] sm:$0xf]
  %v93 = vld [vmem:[%s1 + $0x128] sm:$0xf]
  %v94 = vld [vmem:[%s1 + $0x12c] sm:$0xf]
  %v95 = vld [vmem:[%s1 + $0x130] sm:$0xf]
  %v96 = vld [vmem:[%s1 + $0x134] sm:$0xf]
  %v97 = vld [vmem:[%s1 + $0x138] sm:$0xf]
  %v98 = vld [vmem:[%s1 + $0x13c] sm:$0xf]
  %v99 = vld [vmem:[%s1 + $0x140] sm:$0xf]
  %v100 = vld [vmem:[%s1 + $0x144] sm:$0xf]
  %v101 = vld [vmem:[%s1 + $0x148] sm:$0xf]
  %v102 = vld [vmem:[%s1 + $0x14c] sm:$0xf]
  %v103 = vld [vmem:[%s1 + $0x150] sm:$0xf]
  %v104 = vld [vmem:[%s1 + $0x154] sm:$0xf]
  %v105 = vld [vmem:[%s1 + $0x158] sm:$0xf]
  %v106 = vld [vmem:[%s1 + $0x15c] sm:$0xf]
  %v107 = vld [vmem:[%s1 + $0x160] sm:$0xf]
  %v108 = vld [vmem:[%s1 + $0x164] sm:$0xf]
  %v109 = vld [vmem:[%s1 + $0x168] sm:$0xf]
  %v110 = vld [vmem:[%s1 + $0x16c] sm:$0xf]
  %v111 = vld [vmem:[%s1 + $0x170] sm:$0xf]
  %v112 = vld [vmem:[%s1 + $0x174] sm:$0xf]
  %v113 = vld [vmem:[%s1 + $0x178] sm:$0xf]
  %v114 = vld [vmem:[%s1 + $0x17c] sm:$0xf]
  %v115 = vld [vmem:[%s1 + $0x180] sm:$0xf]
  %v116 = vld [vmem:[%s1 + $0x184] sm:$0xf]
  %v117 = vld [vmem:[%s1 + $0x188] sm:$0xf]
  %v118 = vld [vmem:[%s1 + $0x18c] sm:$0xf]
  %v119 = vld [vmem:[%s1 + $0x190] sm:$0xf]
  %v120 = vld [vmem:[%s1 + $0x194] sm:$0xf]
  %v121 = vld [vmem:[%s1 + $0x198] sm:$0xf]
  %v122 = vld [vmem:[%s1 + $0x19c] sm:$0xf]
  %v123 = vld [vmem:[%s1 + $0x1a0] sm:$0xf]
  %v124 = vld [vmem:[%s1 + $0x1a4] sm:$0xf]
  %v125 = vld [vmem:[%s1 + $0x1a8] sm:$0xf]
  %v126 = vld [vmem:[%s1 + $0x1ac] sm:$0xf]
  %v127 = vld [vmem:[%s1 + $0x1b0] sm:$0xf]
  %v128 = vld [vmem:[%s1 + $0x1b4] sm:$0xf]
  %v129 = vld [vmem:[%s1 + $0x1b8] sm:$0xf]
  %v130 = vld [vmem:[%s1 + $0x1bc] sm:$0xf]
  %v131 = vld [vmem:[%s1 + $0x1c0] sm:$0xf]
  %v132 = vld [vmem:[%s1 + $0x1c4] sm:$0xf]
  %v133 = vld [vmem:[%s1 + $0x1c8] sm:$0xf]
  %v134 = vld [vmem:[%s1 + $0x1cc] sm:$0xf]
  %v135 = vld [vmem:[%s1 + $0x1d0] sm:$0xf]
  %v136 = vld [vmem:[%s1 + $0x1d4] sm:$0xf]
  %v137 = vld [vmem:[%s1 + $0x1d8] sm:$0xf]
  %v138 = vld [vmem:[%s1 + $0x1dc] sm:$0xf]
  %v139 = vld [vmem:[%s1 + $0x1e0] sm:$0xf]
  %v140 = vld [vmem:[%s1 + $0x1e4] sm:$0xf]
  %v141 = vld [vmem:[%s1 + $0x1e8] sm:$0xf]
  %v142 = vld [vmem:[%s1 + $0x1ec] sm:$0xf]
  %v143 = vld [vmem:[%s1 + $0x1f0] sm:$0xf]
  %v144 = vld [vmem:[%s1 + $0x1f4] sm:$0xf]
  %v145 = vld [vmem:[%s1 + $0x1f8] sm:$0xf]
  %v146 = vld [vmem:[%s1 + $0x1fc] sm:$0xf]
  %v147 = vld [vmem:[%s1 + $0x200] sm:$0xf]
  %v148 = vld [vmem:[%s1 + $0x204] sm:$0xf]
  %v149 = vld [vmem:[%s1 + $0x208] sm:$0xf]
  %v150 = vld [vmem:[%s1 + $0x20c] sm:$0xf]
  %v151 = vld [vmem:[%s1 + $0x210] sm:$0xf]
  %v152 = vld [vmem:[%s1 + $0x214] sm:$0xf]
  %v153 = vld [vmem:[%s1 + $0x218] sm:$0xf]
  %v154 = vld [vmem:[%s1 + $0x21c] sm:$0xf]
  %v155 = vld [vmem:[%s1 + $0x220] sm:$0xf]
  %v156 = vld [vmem:[%s1 + $0x224] sm:$0xf]
  %v157 = vld [vmem:[%s1 + $0x228] sm:$0xf]
  %v158 = vld [vmem:[%s1 + $0x22c] sm:$0xf]
  %v159 = vld [vmem:[%s1 + $0x230] sm:$0xf]
  %v160 = vld [vmem:[%s1 + $0x234] sm:$0xf]
  %v161 = vld [vmem:[%s1 + $0x238] sm:$0xf]
  %v162 = vld [vmem:[%s1 + $0x23c] sm:$0xf]
  %v163 = vld [vmem:[%s1 + $0x240] sm:$0xf]
  %v164 = vld [vmem:[%s1 + $0x244] sm:$0xf]
  %v165 = vld [vmem:[%s1 + $0x248] sm:$0xf]
  %v166 = vld [vmem:[%s1 + $0x24c] sm:$0xf]
  %v167 = vld [vmem:[%s1 + $0x250] sm:$0xf]
  %v168 = vld [vmem:[%s1 + $0x254] sm:$0xf]
  %v169 = vld [vmem:[%s1 + $0x258] sm:$0xf]
  %v170 = vld [vmem:[%s1 + $0x25c] sm:$0xf]
  %v171 = vld [vmem:[%s1 + $0x260] sm:$0xf]
  %v172 = vld [vmem:[%s1 + $0x264] sm:$0xf]
  %v173 = vld [vmem:[%s1 + $0x268] sm:$0xf]
  %v174 = vld [vmem:[%s1 + $0x26c] sm:$0xf]
  %v175 = vld [vmem:[%s1 + $0x270] sm:$0xf]
  %v176 = vld [vmem:[%s1 + $0x274] sm:$0xf]
  %v177 = vld [vmem:[%s1 + $0x278] sm:$0xf]
  %v178 = vld [vmem:[%s1 + $0x27c] sm:$0xf]
  %v179 = vld [vmem:[%s1 + $0x280] sm:$0xf]
  %v180 = vld [vmem:[%s1 + $0x284] sm:$0xf]
  %v181 = vld [vmem:[%s1 + $0x288] sm:$0xf]
  %v182 = vld [vmem:[%s1 + $0x28c] sm:$0xf]
  %v183 = vld [vmem:[%s1 + $0x290] sm:$0xf]
  %v184 = vld [vmem:[%s1 + $0x294] sm:$0xf]
  %v185 = vld [vmem:[%s1 + $0x298] sm:$0xf]
  %v186 = vld [vmem:[%s1 + $0x29c] sm:$0xf]
  %v187 = vld [vmem:[%s1 + $0x2a0] sm:$0xf]
  %v188 = vld [vmem:[%s1 + $0x2a4] sm:$0xf]
  %v189 = vld [vmem:[%s1 + $0x2a8] sm:$0xf]
  %v190 = vld [vmem:[%s1 + $0x2ac] sm:$0xf]
  %v191 = vld [vmem:[%s1 + $0x2b0] sm:$0xf]
  %v192 = vld [vmem:[%s1 + $0x2b4] sm:$0xf]
  %v193 = vld [vmem:[%s1 + $0x2b8] sm:$0xf]
  %v194 = vld [vmem:[%s1 + $0x2bc] sm:$0xf]
  %v195 = vld [vmem:[%s1 + $0x2c0] sm:$0xf]
  %v196 = vld [vmem:[%s1 + $0x2c4] sm:$0xf]
  %v197 = vld [vmem:[%s1 + $0x2c8] sm:$0xf]
  %v198 = vld [vmem:[%s1 + $0x2cc] sm:$0xf]
  %v199 = vld [vmem:[%s1 + $0x2d0] sm:$0xf]
  %v200 = vld [vmem:[%s1 + $0x2d4] sm:$0xf]
  %v201 = vld [vmem:[%s1 + $0x2d8] sm:$0xf]
  %v202 = vld [vmem:[%s1 + $0x2dc] sm:$0xf]
  %v203 = vld [vmem:[%s1 + $0x2e0] sm:$0xf]
  %v204 = vld [vmem:[%s1 + $0x2e4] sm:$0xf]
  %v205 = vld [vmem:[%s1 + $0x2e8] sm:$0xf]
  %v206 = vld [vmem:[%s1 + $0x2ec] sm:$0xf]
  %v207 = vld [vmem:[%s1 + $0x2f0] sm:$0xf]
  %v208 = vld [vmem:[%s1 + $0x2f4] sm:$0xf]
  %v209 = vld [vmem:[%s1 + $0x2f8] sm:$0xf]
  %v210 = vld [vmem:[%s1 + $0x2fc] sm:$0xf]
  %v211 = vld [vmem:[%s1 + $0x300] sm:$0xf]
  %v212 = vld [vmem:[%s1 + $0x304] sm:$0xf]
  %v213 = vld [vmem:[%s1 + $0x308] sm:$0xf]
  %v214 = vld [vmem:[%s1 + $0x30c] sm:$0xf]
  %v215 = vld [vmem:[%s1 + $0x310] sm:$0xf]
  %v216 = vld [vmem:[%s1 + $0x314] sm:$0xf]
  %v217 = vld [vmem:[%s1 + $0x318] sm:$0xf]
  %v218 = vld [vmem:[%s1 + $0x31c] sm:$0xf]
  %v219 = vld [vmem:[%s1 + $0x320] sm:$0xf]
  %v220 = vld [vmem:[%s1 + $0x324] sm:$0xf]
  %v221 = vld [vmem:[%s1 + $0x328] sm:$0xf]
  %v222 = vld [vmem:[%s1 + $0x32c] sm:$0xf]
  %v223 = vld [vmem:[%s1 + $0x330] sm:$0xf]
  %v224 = vld [vmem:[%s1 + $0x334] sm:$0xf]
  %v225 = vld [vmem:[%s1 + $0x338] sm:$0xf]
  %v226 = vld [vmem:[%s1 + $0x33c] sm:$0xf]
  %v227 = vld [vmem:[%s1 + $0x340] sm:$0xf]
  %v228 = vld [vmem:[%s1 + $0x344] sm:$0xf]
  %v229 = vld [vmem:[%s1 + $0x348] sm:$0xf]
  %v230 = vld [vmem:[%s1 + $0x34c] sm:$0xf]
  %v231 = vld [vmem:[%s1 + $0x350] sm:$0xf]
  %v232 = vld [vmem:[%s1 + $0x354] sm:$0xf]
  %v233 = vld [vmem:[%s1 + $0x358] sm:$0xf]
  %v234 = vld [vmem:[%s1 + $0x35c] sm:$0xf]
  %v235 = vld [vmem:[%s1 + $0x360] sm:$0xf]
  %v236 = vld [vmem:[%s1 + $0x364] sm:$0xf]
  %v237 = vld [vmem:[%s1 + $0x368] sm:$0xf]
  %v238 = vld [vmem:[%s1 + $0x36c] sm:$0xf]
  %v239 = vld [vmem:[%s1 + $0x370] sm:$0xf]
  %v240 = vld [vmem:[%s1 + $0x374] sm:$0xf]
  %v241 = vld [vmem:[%s1 + $0x378] sm:$0xf]
  %v242 = vld [vmem:[%s1 + $0x37c] sm:$0xf]
  %v243 = vld [vmem:[%s1 + $0x380] sm:$0xf]
  %v244 = vld [vmem:[%s1 + $0x384] sm:$0xf]
  %v245 = vld [vmem:[%s1 + $0x388] sm:$0xf]
  %v246 = vld [vmem:[%s1 + $0x38c] sm:$0xf]
  %v247 = vld [vmem:[%s1 + $0x390] sm:$0xf]
  %v248 = vld [vmem:[%s1 + $0x394] sm:$0xf]
  %v249 = vld [vmem:[%s1 + $0x398] sm:$0xf]
  %v250 = vld [vmem:[%s1 + $0x39c] sm:$0xf]
  %v251 = vld [vmem:[%s1 + $0x3a0] sm:$0xf]
  %v252 = vld [vmem:[%s1 + $0x3a4] sm:$0xf]
  %v253 = vld [vmem:[%s1 + $0x3a8] sm:$0xf]
  %v254 = vld [vmem:[%s1 + $0x3ac] sm:$0xf]
  %v255 = vld [vmem:[%s1 + $0x3b0] sm:$0xf]
  %v256 = vld [vmem:[%s1 + $0x3b4] sm:$0xf]
  %v257 = vld [vmem:[%s1 + $0x3b8] sm:$0xf]
  %v258 = vld [vmem:[%s1 + $0x3bc] sm:$0xf]
  %v259 = vld [vmem:[%s1 + $0x3c0] sm:$0xf]
  %v260 = vld [vmem:[%s1 + $0x3c4] sm:$0xf]
  %v261 = vld [vmem:[%s1 + $0x3c8] sm:$0xf]
  %v262 = vld [vmem:[%s1 + $0x3cc] sm:$0xf]
  %v263 = vld [vmem:[%s1 + $0x3d0] sm:$0xf]
  %v264 = vld [vmem:[%s1 + $0x3d4] sm:$0xf]
  %v265 = vld [vmem:[%s1 + $0x3d8] sm:$0xf]
  %v266 = vld [vmem:[%s1 + $0x3dc] sm:$0xf]
  %v267 = vld [vmem:[%s1 + $0x3e0] sm:$0xf]
  %v268 = vld [vmem:[%s1 + $0x3e4] sm:$0xf]
  %v269 = vld [vmem:[%s1 + $0x3e8] sm:$0xf]
  %v270 = vld [vmem:[%s1 + $0x3ec] sm:$0xf]
  %v271 = vld [vmem:[%s1 + $0x3f0] sm:$0xf]
  %v272 = vld [vmem:[%s1 + $0x3f4] sm:$0xf]
  %v273 = vld [vmem:[%s1 + $0x3f8] sm:$0xf]
  %v274 = vld [vmem:[%s1 + $0x3fc] sm:$0xf]
  %v275 = vld [vmem:[%s1 + $0x400] sm:$0xf]
  %v276 = vld [vmem:[%s1 + $0x404] sm:$0xf]
  %v277 = vld [vmem:[%s1 + $0x408] sm:$0xf]
  %v278 = vld [vmem:[%s1 + $0x40c] sm:$0xf]
  %v279 = vld [vmem:[%s1 + $0x410] sm:$0xf]
  %v280 = vld [vmem:[%s1 + $0x414] sm:$0xf]
  %v281 = vld [vmem:[%s1 + $0x418] sm:$0xf]
  %v282 = vld [vmem:[%s1 + $0x41c] sm:$0xf]
  %v283 = vld [vmem:[%s1 + $0x420] sm:$0xf]
  %v284 = vld [vmem:[%s1 + $0x424] sm:$0xf]
  %v285 = vld [vmem:[%s1 + $0x428] sm:$0xf]
  %v286 = vld [vmem:[%s1 + $0x42c] sm:$0xf]
  %v287 = vld [vmem:[%s1 + $0x430] sm:$0xf]
  %v288 = vld [vmem:[%s1 + $0x434] sm:$0xf]
  %v289 = vld [vmem:[%s1 + $0x438] sm:$0xf]
  %v290 = vld [vmem:[%s1 + $0x43c] sm:$0xf]
  %v291 = vld [vmem:[%s1 + $0x440] sm:$0xf]
  %v292 = vld [vmem:[%s1 + $0x444] sm:$0xf]
  %v293 = vld [vmem:[%s1 + $0x448] sm:$0xf]
  %v294 = vld [vmem:[%s1 + $0x44c] sm:$0xf]
  %v295 = vld [vmem:[%s1 + $0x450] sm:$0xf]
  %v296 = vld [vmem:[%s1 + $0x454] sm:$0xf]
  %v297 = vld [vmem:[%s1 + $0x458] sm:$0xf]
  %v298 = vld [vmem:[%s1 + $0x45c] sm:$0xf]
  %v299 = vld [vmem:[%s1 + $0x460] sm:$0xf]
  %v300 = vld [vmem:[%s1 + $0x464] sm:$0xf]
  %v301 = vld [vmem:[%s1 + $0x468] sm:$0xf]
  %v302 = vld [vmem:[%s1 + $0x46c] sm:$0xf]
  %v303 = vld [vmem:[%s1 + $0x470] sm:$0xf]
  %v304 = vld [vmem:[%s1 + $0x474] sm:$0xf]
  %v305 = vld [vmem:[%s1 + $0x478] sm:$0xf]
  %v306 = vld [vmem:[%s1 + $0x47c] sm:$0xf]
  %v307 = vld [vmem:[%s1 + $0x480] sm:$0xf]
  %v308 = vld [vmem:[%s1 + $0x484] sm:$0xf]
  %v309 = vld [vmem:[%s1 + $0x488] sm:$0xf]
  %v310 = vld [vmem:[%s1 + $0x48c] sm:$0xf]
  %v311 = vld [vmem:[%s1 + $0x490] sm:$0xf]
  %v312 = vld [vmem:[%s1 + $0x494] sm:$0xf]
  %v313 = vld [vmem:[%s1 + $0x498] sm:$0xf]
  %v314 = vld [vmem:[%s1 + $0x49c] sm:$0xf]
  %v315 = vld [vmem:[%s1 + $0x4a0] sm:$0xf]
  %v316 = vld [vmem:[%s1 + $0x4a4] sm:$0xf]
  %v317 = vld [vmem:[%s1 + $0x4a8] sm:$0xf]
  %v318 = vld [vmem:[%s1 + $0x4ac] sm:$0xf]
  %v319 = vld [vmem:[%s1 + $0x4b0] sm:$0xf]
  %v320 = vld [vmem:[%s1 + $0x4b4] sm:$0xf]
  %v321 = vld [vmem:[%s1 + $0x4b8] sm:$0xf]
  %v322 = vld [vmem:[%s1 + $0x4bc] sm:$0xf]
  %v323 = vld [vmem:[%s1 + $0x4c0] sm:$0xf]
  %v324 = vld [vmem:[%s1 + $0x4c4] sm:$0xf]
  %v325 = vld [vmem:[%s1 + $0x4c8] sm:$0xf]
  %v326 = vld [vmem:[%s1 + $0x4cc] sm:$0xf]
  %v327 = vld [vmem:[%s1 + $0x4d0] sm:$0xf]
  %v328 = vld [vmem:[%s1 + $0x4d4] sm:$0xf]
  %v329 = vld [vmem:[%s1 + $0x4d8] sm:$0xf]
  %v330 = vld [vmem:[%s1 + $0x4dc] sm:$0xf]
  %v331 = vld [vmem:[%s1 + $0x4e0] sm:$0xf]
  %v332 = vld [vmem:[%s1 + $0x4e4] sm:$0xf]
  %v333 = vld [vmem:[%s1 + $0x4e8] sm:$0xf]
  %v334 = vld [vmem:[%s1 + $0x4ec] sm:$0xf]
  %v335 = vld [vmem:[%s1 + $0x4f0] sm:$0xf]
  %v336 = vld [vmem:[%s1 + $0x4f4] sm:$0xf]
  %v337 = vld [vmem:[%s1 + $0x4f8] sm:$0xf]
  %v338 = vld [vmem:[%s1 + $0x4fc] sm:$0xf]
  %v339 = vld [vmem:[%s1 + $0x500] sm:$0xf]
  %v340 = vld [vmem:[%s1 + $0x504] sm:$0xf]
  %v341 = vld [vmem:[%s1 + $0x508] sm:$0xf]
  %v342 = vld [vmem:[%s1 + $0x50c] sm:$0xf]
  %v343 = vld [vmem:[%s1 + $0x510] sm:$0xf]
  %v344 = vld [vmem:[%s1 + $0x514] sm:$0xf]
  %v345 = vld [vmem:[%s1 + $0x518] sm:$0xf]
  %v346 = vld [vmem:[%s1 + $0x51c] sm:$0xf]
  %v347 = vld [vmem:[%s1 + $0x520] sm:$0xf]
  %v348 = vld [vmem:[%s1 + $0x524] sm:$0xf]
  %v349 = vld [vmem:[%s1 + $0x528] sm:$0xf]
  %v350 = vld [vmem:[%s1 + $0x52c] sm:$0xf]
  %v351 = vld [vmem:[%s1 + $0x530] sm:$0xf]
  %v352 = vld [vmem:[%s1 + $0x534] sm:$0xf]
  %v353 = vld [vmem:[%s1 + $0x538] sm:$0xf]
  %v354 = vld [vmem:[%s1 + $0x53c] sm:$0xf]
  %v355 = vld [vmem:[%s1 + $0x540] sm:$0xf]
  %v356 = vld [vmem:[%s1 + $0x544] sm:$0xf]
  %v357 = vld [vmem:[%s1 + $0x548] sm:$0xf]
  %v358 = vld [vmem:[%s1 + $0x54c] sm:$0xf]
  %v359 = vld [vmem:[%s1 + $0x550] sm:$0xf]
  %v360 = vld [vmem:[%s1 + $0x554] sm:$0xf]
  %v361 = vld [vmem:[%s1 + $0x558] sm:$0xf]
  %v362 = vld [vmem:[%s1 + $0x55c] sm:$0xf]
  %v363 = vld [vmem:[%s1 + $0x560] sm:$0xf]
  %v364 = vld [vmem:[%s1 + $0x564] sm:$0xf]
  %v365 = vld [vmem:[%s1 + $0x568] sm:$0xf]
  %v366 = vld [vmem:[%s1 + $0x56c] sm:$0xf]
  %v367 = vld [vmem:[%s1 + $0x570] sm:$0xf]
  %v368 = vld [vmem:[%s1 + $0x574] sm:$0xf]
  %v369 = vld [vmem:[%s1 + $0x578] sm:$0xf]
  %v370 = vld [vmem:[%s1 + $0x57c] sm:$0xf]
  %v371 = vld [vmem:[%s1 + $0x580] sm:$0xf]
  %v372 = vld [vmem:[%s1 + $0x584] sm:$0xf]
  %v373 = vld [vmem:[%s1 + $0x588] sm:$0xf]
  %v374 = vld [vmem:[%s1 + $0x58c] sm:$0xf]
  %v375 = vld [vmem:[%s1 + $0x590] sm:$0xf]
  %v376 = vld [vmem:[%s1 + $0x594] sm:$0xf]
  %v377 = vld [vmem:[%s1 + $0x598] sm:$0xf]
  %v378 = vld [vmem:[%s1 + $0x59c] sm:$0xf]
  %v379 = vld [vmem:[%s1 + $0x5a0] sm:$0xf]
  %v380 = vld [vmem:[%s1 + $0x5a4] sm:$0xf]
  %v381 = vld [vmem:[%s1 + $0x5a8] sm:$0xf]
  %v382 = vld [vmem:[%s1 + $0x5ac] sm:$0xf]
  %v383 = vld [vmem:[%s1 + $0x5b0] sm:$0xf]
  %v384 = vld [vmem:[%s1 + $0x5b4] sm:$0xf]
  %v385 = vld [vmem:[%s1 + $0x5b8] sm:$0xf]
  %v386 = vld [vmem:[%s1 + $0x5bc] sm:$0xf]
  %v387 = vld [vmem:[%s1 + $0x5c0] sm:$0xf]
  %v388 = vld [vmem:[%s1 + $0x5c4] sm:$0xf]
  %v389 = vld [vmem:[%s1 + $0x5c8] sm:$0xf]
  %v390 = vld [vmem:[%s1 + $0x5cc] sm:$0xf]
  %v391 = vld [vmem:[%s1 + $0x5d0] sm:$0xf]
  %v392 = vld [vmem:[%s1 + $0x5d4] sm:$0xf]
  %v393 = vld [vmem:[%s1 + $0x5d8] sm:$0xf]
  %v394 = vld [vmem:[%s1 + $0x5dc] sm:$0xf]
  %v395 = vld [vmem:[%s1 + $0x5e0] sm:$0xf]
  %v396 = vld [vmem:[%s1 + $0x5e4] sm:$0xf]
  %v397 = vld [vmem:[%s1 + $0x5e8] sm:$0xf]
  %v398 = vld [vmem:[%s1 + $0x5ec] sm:$0xf]
  %v399 = vld [vmem:[%s1 + $0x5f0] sm:$0xf]
  %v400 = vld [vmem:[%s1 + $0x5f4] sm:$0xf]
  %v401 = vld [vmem:[%s1 + $0x5f8] sm:$0xf]
  %v402 = vld [vmem:[%s1 + $0x5fc] sm:$0xf]
  %v403 = vld [vmem:[%s1 + $0x600] sm:$0xf]
  %v404 = vld [vmem:[%s1 + $0x604] sm:$0xf]
  %v405 = vld [vmem:[%s1 + $0x608] sm:$0xf]
  %v406 = vld [vmem:[%s1 + $0x60c] sm:$0xf]
  %v407 = vld [vmem:[%s1 + $0x610] sm:$0xf]
  %v408 = vld [vmem:[%s1 + $0x614] sm:$0xf]
  %v409 = vld [vmem:[%s1 + $0x618] sm:$0xf]
  %v410 = vld [vmem:[%s1 + $0x61c] sm:$0xf]
  %v411 = vld [vmem:[%s1 + $0x620] sm:$0xf]
  %v412 = vld [vmem:[%s1 + $0x624] sm:$0xf]
  %v413 = vld [vmem:[%s1 + $0x628] sm:$0xf]
  %v414 = vld [vmem:[%s1 + $0x62c] sm:$0xf]
  %v415 = vld [vmem:[%s1 + $0x630] sm:$0xf]
  %v416 = vld [vmem:[%s1 + $0x634] sm:$0xf]
  %v417 = vld [vmem:[%s1 + $0x638] sm:$0xf]
  %v418 = vld [vmem:[%s1 + $0x63c] sm:$0xf]
  %v419 = vld [vmem:[%s2] sm:$0x1]
  %v421 = vlaneseq
  %v422 = vshrl.u32 %v421, 7
  %v423 = vsub.s32 0, %v422
  %v424 = vrot.slane %v419, %v423
  %v430 = vcombine.high %v15, %v15
  %v432 = vunpack.c.l.s4 1966171168
  %v433 = vunpack.c.0.s8 %v432
  %v434 = vlaneseq
  %v435 = vshrl.u32 %v434, 7
  %v436 = vsub.s32 %v433, %v435
  %v437 = vrot.slane %v15, %v436
  %v439 = vunpack.c.l.s4 1966171168
  %v440 = vunpack.c.0.s8 %v439
  %v441 = vlaneseq
  %v442 = vshrl.u32 %v441, 7
  %v443 = vsub.s32 %v440, %v442
  %v444 = vrot.slane %v430, %v443
  %v445 = vcombine.high %v437, %v437
  %v446 = vcombine.high %v444, %v444
  %v448 = vunpack.c.l.s4 1966171168
  %v449 = vunpack.c.0.s8 %v448
  %v450 = vlaneseq
  %v451 = vshrl.u32 %v450, 7
  %v452 = vsub.s32 %v449, %v451
  %v453 = vrot.slane %v437, %v452
  %v455 = vunpack.c.l.s4 1966171168
  %v456 = vunpack.c.0.s8 %v455
  %v457 = vlaneseq
  %v458 = vshrl.u32 %v457, 7
  %v459 = vsub.s32 %v456, %v458
  %v460 = vrot.slane %v444, %v459
  %v462 = vunpack.c.l.s4 1966171168
  %v463 = vunpack.c.0.s8 %v462
  %v464 = vlaneseq
  %v465 = vshrl.u32 %v464, 7
  %v466 = vsub.s32 %v463, %v465
  %v467 = vrot.slane %v445, %v466
  %v469 = vunpack.c.l.s4 1966171168
  %v470 = vunpack.c.0.s8 %v469
  %v471 = vlaneseq
  %v472 = vshrl.u32 %v471, 7
  %v473 = vsub.s32 %v470, %v472
  %v474 = vrot.slane %v446, %v473
  %v475 = vcombine.high %v453, %v453
  %v476 = vcombine.high %v460, %v460
  %v477 = vcombine.high %v467, %v467
  %v478 = vcombine.high %v474, %v474
  %v479 = vcombine.high %v16, %v16
  %v481 = vunpack.c.l.s4 1966171168
  %v482 = vunpack.c.0.s8 %v481
  %v483 = vlaneseq
  %v484 = vshrl.u32 %v483, 7
  %v485 = vsub.s32 %v482, %v484
  %v486 = vrot.slane %v16, %v485
  %v488 = vunpack.c.l.s4 1966171168
  %v489 = vunpack.c.0.s8 %v488
  %v490 = vlaneseq
  %v491 = vshrl.u32 %v490, 7
  %v492 = vsub.s32 %v489, %v491
  %v493 = vrot.slane %v479, %v492
  %v494 = vcombine.high %v486, %v486
  %v495 = vcombine.high %v493, %v493
  %v497 = vunpack.c.l.s4 1966171168
  %v498 = vunpack.c.0.s8 %v497
  %v499 = vlaneseq
  %v500 = vshrl.u32 %v499, 7
  %v501 = vsub.s32 %v498, %v500
  %v502 = vrot.slane %v486, %v501
  %v504 = vunpack.c.l.s4 1966171168
  %v505 = vunpack.c.0.s8 %v504
  %v506 = vlaneseq
  %v507 = vshrl.u32 %v506, 7
  %v508 = vsub.s32 %v505, %v507
  %v509 = vrot.slane %v493, %v508
  %v511 = vunpack.c.l.s4 1966171168
  %v512 = vunpack.c.0.s8 %v511
  %v513 = vlaneseq
  %v514 = vshrl.u32 %v513, 7
  %v515 = vsub.s32 %v512, %v514
  %v516 = vrot.slane %v494, %v515
  %v518 = vunpack.c.l.s4 1966171168
  %v519 = vunpack.c.0.s8 %v518
  %v520 = vlaneseq
  %v521 = vshrl.u32 %v520, 7
  %v522 = vsub.s32 %v519, %v521
  %v523 = vrot.slane %v495, %v522
  %v524 = vcombine.high %v502, %v502
  %v525 = vcombine.high %v509, %v509
  %v526 = vcombine.high %v516, %v516
  %v527 = vcombine.high %v523, %v523
  %v528 = vcombine.high %v17, %v17
  %v530 = vunpack.c.l.s4 1966171168
  %v531 = vunpack.c.0.s8 %v530
  %v532 = vlaneseq
  %v533 = vshrl.u32 %v532, 7
  %v534 = vsub.s32 %v531, %v533
  %v535 = vrot.slane %v17, %v534
  %v537 = vunpack.c.l.s4 1966171168
  %v538 = vunpack.c.0.s8 %v537
  %v539 = vlaneseq
  %v540 = vshrl.u32 %v539, 7
  %v541 = vsub.s32 %v538, %v540
  %v542 = vrot.slane %v528, %v541
  %v543 = vcombine.high %v535, %v535
  %v544 = vcombine.high %v542, %v542
  %v546 = vunpack.c.l.s4 1966171168
  %v547 = vunpack.c.0.s8 %v546
  %v548 = vlaneseq
  %v549 = vshrl.u32 %v548, 7
  %v550 = vsub.s32 %v547, %v549
  %v551 = vrot.slane %v535, %v550
  %v553 = vunpack.c.l.s4 1966171168
  %v554 = vunpack.c.0.s8 %v553
  %v555 = vlaneseq
  %v556 = vshrl.u32 %v555, 7
  %v557 = vsub.s32 %v554, %v556
  %v558 = vrot.slane %v542, %v557
  %v560 = vunpack.c.l.s4 1966171168
  %v561 = vunpack.c.0.s8 %v560
  %v562 = vlaneseq
  %v563 = vshrl.u32 %v562, 7
  %v564 = vsub.s32 %v561, %v563
  %v565 = vrot.slane %v543, %v564
  %v567 = vunpack.c.l.s4 1966171168
  %v568 = vunpack.c.0.s8 %v567
  %v569 = vlaneseq
  %v570 = vshrl.u32 %v569, 7
  %v571 = vsub.s32 %v568, %v570
  %v572 = vrot.slane %v544, %v571
  %v573 = vcombine.high %v551, %v551
  %v574 = vcombine.high %v558, %v558
  %v575 = vcombine.high %v565, %v565
  %v576 = vcombine.high %v572, %v572
  %v578 = vunpack.c.l.s4 1966171168
  %v579 = vunpack.c.0.s8 %v578
  %v580 = vlaneseq
  %v581 = vshrl.u32 %v580, 7
  %v582 = vsub.s32 %v579, %v581
  %v583 = vrot.slane %v18, %v582
  %v585 = vunpack.c.l.s4 1966171168
  %v586 = vunpack.c.0.s8 %v585
  %v587 = vlaneseq
  %v588 = vshrl.u32 %v587, 7
  %v589 = vsub.s32 %v586, %v588
  %v590 = vrot.slane %v583, %v589
  %v1016 = vunpack.c.l.b16 %v19
  %v1017 = vunpack.c.l.b16 %v20
  %v1018 = vunpack.c.l.b16 %v21
  %v1019 = vunpack.c.l.b16 %v22
  %v1020 = vunpack.c.l.b16 %v23
  %v1021 = vunpack.c.l.b16 %v24
  %v1022 = vunpack.c.l.b16 %v25
  %v1023 = vunpack.c.l.b16 %v26
  %v1024 = vunpack.c.l.b16 %v27
  %v1025 = vunpack.c.l.b16 %v28
  %v1026 = vunpack.c.l.b16 %v29
  %v1027 = vunpack.c.l.b16 %v30
  %v1028 = vunpack.c.l.b16 %v31
  %v1029 = vunpack.c.l.b16 %v32
  %v1030 = vunpack.c.l.b16 %v33
  %v1031 = vunpack.c.l.b16 %v34
  %v1032 = vunpack.c.l.b16 %v35
  %v1033 = vunpack.c.l.b16 %v36
  %v1034 = vunpack.c.l.b16 %v37
  %v1035 = vunpack.c.l.b16 %v38
  %v1036 = vunpack.c.l.b16 %v39
  %v1037 = vunpack.c.l.b16 %v40
  %v1038 = vunpack.c.l.b16 %v41
  %v1039 = vunpack.c.l.b16 %v42
  %v1040 = vunpack.c.l.b16 %v43
  %v1041 = vunpack.c.l.b16 %v44
  %v1042 = vunpack.c.l.b16 %v45
  %v1043 = vunpack.c.l.b16 %v46
  %v1044 = vunpack.c.l.b16 %v47
  %v1045 = vunpack.c.l.b16 %v48
  %v1046 = vunpack.c.l.b16 %v49
  %v1047 = vunpack.c.l.b16 %v50
  %v1048 = vunpack.c.l.b16 %v51
  %v1049 = vunpack.c.l.b16 %v52
  %v1050 = vunpack.c.l.b16 %v53
  %v1051 = vunpack.c.l.b16 %v54
  %v1052 = vunpack.c.l.b16 %v55
  %v1053 = vunpack.c.l.b16 %v56
  %v1054 = vunpack.c.l.b16 %v57
  %v1055 = vunpack.c.l.b16 %v58
  %v1056 = vunpack.c.l.b16 %v59
  %v1057 = vunpack.c.l.b16 %v60
  %v1058 = vunpack.c.l.b16 %v61
  %v1059 = vunpack.c.l.b16 %v62
  %v1060 = vunpack.c.l.b16 %v63
  %v1061 = vunpack.c.l.b16 %v64
  %v1062 = vunpack.c.l.b16 %v65
  %v1063 = vunpack.c.l.b16 %v66
  %v1064 = vunpack.c.l.b16 %v67
  %v1065 = vunpack.c.l.b16 %v68
  %v1066 = vunpack.c.l.b16 %v69
  %v1067 = vunpack.c.l.b16 %v70
  %v1068 = vunpack.c.l.b16 %v71
  %v1069 = vunpack.c.l.b16 %v72
  %v1070 = vunpack.c.l.b16 %v73
  %v1071 = vunpack.c.l.b16 %v74
  %v1072 = vunpack.c.l.b16 %v75
  %v1073 = vunpack.c.l.b16 %v76
  %v1074 = vunpack.c.l.b16 %v77
  %v1075 = vunpack.c.l.b16 %v78
  %v1076 = vunpack.c.l.b16 %v79
  %v1077 = vunpack.c.l.b16 %v80
  %v1078 = vunpack.c.l.b16 %v81
  %v1079 = vunpack.c.l.b16 %v82
  %v1080 = vunpack.c.l.b16 %v83
  %v1081 = vunpack.c.l.b16 %v84
  %v1082 = vunpack.c.l.b16 %v85
  %v1083 = vunpack.c.l.b16 %v86
  %v1084 = vunpack.c.l.b16 %v87
  %v1085 = vunpack.c.l.b16 %v88
  %v1086 = vunpack.c.l.b16 %v89
  %v1087 = vunpack.c.l.b16 %v90
  %v1088 = vunpack.c.l.b16 %v91
  %v1089 = vunpack.c.l.b16 %v92
  %v1090 = vunpack.c.l.b16 %v93
  %v1091 = vunpack.c.l.b16 %v94
  %v1092 = vunpack.c.l.b16 %v95
  %v1093 = vunpack.c.l.b16 %v96
  %v1094 = vunpack.c.l.b16 %v97
  %v1095 = vunpack.c.l.b16 %v98
  %v1096 = vunpack.c.l.b16 %v99
  %v1097 = vunpack.c.l.b16 %v100
  %v1098 = vunpack.c.l.b16 %v101
  %v1099 = vunpack.c.l.b16 %v102
  %v1100 = vunpack.c.l.b16 %v103
  %v1101 = vunpack.c.l.b16 %v104
  %v1102 = vunpack.c.l.b16 %v105
  %v1103 = vunpack.c.l.b16 %v106
  %v1104 = vunpack.c.l.b16 %v107
  %v1105 = vunpack.c.l.b16 %v108
  %v1106 = vunpack.c.l.b16 %v109
  %v1107 = vunpack.c.l.b16 %v110
  %v1108 = vunpack.c.l.b16 %v111
  %v1109 = vunpack.c.l.b16 %v112
  %v1110 = vunpack.c.l.b16 %v113
  %v1111 = vunpack.c.l.b16 %v114
  %v1112 = vunpack.c.l.b16 %v115
  %v1113 = vunpack.c.l.b16 %v116
  %v1114 = vunpack.c.l.b16 %v117
  %v1115 = vunpack.c.l.b16 %v118
  %v1116 = vunpack.c.l.b16 %v119
  %v1117 = vunpack.c.l.b16 %v120
  %v1118 = vunpack.c.l.b16 %v121
  %v1119 = vunpack.c.l.b16 %v122
  %v1120 = vunpack.c.l.b16 %v123
  %v1121 = vunpack.c.l.b16 %v124
  %v1122 = vunpack.c.l.b16 %v125
  %v1123 = vunpack.c.l.b16 %v126
  %v1124 = vunpack.c.l.b16 %v127
  %v1125 = vunpack.c.l.b16 %v128
  %v1126 = vunpack.c.l.b16 %v129
  %v1127 = vunpack.c.l.b16 %v130
  %v1128 = vunpack.c.l.b16 %v131
  %v1129 = vunpack.c.l.b16 %v132
  %v1130 = vunpack.c.l.b16 %v133
  %v1131 = vunpack.c.l.b16 %v134
  %v1132 = vunpack.c.l.b16 %v135
  %v1133 = vunpack.c.l.b16 %v136
  %v1134 = vunpack.c.l.b16 %v137
  %v1135 = vunpack.c.l.b16 %v138
  %v1136 = vunpack.c.l.b16 %v139
  %v1137 = vunpack.c.l.b16 %v140
  %v1138 = vunpack.c.l.b16 %v141
  %v1139 = vunpack.c.l.b16 %v142
  %v1140 = vunpack.c.l.b16 %v143
  %v1141 = vunpack.c.l.b16 %v144
  %v1142 = vunpack.c.l.b16 %v145
  %v1143 = vunpack.c.l.b16 %v146
  %v1144 = vunpack.c.l.b16 %v147
  %v1145 = vunpack.c.l.b16 %v148
  %v1146 = vunpack.c.l.b16 %v149
  %v1147 = vunpack.c.l.b16 %v150
  %v1148 = vunpack.c.l.b16 %v151
  %v1149 = vunpack.c.l.b16 %v152
  %v1150 = vunpack.c.l.b16 %v153
  %v1151 = vunpack.c.l.b16 %v154
  %v1152 = vunpack.c.l.b16 %v155
  %v1153 = vunpack.c.l.b16 %v156
  %v1154 = vunpack.c.l.b16 %v157
  %v1155 = vunpack.c.l.b16 %v158
  %v1156 = vunpack.c.l.b16 %v159
  %v1157 = vunpack.c.l.b16 %v160
  %v1158 = vunpack.c.l.b16 %v161
  %v1159 = vunpack.c.l.b16 %v162
  %v1160 = vunpack.c.l.b16 %v163
  %v1161 = vunpack.c.l.b16 %v164
  %v1162 = vunpack.c.l.b16 %v165
  %v1163 = vunpack.c.l.b16 %v166
  %v1164 = vunpack.c.l.b16 %v167
  %v1165 = vunpack.c.l.b16 %v168
  %v1166 = vunpack.c.l.b16 %v169
  %v1167 = vunpack.c.l.b16 %v170
  %v1168 = vunpack.c.l.b16 %v171
  %v1169 = vunpack.c.l.b16 %v172
  %v1170 = vunpack.c.l.b16 %v173
  %v1171 = vunpack.c.l.b16 %v174
  %v1172 = vunpack.c.l.b16 %v175
  %v1173 = vunpack.c.l.b16 %v176
  %v1174 = vunpack.c.l.b16 %v177
  %v1175 = vunpack.c.l.b16 %v178
  %v1176 = vunpack.c.l.b16 %v179
  %v1177 = vunpack.c.l.b16 %v180
  %v1178 = vunpack.c.l.b16 %v181
  %v1179 = vunpack.c.l.b16 %v182
  %v1180 = vunpack.c.l.b16 %v183
  %v1181 = vunpack.c.l.b16 %v184
  %v1182 = vunpack.c.l.b16 %v185
  %v1183 = vunpack.c.l.b16 %v186
  %v1184 = vunpack.c.l.b16 %v187
  %v1185 = vunpack.c.l.b16 %v188
  %v1186 = vunpack.c.l.b16 %v189
  %v1187 = vunpack.c.l.b16 %v190
  %v1188 = vunpack.c.l.b16 %v191
  %v1189 = vunpack.c.l.b16 %v192
  %v1190 = vunpack.c.l.b16 %v193
  %v1191 = vunpack.c.l.b16 %v194
  %v1192 = vunpack.c.l.b16 %v195
  %v1193 = vunpack.c.l.b16 %v196
  %v1194 = vunpack.c.l.b16 %v197
  %v1195 = vunpack.c.l.b16 %v198
  %v1196 = vunpack.c.l.b16 %v199
  %v1197 = vunpack.c.l.b16 %v200
  %v1198 = vunpack.c.l.b16 %v201
  %v1199 = vunpack.c.l.b16 %v202
  %v1200 = vunpack.c.l.b16 %v203
  %v1201 = vunpack.c.l.b16 %v204
  %v1202 = vunpack.c.l.b16 %v205
  %v1203 = vunpack.c.l.b16 %v206
  %v1204 = vunpack.c.l.b16 %v207
  %v1205 = vunpack.c.l.b16 %v208
  %v1206 = vunpack.c.l.b16 %v209
  %v1207 = vunpack.c.l.b16 %v210
  %v1208 = vunpack.c.l.b16 %v211
  %v1209 = vunpack.c.l.b16 %v212
  %v1210 = vunpack.c.l.b16 %v213
  %v1211 = vunpack.c.l.b16 %v214
  %v1212 = vunpack.c.l.b16 %v215
  %v1213 = vunpack.c.l.b16 %v216
  %v1214 = vunpack.c.l.b16 %v217
  %v1215 = vunpack.c.l.b16 %v218
  %v1216 = vunpack.c.l.b16 %v219
  %v1217 = vunpack.c.l.b16 %v220
  %v1218 = vunpack.c.l.b16 %v221
  %v1219 = vunpack.c.l.b16 %v222
  %v1220 = vunpack.c.l.b16 %v223
  %v1221 = vunpack.c.l.b16 %v224
  %v1222 = vunpack.c.l.b16 %v225
  %v1223 = vunpack.c.l.b16 %v226
  %v1224 = vunpack.c.l.b16 %v227
  %v1225 = vunpack.c.l.b16 %v228
  %v1226 = vunpack.c.l.b16 %v229
  %v1227 = vunpack.c.l.b16 %v230
  %v1228 = vunpack.c.l.b16 %v231
  %v1229 = vunpack.c.l.b16 %v232
  %v1230 = vunpack.c.l.b16 %v233
  %v1231 = vunpack.c.l.b16 %v234
  %v1232 = vunpack.c.l.b16 %v235
  %v1233 = vunpack.c.l.b16 %v236
  %v1234 = vunpack.c.l.b16 %v237
  %v1235 = vunpack.c.l.b16 %v238
  %v1236 = vunpack.c.l.b16 %v239
  %v1237 = vunpack.c.l.b16 %v240
  %v1238 = vunpack.c.l.b16 %v241
  %v1239 = vunpack.c.l.b16 %v242
  %v1240 = vunpack.c.l.b16 %v243
  %v1241 = vunpack.c.l.b16 %v244
  %v1242 = vunpack.c.l.b16 %v245
  %v1243 = vunpack.c.l.b16 %v246
  %v1244 = vunpack.c.l.b16 %v247
  %v1245 = vunpack.c.l.b16 %v248
  %v1246 = vunpack.c.l.b16 %v249
  %v1247 = vunpack.c.l.b16 %v250
  %v1248 = vunpack.c.l.b16 %v251
  %v1249 = vunpack.c.l.b16 %v252
  %v1250 = vunpack.c.l.b16 %v253
  %v1251 = vunpack.c.l.b16 %v254
  %v1252 = vunpack.c.l.b16 %v255
  %v1253 = vunpack.c.l.b16 %v256
  %v1254 = vunpack.c.l.b16 %v257
  %v1255 = vunpack.c.l.b16 %v258
  %v1256 = vunpack.c.l.b16 %v259
  %v1257 = vunpack.c.l.b16 %v260
  %v1258 = vunpack.c.l.b16 %v261
  %v1259 = vunpack.c.l.b16 %v262
  %v1260 = vunpack.c.l.b16 %v263
  %v1261 = vunpack.c.l.b16 %v264
  %v1262 = vunpack.c.l.b16 %v265
  %v1263 = vunpack.c.l.b16 %v266
  %v1264 = vunpack.c.l.b16 %v267
  %v1265 = vunpack.c.l.b16 %v268
  %v1266 = vunpack.c.l.b16 %v269
  %v1267 = vunpack.c.l.b16 %v270
  %v1268 = vunpack.c.l.b16 %v271
  %v1269 = vunpack.c.l.b16 %v272
  %v1270 = vunpack.c.l.b16 %v273
  %v1271 = vunpack.c.l.b16 %v274
  %v1272 = vunpack.c.l.b16 %v275
  %v1273 = vunpack.c.l.b16 %v276
  %v1274 = vunpack.c.l.b16 %v277
  %v1275 = vunpack.c.l.b16 %v278
  %v1276 = vunpack.c.l.b16 %v279
  %v1277 = vunpack.c.l.b16 %v280
  %v1278 = vunpack.c.l.b16 %v281
  %v1279 = vunpack.c.l.b16 %v282
  %v1280 = vunpack.c.l.b16 %v283
  %v1281 = vunpack.c.l.b16 %v284
  %v1282 = vunpack.c.l.b16 %v285
  %v1283 = vunpack.c.l.b16 %v286
  %v1284 = vunpack.c.l.b16 %v287
  %v1285 = vunpack.c.l.b16 %v288
  %v1286 = vunpack.c.l.b16 %v289
  %v1287 = vunpack.c.l.b16 %v290
  %v1288 = vunpack.c.l.b16 %v291
  %v1289 = vunpack.c.l.b16 %v292
  %v1290 = vunpack.c.l.b16 %v293
  %v1291 = vunpack.c.l.b16 %v294
  %v1292 = vunpack.c.l.b16 %v295
  %v1293 = vunpack.c.l.b16 %v296
  %v1294 = vunpack.c.l.b16 %v297
  %v1295 = vunpack.c.l.b16 %v298
  %v1296 = vunpack.c.l.b16 %v299
  %v1297 = vunpack.c.l.b16 %v300
  %v1298 = vunpack.c.l.b16 %v301
  %v1299 = vunpack.c.l.b16 %v302
  %v1300 = vunpack.c.l.b16 %v303
  %v1301 = vunpack.c.l.b16 %v304
  %v1302 = vunpack.c.l.b16 %v305
  %v1303 = vunpack.c.l.b16 %v306
  %v1304 = vunpack.c.l.b16 %v307
  %v1305 = vunpack.c.l.b16 %v308
  %v1306 = vunpack.c.l.b16 %v309
  %v1307 = vunpack.c.l.b16 %v310
  %v1308 = vunpack.c.l.b16 %v311
  %v1309 = vunpack.c.l.b16 %v312
  %v1310 = vunpack.c.l.b16 %v313
  %v1311 = vunpack.c.l.b16 %v314
  %v1312 = vunpack.c.l.b16 %v315
  %v1313 = vunpack.c.l.b16 %v316
  %v1314 = vunpack.c.l.b16 %v317
  %v1315 = vunpack.c.l.b16 %v318
  %v1316 = vunpack.c.l.b16 %v319
  %v1317 = vunpack.c.l.b16 %v320
  %v1318 = vunpack.c.l.b16 %v321
  %v1319 = vunpack.c.l.b16 %v322
  %v1320 = vunpack.c.l.b16 %v323
  %v1321 = vunpack.c.l.b16 %v324
  %v1322 = vunpack.c.l.b16 %v325
  %v1323 = vunpack.c.l.b16 %v326
  %v1324 = vunpack.c.l.b16 %v327
  %v1325 = vunpack.c.l.b16 %v328
  %v1326 = vunpack.c.l.b16 %v329
  %v1327 = vunpack.c.l.b16 %v330
  %v1328 = vunpack.c.l.b16 %v331
  %v1329 = vunpack.c.l.b16 %v332
  %v1330 = vunpack.c.l.b16 %v333
  %v1331 = vunpack.c.l.b16 %v334
  %v1332 = vunpack.c.l.b16 %v335
  %v1333 = vunpack.c.l.b16 %v336
  %v1334 = vunpack.c.l.b16 %v337
  %v1335 = vunpack.c.l.b16 %v338
  %v1336 = vunpack.c.l.b16 %v339
  %v1337 = vunpack.c.l.b16 %v340
  %v1338 = vunpack.c.l.b16 %v341
  %v1339 = vunpack.c.l.b16 %v342
  %v1340 = vunpack.c.l.b16 %v343
  %v1341 = vunpack.c.l.b16 %v344
  %v1342 = vunpack.c.l.b16 %v345
  %v1343 = vunpack.c.l.b16 %v346
  %v1344 = vunpack.c.l.b16 %v347
  %v1345 = vunpack.c.l.b16 %v348
  %v1346 = vunpack.c.l.b16 %v349
  %v1347 = vunpack.c.l.b16 %v350
  %v1348 = vunpack.c.l.b16 %v351
  %v1349 = vunpack.c.l.b16 %v352
  %v1350 = vunpack.c.l.b16 %v353
  %v1351 = vunpack.c.l.b16 %v354
  %v1352 = vunpack.c.l.b16 %v355
  %v1353 = vunpack.c.l.b16 %v356
  %v1354 = vunpack.c.l.b16 %v357
  %v1355 = vunpack.c.l.b16 %v358
  %v1356 = vunpack.c.l.b16 %v359
  %v1357 = vunpack.c.l.b16 %v360
  %v1358 = vunpack.c.l.b16 %v361
  %v1359 = vunpack.c.l.b16 %v362
  %v1360 = vunpack.c.l.b16 %v363
  %v1361 = vunpack.c.l.b16 %v364
  %v1362 = vunpack.c.l.b16 %v365
  %v1363 = vunpack.c.l.b16 %v366
  %v1364 = vunpack.c.l.b16 %v367
  %v1365 = vunpack.c.l.b16 %v368
  %v1366 = vunpack.c.l.b16 %v369
  %v1367 = vunpack.c.l.b16 %v370
  %v1368 = vunpack.c.l.b16 %v371
  %v1369 = vunpack.c.l.b16 %v372
  %v1370 = vunpack.c.l.b16 %v373
  %v1371 = vunpack.c.l.b16 %v374
  %v1372 = vunpack.c.l.b16 %v375
  %v1373 = vunpack.c.l.b16 %v376
  %v1374 = vunpack.c.l.b16 %v377
  %v1375 = vunpack.c.l.b16 %v378
  %v1376 = vunpack.c.l.b16 %v379
  %v1377 = vunpack.c.l.b16 %v380
  %v1378 = vunpack.c.l.b16 %v381
  %v1379 = vunpack.c.l.b16 %v382
  %v1380 = vunpack.c.l.b16 %v383
  %v1381 = vunpack.c.l.b16 %v384
  %v1382 = vunpack.c.l.b16 %v385
  %v1383 = vunpack.c.l.b16 %v386
  %v1384 = vunpack.c.l.b16 %v387
  %v1385 = vunpack.c.l.b16 %v388
  %v1386 = vunpack.c.l.b16 %v389
  %v1387 = vunpack.c.l.b16 %v390
  %v1388 = vunpack.c.l.b16 %v391
  %v1389 = vunpack.c.l.b16 %v392
  %v1390 = vunpack.c.l.b16 %v393
  %v1391 = vunpack.c.l.b16 %v394
  %v1392 = vunpack.c.l.b16 %v395
  %v1393 = vunpack.c.l.b16 %v396
  %v1394 = vunpack.c.l.b16 %v397
  %v1395 = vunpack.c.l.b16 %v398
  %v1396 = vunpack.c.l.b16 %v399
  %v1397 = vunpack.c.l.b16 %v400
  %v1398 = vunpack.c.l.b16 %v401
  %v1399 = vunpack.c.l.b16 %v402
  %v1400 = vunpack.c.l.b16 %v403
  %v1401 = vunpack.c.l.b16 %v404
  %v1402 = vunpack.c.l.b16 %v405
  %v1403 = vunpack.c.l.b16 %v406
  %v1404 = vunpack.c.l.b16 %v407
  %v1405 = vunpack.c.l.b16 %v408
  %v1406 = vunpack.c.l.b16 %v409
  %v1407 = vunpack.c.l.b16 %v410
  %v1408 = vunpack.c.l.b16 %v411
  %v1409 = vunpack.c.l.b16 %v412
  %v1410 = vunpack.c.l.b16 %v413
  %v1411 = vunpack.c.l.b16 %v414
  %v1412 = vunpack.c.l.b16 %v415
  %v1413 = vunpack.c.l.b16 %v416
  %v1414 = vunpack.c.l.b16 %v417
  %v1415 = vunpack.c.l.b16 %v418
  %v1416 = vpack.c.b16 %v1017, %v1016
  %v1417 = vpack.c.b16 %v1019, %v1018
  %v1418 = vpack.c.b16 %v1021, %v1020
  %v1419 = vpack.c.b16 %v1023, %v1022
  %v1420 = vpack.c.b16 %v1025, %v1024
  %v1421 = vpack.c.b16 %v1027, %v1026
  %v1422 = vpack.c.b16 %v1029, %v1028
  %v1423 = vpack.c.b16 %v1031, %v1030
  %v1424 = vpack.c.b16 %v1033, %v1032
  %v1425 = vpack.c.b16 %v1035, %v1034
  %v1426 = vpack.c.b16 %v1037, %v1036
  %v1427 = vpack.c.b16 %v1039, %v1038
  %v1428 = vpack.c.b16 %v1041, %v1040
  %v1429 = vpack.c.b16 %v1043, %v1042
  %v1430 = vpack.c.b16 %v1045, %v1044
  %v1431 = vpack.c.b16 %v1047, %v1046
  %v1432 = vpack.c.b16 %v1049, %v1048
  %v1433 = vpack.c.b16 %v1051, %v1050
  %v1434 = vpack.c.b16 %v1053, %v1052
  %v1435 = vpack.c.b16 %v1055, %v1054
  %v1436 = vpack.c.b16 %v1057, %v1056
  %v1437 = vpack.c.b16 %v1059, %v1058
  %v1438 = vpack.c.b16 %v1061, %v1060
  %v1439 = vpack.c.b16 %v1063, %v1062
  %v1440 = vpack.c.b16 %v1065, %v1064
  %v1441 = vpack.c.b16 %v1067, %v1066
  %v1442 = vpack.c.b16 %v1069, %v1068
  %v1443 = vpack.c.b16 %v1071, %v1070
  %v1444 = vpack.c.b16 %v1073, %v1072
  %v1445 = vpack.c.b16 %v1075, %v1074
  %v1446 = vpack.c.b16 %v1077, %v1076
  %v1447 = vpack.c.b16 %v1079, %v1078
  %v1448 = vpack.c.b16 %v1081, %v1080
  %v1449 = vpack.c.b16 %v1083, %v1082
  %v1450 = vpack.c.b16 %v1085, %v1084
  %v1451 = vpack.c.b16 %v1087, %v1086
  %v1452 = vpack.c.b16 %v1089, %v1088
  %v1453 = vpack.c.b16 %v1091, %v1090
  %v1454 = vpack.c.b16 %v1093, %v1092
  %v1455 = vpack.c.b16 %v1095, %v1094
  %v1456 = vpack.c.b16 %v1097, %v1096
  %v1457 = vpack.c.b16 %v1099, %v1098
  %v1458 = vpack.c.b16 %v1101, %v1100
  %v1459 = vpack.c.b16 %v1103, %v1102
  %v1460 = vpack.c.b16 %v1105, %v1104
  %v1461 = vpack.c.b16 %v1107, %v1106
  %v1462 = vpack.c.b16 %v1109, %v1108
  %v1463 = vpack.c.b16 %v1111, %v1110
  %v1464 = vpack.c.b16 %v1113, %v1112
  %v1465 = vpack.c.b16 %v1115, %v1114
  %v1466 = vpack.c.b16 %v1117, %v1116
  %v1467 = vpack.c.b16 %v1119, %v1118
  %v1468 = vpack.c.b16 %v1121, %v1120
  %v1469 = vpack.c.b16 %v1123, %v1122
  %v1470 = vpack.c.b16 %v1125, %v1124
  %v1471 = vpack.c.b16 %v1127, %v1126
  %v1472 = vpack.c.b16 %v1129, %v1128
  %v1473 = vpack.c.b16 %v1131, %v1130
  %v1474 = vpack.c.b16 %v1133, %v1132
  %v1475 = vpack.c.b16 %v1135, %v1134
  %v1476 = vpack.c.b16 %v1137, %v1136
  %v1477 = vpack.c.b16 %v1139, %v1138
  %v1478 = vpack.c.b16 %v1141, %v1140
  %v1479 = vpack.c.b16 %v1143, %v1142
  %v1480 = vpack.c.b16 %v1145, %v1144
  %v1481 = vpack.c.b16 %v1147, %v1146
  %v1482 = vpack.c.b16 %v1149, %v1148
  %v1483 = vpack.c.b16 %v1151, %v1150
  %v1484 = vpack.c.b16 %v1153, %v1152
  %v1485 = vpack.c.b16 %v1155, %v1154
  %v1486 = vpack.c.b16 %v1157, %v1156
  %v1487 = vpack.c.b16 %v1159, %v1158
  %v1488 = vpack.c.b16 %v1161, %v1160
  %v1489 = vpack.c.b16 %v1163, %v1162
  %v1490 = vpack.c.b16 %v1165, %v1164
  %v1491 = vpack.c.b16 %v1167, %v1166
  %v1492 = vpack.c.b16 %v1169, %v1168
  %v1493 = vpack.c.b16 %v1171, %v1170
  %v1494 = vpack.c.b16 %v1173, %v1172
  %v1495 = vpack.c.b16 %v1175, %v1174
  %v1496 = vpack.c.b16 %v1177, %v1176
  %v1497 = vpack.c.b16 %v1179, %v1178
  %v1498 = vpack.c.b16 %v1181, %v1180
  %v1499 = vpack.c.b16 %v1183, %v1182
  %v1500 = vpack.c.b16 %v1185, %v1184
  %v1501 = vpack.c.b16 %v1187, %v1186
  %v1502 = vpack.c.b16 %v1189, %v1188
  %v1503 = vpack.c.b16 %v1191, %v1190
  %v1504 = vpack.c.b16 %v1193, %v1192
  %v1505 = vpack.c.b16 %v1195, %v1194
  %v1506 = vpack.c.b16 %v1197, %v1196
  %v1507 = vpack.c.b16 %v1199, %v1198
  %v1508 = vpack.c.b16 %v1201, %v1200
  %v1509 = vpack.c.b16 %v1203, %v1202
  %v1510 = vpack.c.b16 %v1205, %v1204
  %v1511 = vpack.c.b16 %v1207, %v1206
  %v1512 = vpack.c.b16 %v1209, %v1208
  %v1513 = vpack.c.b16 %v1211, %v1210
  %v1514 = vpack.c.b16 %v1213, %v1212
  %v1515 = vpack.c.b16 %v1215, %v1214
  %v1516 = vpack.c.b16 %v1217, %v1216
  %v1517 = vpack.c.b16 %v1219, %v1218
  %v1518 = vpack.c.b16 %v1221, %v1220
  %v1519 = vpack.c.b16 %v1223, %v1222
  %v1520 = vpack.c.b16 %v1225, %v1224
  %v1521 = vpack.c.b16 %v1227, %v1226
  %v1522 = vpack.c.b16 %v1229, %v1228
  %v1523 = vpack.c.b16 %v1231, %v1230
  %v1524 = vpack.c.b16 %v1233, %v1232
  %v1525 = vpack.c.b16 %v1235, %v1234
  %v1526 = vpack.c.b16 %v1237, %v1236
  %v1527 = vpack.c.b16 %v1239, %v1238
  %v1528 = vpack.c.b16 %v1241, %v1240
  %v1529 = vpack.c.b16 %v1243, %v1242
  %v1530 = vpack.c.b16 %v1245, %v1244
  %v1531 = vpack.c.b16 %v1247, %v1246
  %v1532 = vpack.c.b16 %v1249, %v1248
  %v1533 = vpack.c.b16 %v1251, %v1250
  %v1534 = vpack.c.b16 %v1253, %v1252
  %v1535 = vpack.c.b16 %v1255, %v1254
  %v1536 = vpack.c.b16 %v1257, %v1256
  %v1537 = vpack.c.b16 %v1259, %v1258
  %v1538 = vpack.c.b16 %v1261, %v1260
  %v1539 = vpack.c.b16 %v1263, %v1262
  %v1540 = vpack.c.b16 %v1265, %v1264
  %v1541 = vpack.c.b16 %v1267, %v1266
  %v1542 = vpack.c.b16 %v1269, %v1268
  %v1543 = vpack.c.b16 %v1271, %v1270
  %v1544 = vpack.c.b16 %v1273, %v1272
  %v1545 = vpack.c.b16 %v1275, %v1274
  %v1546 = vpack.c.b16 %v1277, %v1276
  %v1547 = vpack.c.b16 %v1279, %v1278
  %v1548 = vpack.c.b16 %v1281, %v1280
  %v1549 = vpack.c.b16 %v1283, %v1282
  %v1550 = vpack.c.b16 %v1285, %v1284
  %v1551 = vpack.c.b16 %v1287, %v1286
  %v1552 = vpack.c.b16 %v1289, %v1288
  %v1553 = vpack.c.b16 %v1291, %v1290
  %v1554 = vpack.c.b16 %v1293, %v1292
  %v1555 = vpack.c.b16 %v1295, %v1294
  %v1556 = vpack.c.b16 %v1297, %v1296
  %v1557 = vpack.c.b16 %v1299, %v1298
  %v1558 = vpack.c.b16 %v1301, %v1300
  %v1559 = vpack.c.b16 %v1303, %v1302
  %v1560 = vpack.c.b16 %v1305, %v1304
  %v1561 = vpack.c.b16 %v1307, %v1306
  %v1562 = vpack.c.b16 %v1309, %v1308
  %v1563 = vpack.c.b16 %v1311, %v1310
  %v1564 = vpack.c.b16 %v1313, %v1312
  %v1565 = vpack.c.b16 %v1315, %v1314
  %v1566 = vpack.c.b16 %v1317, %v1316
  %v1567 = vpack.c.b16 %v1319, %v1318
  %v1568 = vpack.c.b16 %v1321, %v1320
  %v1569 = vpack.c.b16 %v1323, %v1322
  %v1570 = vpack.c.b16 %v1325, %v1324
  %v1571 = vpack.c.b16 %v1327, %v1326
  %v1572 = vpack.c.b16 %v1329, %v1328
  %v1573 = vpack.c.b16 %v1331, %v1330
  %v1574 = vpack.c.b16 %v1333, %v1332
  %v1575 = vpack.c.b16 %v1335, %v1334
  %v1576 = vpack.c.b16 %v1337, %v1336
  %v1577 = vpack.c.b16 %v1339, %v1338
  %v1578 = vpack.c.b16 %v1341, %v1340
  %v1579 = vpack.c.b16 %v1343, %v1342
  %v1580 = vpack.c.b16 %v1345, %v1344
  %v1581 = vpack.c.b16 %v1347, %v1346
  %v1582 = vpack.c.b16 %v1349, %v1348
  %v1583 = vpack.c.b16 %v1351, %v1350
  %v1584 = vpack.c.b16 %v1353, %v1352
  %v1585 = vpack.c.b16 %v1355, %v1354
  %v1586 = vpack.c.b16 %v1357, %v1356
  %v1587 = vpack.c.b16 %v1359, %v1358
  %v1588 = vpack.c.b16 %v1361, %v1360
  %v1589 = vpack.c.b16 %v1363, %v1362
  %v1590 = vpack.c.b16 %v1365, %v1364
  %v1591 = vpack.c.b16 %v1367, %v1366
  %v1592 = vpack.c.b16 %v1369, %v1368
  %v1593 = vpack.c.b16 %v1371, %v1370
  %v1594 = vpack.c.b16 %v1373, %v1372
  %v1595 = vpack.c.b16 %v1375, %v1374
  %v1596 = vpack.c.b16 %v1377, %v1376
  %v1597 = vpack.c.b16 %v1379, %v1378
  %v1598 = vpack.c.b16 %v1381, %v1380
  %v1599 = vpack.c.b16 %v1383, %v1382
  %v1600 = vpack.c.b16 %v1385, %v1384
  %v1601 = vpack.c.b16 %v1387, %v1386
  %v1602 = vpack.c.b16 %v1389, %v1388
  %v1603 = vpack.c.b16 %v1391, %v1390
  %v1604 = vpack.c.b16 %v1393, %v1392
  %v1605 = vpack.c.b16 %v1395, %v1394
  %v1606 = vpack.c.b16 %v1397, %v1396
  %v1607 = vpack.c.b16 %v1399, %v1398
  %v1608 = vpack.c.b16 %v1401, %v1400
  %v1609 = vpack.c.b16 %v1403, %v1402
  %v1610 = vpack.c.b16 %v1405, %v1404
  %v1611 = vpack.c.b16 %v1407, %v1406
  %v1612 = vpack.c.b16 %v1409, %v1408
  %v1613 = vpack.c.b16 %v1411, %v1410
  %v1614 = vpack.c.b16 %v1413, %v1412
  %v1615 = vpack.c.b16 %v1415, %v1414
  %1816 = vmatprep.subr.bf16.mxu0 0
  %1817 = vmatpush1.bf16.msra.mxu0 %v1416
  %1818 = vmatprep.subr.bf16.mxu0 0
  %1819 = vmatpush1.bf16.msra.mxu0 %v1417
  %1820 = vmatprep.subr.bf16.mxu0 0
  %1821 = vmatpush1.bf16.msra.mxu0 %v1418
  %1822 = vmatprep.subr.bf16.mxu0 0
  %1823 = vmatpush1.bf16.msra.mxu0 %v1419
  %1824 = vmatprep.subr.bf16.mxu0 0
  %1825 = vmatpush1.bf16.msra.mxu0 %v1420
  %1826 = vmatprep.subr.bf16.mxu0 0
  %1827 = vmatpush1.bf16.msra.mxu0 %v1421
  %1828 = vmatprep.subr.bf16.mxu0 0
  %1829 = vmatpush1.bf16.msra.mxu0 %v1422
  %1830 = vmatprep.subr.bf16.mxu0 0
  %1831 = vmatpush1.bf16.msra.mxu0 %v1423
  %1832 = vmatprep.subr.bf16.mxu0 0
  %1833 = vmatpush1.bf16.msra.mxu0 %v1424
  %1834 = vmatprep.subr.bf16.mxu0 0
  %1835 = vmatpush1.bf16.msra.mxu0 %v1425
  %1836 = vmatprep.subr.bf16.mxu0 0
  %1837 = vmatpush1.bf16.msra.mxu0 %v1426
  %1838 = vmatprep.subr.bf16.mxu0 0
  %1839 = vmatpush1.bf16.msra.mxu0 %v1427
  %1840 = vmatprep.subr.bf16.mxu0 0
  %1841 = vmatpush1.bf16.msra.mxu0 %v1428
  %1842 = vmatprep.subr.bf16.mxu0 0
  %1843 = vmatpush1.bf16.msra.mxu0 %v1429
  %1844 = vmatprep.subr.bf16.mxu0 0
  %1845 = vmatpush1.bf16.msra.mxu0 %v1430
  %1846 = vmatprep.subr.bf16.mxu0 0
  %1847 = vmatpush1.bf16.msra.mxu0 %v1431
  %1848 = vmatprep.mubr.bf16.mxu0 %v467
  %1849 = vmatmul.mubr.bf16.gmra.mrb[0].mxu0 %v453
  %v1850 = vpop.f32.mrb[0].mxu0
  %v1851 = vadd.f32 %v424, %v1850
  %v1852 = vpop.f32.mrb[0].mxu0
  %v1853 = vpop.f32.mrb[0].mxu0
  %v1854 = vpop.f32.mrb[0].mxu0
  %1855 = vdwg.mxu0
  %1856 = vmatprep.subr.bf16.mxu0 0
  %1857 = vmatpush1.bf16.msra.mxu0 %v1432
  %1858 = vmatprep.subr.bf16.mxu0 0
  %1859 = vmatpush1.bf16.msra.mxu0 %v1433
  %1860 = vmatprep.subr.bf16.mxu0 0
  %1861 = vmatpush1.bf16.msra.mxu0 %v1434
  %1862 = vmatprep.subr.bf16.mxu0 0
  %1863 = vmatpush1.bf16.msra.mxu0 %v1435
  %1864 = vmatprep.subr.bf16.mxu0 0
  %1865 = vmatpush1.bf16.msra.mxu0 %v1436
  %1866 = vmatprep.subr.bf16.mxu0 0
  %1867 = vmatpush1.bf16.msra.mxu0 %v1437
  %1868 = vmatprep.subr.bf16.mxu0 0
  %1869 = vmatpush1.bf16.msra.mxu0 %v1438
  %1870 = vmatprep.subr.bf16.mxu0 0
  %1871 = vmatpush1.bf16.msra.mxu0 %v1439
  %1872 = vmatprep.subr.bf16.mxu0 0
  %1873 = vmatpush1.bf16.msra.mxu0 %v1440
  %1874 = vmatprep.subr.bf16.mxu0 0
  %1875 = vmatpush1.bf16.msra.mxu0 %v1441
  %1876 = vmatprep.subr.bf16.mxu0 0
  %1877 = vmatpush1.bf16.msra.mxu0 %v1442
  %1878 = vmatprep.subr.bf16.mxu0 0
  %1879 = vmatpush1.bf16.msra.mxu0 %v1443
  %1880 = vmatprep.subr.bf16.mxu0 0
  %1881 = vmatpush1.bf16.msra.mxu0 %v1444
  %1882 = vmatprep.subr.bf16.mxu0 0
  %1883 = vmatpush1.bf16.msra.mxu0 %v1445
  %1884 = vmatprep.subr.bf16.mxu0 0
  %1885 = vmatpush1.bf16.msra.mxu0 %v1446
  %1886 = vmatprep.subr.bf16.mxu0 0
  %1887 = vmatpush1.bf16.msra.mxu0 %v1447
  %1888 = vmatprep.mubr.bf16.mxu0 %v477
  %1889 = vmatmul.mubr.bf16.gmra.mrb[0].mxu0 %v475
  %v1890 = vpop.f32.mrb[0].mxu0
  %v1891 = vadd.f32 %v1851, %v1890
  %v1892 = vpop.f32.mrb[0].mxu0
  %v1893 = vpop.f32.mrb[0].mxu0
  %v1894 = vpop.f32.mrb[0].mxu0
  %1895 = vdwg.mxu0
  %1896 = vmatprep.subr.bf16.mxu0 0
  %1897 = vmatpush1.bf16.msra.mxu0 %v1448
  %1898 = vmatprep.subr.bf16.mxu0 0
  %1899 = vmatpush1.bf16.msra.mxu0 %v1449
  %1900 = vmatprep.subr.bf16.mxu0 0
  %1901 = vmatpush1.bf16.msra.mxu0 %v1450
  %1902 = vmatprep.subr.bf16.mxu0 0
  %1903 = vmatpush1.bf16.msra.mxu0 %v1451
  %1904 = vmatprep.subr.bf16.mxu0 0
  %1905 = vmatpush1.bf16.msra.mxu0 %v1452
  %1906 = vmatprep.subr.bf16.mxu0 0
  %1907 = vmatpush1.bf16.msra.mxu0 %v1453
  %1908 = vmatprep.subr.bf16.mxu0 0
  %1909 = vmatpush1.bf16.msra.mxu0 %v1454
  %1910 = vmatprep.subr.bf16.mxu0 0
  %1911 = vmatpush1.bf16.msra.mxu0 %v1455
  %1912 = vmatprep.subr.bf16.mxu0 0
  %1913 = vmatpush1.bf16.msra.mxu0 %v1456
  %1914 = vmatprep.subr.bf16.mxu0 0
  %1915 = vmatpush1.bf16.msra.mxu0 %v1457
  %1916 = vmatprep.subr.bf16.mxu0 0
  %1917 = vmatpush1.bf16.msra.mxu0 %v1458
  %1918 = vmatprep.subr.bf16.mxu0 0
  %1919 = vmatpush1.bf16.msra.mxu0 %v1459
  %1920 = vmatprep.subr.bf16.mxu0 0
  %1921 = vmatpush1.bf16.msra.mxu0 %v1460
  %1922 = vmatprep.subr.bf16.mxu0 0
  %1923 = vmatpush1.bf16.msra.mxu0 %v1461
  %1924 = vmatprep.subr.bf16.mxu0 0
  %1925 = vmatpush1.bf16.msra.mxu0 %v1462
  %1926 = vmatprep.subr.bf16.mxu0 0
  %1927 = vmatpush1.bf16.msra.mxu0 %v1463
  %1928 = vmatprep.mubr.bf16.mxu0 %v474
  %1929 = vmatmul.mubr.bf16.gmra.mrb[0].mxu0 %v460
  %v1930 = vpop.f32.mrb[0].mxu0
  %v1931 = vadd.f32 %v1891, %v1930
  %v1932 = vpop.f32.mrb[0].mxu0
  %v1933 = vpop.f32.mrb[0].mxu0
  %v1934 = vpop.f32.mrb[0].mxu0
  %1935 = vdwg.mxu0
  %1936 = vmatprep.subr.bf16.mxu0 0
  %1937 = vmatpush1.bf16.msra.mxu0 %v1464
  %1938 = vmatprep.subr.bf16.mxu0 0
  %1939 = vmatpush1.bf16.msra.mxu0 %v1465
  %1940 = vmatprep.subr.bf16.mxu0 0
  %1941 = vmatpush1.bf16.msra.mxu0 %v1466
  %1942 = vmatprep.subr.bf16.mxu0 0
  %1943 = vmatpush1.bf16.msra.mxu0 %v1467
  %1944 = vmatprep.subr.bf16.mxu0 0
  %1945 = vmatpush1.bf16.msra.mxu0 %v1468
  %1946 = vmatprep.subr.bf16.mxu0 0
  %1947 = vmatpush1.bf16.msra.mxu0 %v1469
  %1948 = vmatprep.subr.bf16.mxu0 0
  %1949 = vmatpush1.bf16.msra.mxu0 %v1470
  %1950 = vmatprep.subr.bf16.mxu0 0
  %1951 = vmatpush1.bf16.msra.mxu0 %v1471
  %1952 = vmatprep.subr.bf16.mxu0 0
  %1953 = vmatpush1.bf16.msra.mxu0 %v1472
  %1954 = vmatprep.subr.bf16.mxu0 0
  %1955 = vmatpush1.bf16.msra.mxu0 %v1473
  %1956 = vmatprep.subr.bf16.mxu0 0
  %1957 = vmatpush1.bf16.msra.mxu0 %v1474
  %1958 = vmatprep.subr.bf16.mxu0 0
  %1959 = vmatpush1.bf16.msra.mxu0 %v1475
  %1960 = vmatprep.subr.bf16.mxu0 0
  %1961 = vmatpush1.bf16.msra.mxu0 %v1476
  %1962 = vmatprep.subr.bf16.mxu0 0
  %1963 = vmatpush1.bf16.msra.mxu0 %v1477
  %1964 = vmatprep.subr.bf16.mxu0 0
  %1965 = vmatpush1.bf16.msra.mxu0 %v1478
  %1966 = vmatprep.subr.bf16.mxu0 0
  %1967 = vmatpush1.bf16.msra.mxu0 %v1479
  %1968 = vmatprep.mubr.bf16.mxu0 %v478
  %1969 = vmatmul.mubr.bf16.gmra.mrb[0].mxu0 %v476
  %v1970 = vpop.f32.mrb[0].mxu0
  %v1971 = vadd.f32 %v1931, %v1970
  %v1972 = vpop.f32.mrb[0].mxu0
  %v1973 = vpop.f32.mrb[0].mxu0
  %v1974 = vpop.f32.mrb[0].mxu0
  %1975 = vdwg.mxu0
  %1976 = vmatprep.subr.bf16.mxu0 0
  %1977 = vmatpush1.bf16.msra.mxu0 %v1480
  %1978 = vmatprep.subr.bf16.mxu0 0
  %1979 = vmatpush1.bf16.msra.mxu0 %v1481
  %1980 = vmatprep.subr.bf16.mxu0 0
  %1981 = vmatpush1.bf16.msra.mxu0 %v1482
  %1982 = vmatprep.subr.bf16.mxu0 0
  %1983 = vmatpush1.bf16.msra.mxu0 %v1483
  %1984 = vmatprep.subr.bf16.mxu0 0
  %1985 = vmatpush1.bf16.msra.mxu0 %v1484
  %1986 = vmatprep.subr.bf16.mxu0 0
  %1987 = vmatpush1.bf16.msra.mxu0 %v1485
  %1988 = vmatprep.subr.bf16.mxu0 0
  %1989 = vmatpush1.bf16.msra.mxu0 %v1486
  %1990 = vmatprep.subr.bf16.mxu0 0
  %1991 = vmatpush1.bf16.msra.mxu0 %v1487
  %1992 = vmatprep.subr.bf16.mxu0 0
  %1993 = vmatpush1.bf16.msra.mxu0 %v1488
  %1994 = vmatprep.subr.bf16.mxu0 0
  %1995 = vmatpush1.bf16.msra.mxu0 %v1489
  %1996 = vmatprep.subr.bf16.mxu0 0
  %1997 = vmatpush1.bf16.msra.mxu0 %v1490
  %1998 = vmatprep.subr.bf16.mxu0 0
  %1999 = vmatpush1.bf16.msra.mxu0 %v1491
  %2000 = vmatprep.subr.bf16.mxu0 0
  %2001 = vmatpush1.bf16.msra.mxu0 %v1492
  %2002 = vmatprep.subr.bf16.mxu0 0
  %2003 = vmatpush1.bf16.msra.mxu0 %v1493
  %2004 = vmatprep.subr.bf16.mxu0 0
  %2005 = vmatpush1.bf16.msra.mxu0 %v1494
  %2006 = vmatprep.subr.bf16.mxu0 0
  %2007 = vmatpush1.bf16.msra.mxu0 %v1495
  %2008 = vmatprep.mubr.bf16.mxu0 %v516
  %2009 = vmatmul.mubr.bf16.gmra.mrb[0].mxu0 %v502
  %v2010 = vpop.f32.mrb[0].mxu0
  %v2011 = vadd.f32 %v1971, %v2010
  %v2012 = vpop.f32.mrb[0].mxu0
  %v2013 = vpop.f32.mrb[0].mxu0
  %v2014 = vpop.f32.mrb[0].mxu0
  %2015 = vdwg.mxu0
  %2016 = vmatprep.subr.bf16.mxu0 0
  %2017 = vmatpush1.bf16.msra.mxu0 %v1496
  %2018 = vmatprep.subr.bf16.mxu0 0
  %2019 = vmatpush1.bf16.msra.mxu0 %v1497
  %2020 = vmatprep.subr.bf16.mxu0 0
  %2021 = vmatpush1.bf16.msra.mxu0 %v1498
  %2022 = vmatprep.subr.bf16.mxu0 0
  %2023 = vmatpush1.bf16.msra.mxu0 %v1499
  %2024 = vmatprep.subr.bf16.mxu0 0
  %2025 = vmatpush1.bf16.msra.mxu0 %v1500
  %2026 = vmatprep.subr.bf16.mxu0 0
  %2027 = vmatpush1.bf16.msra.mxu0 %v1501
  %2028 = vmatprep.subr.bf16.mxu0 0
  %2029 = vmatpush1.bf16.msra.mxu0 %v1502
  %2030 = vmatprep.subr.bf16.mxu0 0
  %2031 = vmatpush1.bf16.msra.mxu0 %v1503
  %2032 = vmatprep.subr.bf16.mxu0 0
  %2033 = vmatpush1.bf16.msra.mxu0 %v1504
  %2034 = vmatprep.subr.bf16.mxu0 0
  %2035 = vmatpush1.bf16.msra.mxu0 %v1505
  %2036 = vmatprep.subr.bf16.mxu0 0
  %2037 = vmatpush1.bf16.msra.mxu0 %v1506
  %2038 = vmatprep.subr.bf16.mxu0 0
  %2039 = vmatpush1.bf16.msra.mxu0 %v1507
  %2040 = vmatprep.subr.bf16.mxu0 0
  %2041 = vmatpush1.bf16.msra.mxu0 %v1508
  %2042 = vmatprep.subr.bf16.mxu0 0
  %2043 = vmatpush1.bf16.msra.mxu0 %v1509
  %2044 = vmatprep.subr.bf16.mxu0 0
  %2045 = vmatpush1.bf16.msra.mxu0 %v1510
  %2046 = vmatprep.subr.bf16.mxu0 0
  %2047 = vmatpush1.bf16.msra.mxu0 %v1511
  %2048 = vmatprep.mubr.bf16.mxu0 %v526
  %2049 = vmatmul.mubr.bf16.gmra.mrb[0].mxu0 %v524
  %v2050 = vpop.f32.mrb[0].mxu0
  %v2051 = vadd.f32 %v2011, %v2050
  %v2052 = vpop.f32.mrb[0].mxu0
  %v2053 = vpop.f32.mrb[0].mxu0
  %v2054 = vpop.f32.mrb[0].mxu0
  %2055 = vdwg.mxu0
  %2056 = vmatprep.subr.bf16.mxu0 0
  %2057 = vmatpush1.bf16.msra.mxu0 %v1512
  %2058 = vmatprep.subr.bf16.mxu0 0
  %2059 = vmatpush1.bf16.msra.mxu0 %v1513
  %2060 = vmatprep.subr.bf16.mxu0 0
  %2061 = vmatpush1.bf16.msra.mxu0 %v1514
  %2062 = vmatprep.subr.bf16.mxu0 0
  %2063 = vmatpush1.bf16.msra.mxu0 %v1515
  %2064 = vmatprep.subr.bf16.mxu0 0
  %2065 = vmatpush1.bf16.msra.mxu0 %v1516
  %2066 = vmatprep.subr.bf16.mxu0 0
  %2067 = vmatpush1.bf16.msra.mxu0 %v1517
  %2068 = vmatprep.subr.bf16.mxu0 0
  %2069 = vmatpush1.bf16.msra.mxu0 %v1518
  %2070 = vmatprep.subr.bf16.mxu0 0
  %2071 = vmatpush1.bf16.msra.mxu0 %v1519
  %2072 = vmatprep.subr.bf16.mxu0 0
  %2073 = vmatpush1.bf16.msra.mxu0 %v1520
  %2074 = vmatprep.subr.bf16.mxu0 0
  %2075 = vmatpush1.bf16.msra.mxu0 %v1521
  %2076 = vmatprep.subr.bf16.mxu0 0
  %2077 = vmatpush1.bf16.msra.mxu0 %v1522
  %2078 = vmatprep.subr.bf16.mxu0 0
  %2079 = vmatpush1.bf16.msra.mxu0 %v1523
  %2080 = vmatprep.subr.bf16.mxu0 0
  %2081 = vmatpush1.bf16.msra.mxu0 %v1524
  %2082 = vmatprep.subr.bf16.mxu0 0
  %2083 = vmatpush1.bf16.msra.mxu0 %v1525
  %2084 = vmatprep.subr.bf16.mxu0 0
  %2085 = vmatpush1.bf16.msra.mxu0 %v1526
  %2086 = vmatprep.subr.bf16.mxu0 0
  %2087 = vmatpush1.bf16.msra.mxu0 %v1527
  %2088 = vmatprep.mubr.bf16.mxu0 %v523
  %2089 = vmatmul.mubr.bf16.gmra.mrb[0].mxu0 %v509
  %v2090 = vpop.f32.mrb[0].mxu0
  %v2091 = vadd.f32 %v2051, %v2090
  %v2092 = vpop.f32.mrb[0].mxu0
  %v2093 = vpop.f32.mrb[0].mxu0
  %v2094 = vpop.f32.mrb[0].mxu0
  %2095 = vdwg.mxu0
  %2096 = vmatprep.subr.bf16.mxu0 0
  %2097 = vmatpush1.bf16.msra.mxu0 %v1528
  %2098 = vmatprep.subr.bf16.mxu0 0
  %2099 = vmatpush1.bf16.msra.mxu0 %v1529
  %2100 = vmatprep.subr.bf16.mxu0 0
  %2101 = vmatpush1.bf16.msra.mxu0 %v1530
  %2102 = vmatprep.subr.bf16.mxu0 0
  %2103 = vmatpush1.bf16.msra.mxu0 %v1531
  %2104 = vmatprep.subr.bf16.mxu0 0
  %2105 = vmatpush1.bf16.msra.mxu0 %v1532
  %2106 = vmatprep.subr.bf16.mxu0 0
  %2107 = vmatpush1.bf16.msra.mxu0 %v1533
  %2108 = vmatprep.subr.bf16.mxu0 0
  %2109 = vmatpush1.bf16.msra.mxu0 %v1534
  %2110 = vmatprep.subr.bf16.mxu0 0
  %2111 = vmatpush1.bf16.msra.mxu0 %v1535
  %2112 = vmatprep.subr.bf16.mxu0 0
  %2113 = vmatpush1.bf16.msra.mxu0 %v1536
  %2114 = vmatprep.subr.bf16.mxu0 0
  %2115 = vmatpush1.bf16.msra.mxu0 %v1537
  %2116 = vmatprep.subr.bf16.mxu0 0
  %2117 = vmatpush1.bf16.msra.mxu0 %v1538
  %2118 = vmatprep.subr.bf16.mxu0 0
  %2119 = vmatpush1.bf16.msra.mxu0 %v1539
  %2120 = vmatprep.subr.bf16.mxu0 0
  %2121 = vmatpush1.bf16.msra.mxu0 %v1540
  %2122 = vmatprep.subr.bf16.mxu0 0
  %2123 = vmatpush1.bf16.msra.mxu0 %v1541
  %2124 = vmatprep.subr.bf16.mxu0 0
  %2125 = vmatpush1.bf16.msra.mxu0 %v1542
  %2126 = vmatprep.subr.bf16.mxu0 0
  %2127 = vmatpush1.bf16.msra.mxu0 %v1543
  %2128 = vmatprep.mubr.bf16.mxu0 %v527
  %2129 = vmatmul.mubr.bf16.gmra.mrb[0].mxu0 %v525
  %v2130 = vpop.f32.mrb[0].mxu0
  %v2131 = vadd.f32 %v2091, %v2130
  %v2132 = vpop.f32.mrb[0].mxu0
  %v2133 = vpop.f32.mrb[0].mxu0
  %v2134 = vpop.f32.mrb[0].mxu0
  %2135 = vdwg.mxu0
  %2136 = vmatprep.subr.bf16.mxu0 0
  %2137 = vmatpush1.bf16.msra.mxu0 %v1544
  %2138 = vmatprep.subr.bf16.mxu0 0
  %2139 = vmatpush1.bf16.msra.mxu0 %v1545
  %2140 = vmatprep.subr.bf16.mxu0 0
  %2141 = vmatpush1.bf16.msra.mxu0 %v1546
  %2142 = vmatprep.subr.bf16.mxu0 0
  %2143 = vmatpush1.bf16.msra.mxu0 %v1547
  %2144 = vmatprep.subr.bf16.mxu0 0
  %2145 = vmatpush1.bf16.msra.mxu0 %v1548
  %2146 = vmatprep.subr.bf16.mxu0 0
  %2147 = vmatpush1.bf16.msra.mxu0 %v1549
  %2148 = vmatprep.subr.bf16.mxu0 0
  %2149 = vmatpush1.bf16.msra.mxu0 %v1550
  %2150 = vmatprep.subr.bf16.mxu0 0
  %2151 = vmatpush1.bf16.msra.mxu0 %v1551
  %2152 = vmatprep.subr.bf16.mxu0 0
  %2153 = vmatpush1.bf16.msra.mxu0 %v1552
  %2154 = vmatprep.subr.bf16.mxu0 0
  %2155 = vmatpush1.bf16.msra.mxu0 %v1553
  %2156 = vmatprep.subr.bf16.mxu0 0
  %2157 = vmatpush1.bf16.msra.mxu0 %v1554
  %2158 = vmatprep.subr.bf16.mxu0 0
  %2159 = vmatpush1.bf16.msra.mxu0 %v1555
  %2160 = vmatprep.subr.bf16.mxu0 0
  %2161 = vmatpush1.bf16.msra.mxu0 %v1556
  %2162 = vmatprep.subr.bf16.mxu0 0
  %2163 = vmatpush1.bf16.msra.mxu0 %v1557
  %2164 = vmatprep.subr.bf16.mxu0 0
  %2165 = vmatpush1.bf16.msra.mxu0 %v1558
  %2166 = vmatprep.subr.bf16.mxu0 0
  %2167 = vmatpush1.bf16.msra.mxu0 %v1559
  %2168 = vmatprep.mubr.bf16.mxu0 %v565
  %2169 = vmatmul.mubr.bf16.gmra.mrb[0].mxu0 %v551
  %v2170 = vpop.f32.mrb[0].mxu0
  %v2171 = vadd.f32 %v2131, %v2170
  %v2172 = vpop.f32.mrb[0].mxu0
  %v2173 = vpop.f32.mrb[0].mxu0
  %v2174 = vpop.f32.mrb[0].mxu0
  %2175 = vdwg.mxu0
  %2176 = vmatprep.subr.bf16.mxu0 0
  %2177 = vmatpush1.bf16.msra.mxu0 %v1560
  %2178 = vmatprep.subr.bf16.mxu0 0
  %2179 = vmatpush1.bf16.msra.mxu0 %v1561
  %2180 = vmatprep.subr.bf16.mxu0 0
  %2181 = vmatpush1.bf16.msra.mxu0 %v1562
  %2182 = vmatprep.subr.bf16.mxu0 0
  %2183 = vmatpush1.bf16.msra.mxu0 %v1563
  %2184 = vmatprep.subr.bf16.mxu0 0
  %2185 = vmatpush1.bf16.msra.mxu0 %v1564
  %2186 = vmatprep.subr.bf16.mxu0 0
  %2187 = vmatpush1.bf16.msra.mxu0 %v1565
  %2188 = vmatprep.subr.bf16.mxu0 0
  %2189 = vmatpush1.bf16.msra.mxu0 %v1566
  %2190 = vmatprep.subr.bf16.mxu0 0
  %2191 = vmatpush1.bf16.msra.mxu0 %v1567
  %2192 = vmatprep.subr.bf16.mxu0 0
  %2193 = vmatpush1.bf16.msra.mxu0 %v1568
  %2194 = vmatprep.subr.bf16.mxu0 0
  %2195 = vmatpush1.bf16.msra.mxu0 %v1569
  %2196 = vmatprep.subr.bf16.mxu0 0
  %2197 = vmatpush1.bf16.msra.mxu0 %v1570
  %2198 = vmatprep.subr.bf16.mxu0 0
  %2199 = vmatpush1.bf16.msra.mxu0 %v1571
  %2200 = vmatprep.subr.bf16.mxu0 0
  %2201 = vmatpush1.bf16.msra.mxu0 %v1572
  %2202 = vmatprep.subr.bf16.mxu0 0
  %2203 = vmatpush1.bf16.msra.mxu0 %v1573
  %2204 = vmatprep.subr.bf16.mxu0 0
  %2205 = vmatpush1.bf16.msra.mxu0 %v1574
  %2206 = vmatprep.subr.bf16.mxu0 0
  %2207 = vmatpush1.bf16.msra.mxu0 %v1575
  %2208 = vmatprep.mubr.bf16.mxu0 %v575
  %2209 = vmatmul.mubr.bf16.gmra.mrb[0].mxu0 %v573
  %v2210 = vpop.f32.mrb[0].mxu0
  %v2211 = vadd.f32 %v2171, %v2210
  %v2212 = vpop.f32.mrb[0].mxu0
  %v2213 = vpop.f32.mrb[0].mxu0
  %v2214 = vpop.f32.mrb[0].mxu0
  %2215 = vdwg.mxu0
  %2216 = vmatprep.subr.bf16.mxu0 0
  %2217 = vmatpush1.bf16.msra.mxu0 %v1576
  %2218 = vmatprep.subr.bf16.mxu0 0
  %2219 = vmatpush1.bf16.msra.mxu0 %v1577
  %2220 = vmatprep.subr.bf16.mxu0 0
  %2221 = vmatpush1.bf16.msra.mxu0 %v1578
  %2222 = vmatprep.subr.bf16.mxu0 0
  %2223 = vmatpush1.bf16.msra.mxu0 %v1579
  %2224 = vmatprep.subr.bf16.mxu0 0
  %2225 = vmatpush1.bf16.msra.mxu0 %v1580
  %2226 = vmatprep.subr.bf16.mxu0 0
  %2227 = vmatpush1.bf16.msra.mxu0 %v1581
  %2228 = vmatprep.subr.bf16.mxu0 0
  %2229 = vmatpush1.bf16.msra.mxu0 %v1582
  %2230 = vmatprep.subr.bf16.mxu0 0
  %2231 = vmatpush1.bf16.msra.mxu0 %v1583
  %2232 = vmatprep.subr.bf16.mxu0 0
  %2233 = vmatpush1.bf16.msra.mxu0 %v1584
  %2234 = vmatprep.subr.bf16.mxu0 0
  %2235 = vmatpush1.bf16.msra.mxu0 %v1585
  %2236 = vmatprep.subr.bf16.mxu0 0
  %2237 = vmatpush1.bf16.msra.mxu0 %v1586
  %2238 = vmatprep.subr.bf16.mxu0 0
  %2239 = vmatpush1.bf16.msra.mxu0 %v1587
  %2240 = vmatprep.subr.bf16.mxu0 0
  %2241 = vmatpush1.bf16.msra.mxu0 %v1588
  %2242 = vmatprep.subr.bf16.mxu0 0
  %2243 = vmatpush1.bf16.msra.mxu0 %v1589
  %2244 = vmatprep.subr.bf16.mxu0 0
  %2245 = vmatpush1.bf16.msra.mxu0 %v1590
  %2246 = vmatprep.subr.bf16.mxu0 0
  %2247 = vmatpush1.bf16.msra.mxu0 %v1591
  %2248 = vmatprep.mubr.bf16.mxu0 %v572
  %2249 = vmatmul.mubr.bf16.gmra.mrb[0].mxu0 %v558
  %v2250 = vpop.f32.mrb[0].mxu0
  %v2251 = vadd.f32 %v2211, %v2250
  %v2252 = vpop.f32.mrb[0].mxu0
  %v2253 = vpop.f32.mrb[0].mxu0
  %v2254 = vpop.f32.mrb[0].mxu0
  %2255 = vdwg.mxu0
  %2256 = vmatprep.subr.bf16.mxu0 0
  %2257 = vmatpush1.bf16.msra.mxu0 %v1592
  %2258 = vmatprep.subr.bf16.mxu0 0
  %2259 = vmatpush1.bf16.msra.mxu0 %v1593
  %2260 = vmatprep.subr.bf16.mxu0 0
  %2261 = vmatpush1.bf16.msra.mxu0 %v1594
  %2262 = vmatprep.subr.bf16.mxu0 0
  %2263 = vmatpush1.bf16.msra.mxu0 %v1595
  %2264 = vmatprep.subr.bf16.mxu0 0
  %2265 = vmatpush1.bf16.msra.mxu0 %v1596
  %2266 = vmatprep.subr.bf16.mxu0 0
  %2267 = vmatpush1.bf16.msra.mxu0 %v1597
  %2268 = vmatprep.subr.bf16.mxu0 0
  %2269 = vmatpush1.bf16.msra.mxu0 %v1598
  %2270 = vmatprep.subr.bf16.mxu0 0
  %2271 = vmatpush1.bf16.msra.mxu0 %v1599
  %2272 = vmatprep.subr.bf16.mxu0 0
  %2273 = vmatpush1.bf16.msra.mxu0 %v1600
  %2274 = vmatprep.subr.bf16.mxu0 0
  %2275 = vmatpush1.bf16.msra.mxu0 %v1601
  %2276 = vmatprep.subr.bf16.mxu0 0
  %2277 = vmatpush1.bf16.msra.mxu0 %v1602
  %2278 = vmatprep.subr.bf16.mxu0 0
  %2279 = vmatpush1.bf16.msra.mxu0 %v1603
  %2280 = vmatprep.subr.bf16.mxu0 0
  %2281 = vmatpush1.bf16.msra.mxu0 %v1604
  %2282 = vmatprep.subr.bf16.mxu0 0
  %2283 = vmatpush1.bf16.msra.mxu0 %v1605
  %2284 = vmatprep.subr.bf16.mxu0 0
  %2285 = vmatpush1.bf16.msra.mxu0 %v1606
  %2286 = vmatprep.subr.bf16.mxu0 0
  %2287 = vmatpush1.bf16.msra.mxu0 %v1607
  %2288 = vmatprep.mubr.bf16.mxu0 %v576
  %2289 = vmatmul.mubr.bf16.gmra.mrb[0].mxu0 %v574
  %v2290 = vpop.f32.mrb[0].mxu0
  %v2291 = vadd.f32 %v2251, %v2290
  %v2292 = vpop.f32.mrb[0].mxu0
  %v2293 = vpop.f32.mrb[0].mxu0
  %v2294 = vpop.f32.mrb[0].mxu0
  %2295 = vdwg.mxu0
  %2296 = vmatprep.subr.bf16.mxu0 0
  %2297 = vmatpush1.bf16.msra.mxu0 %v1608
  %2298 = vmatprep.subr.bf16.mxu0 0
  %2299 = vmatpush1.bf16.msra.mxu0 %v1609
  %2300 = vmatprep.subr.bf16.mxu0 0
  %2301 = vmatpush1.bf16.msra.mxu0 %v1610
  %2302 = vmatprep.subr.bf16.mxu0 0
  %2303 = vmatpush1.bf16.msra.mxu0 %v1611
  %2304 = vmatprep.subr.bf16.mxu0 0
  %2305 = vmatpush1.bf16.msra.mxu0 %v1612
  %2306 = vmatprep.subr.bf16.mxu0 0
  %2307 = vmatpush1.bf16.msra.mxu0 %v1613
  %2308 = vmatprep.subr.bf16.mxu0 0
  %2309 = vmatpush1.bf16.msra.mxu0 %v1614
  %2310 = vmatprep.subr.bf16.mxu0 0
  %2311 = vmatpush1.bf16.msra.mxu0 %v1615
  %2312 = vmatprep.subr.bf16.mxu0 0
  %2313 = vmatpush1.bf16.msra.mxu0 0
  %2314 = vmatprep.subr.bf16.mxu0 0
  %2315 = vmatpush1.bf16.msra.mxu0 0
  %2316 = vmatprep.subr.bf16.mxu0 0
  %2317 = vmatpush1.bf16.msra.mxu0 0
  %2318 = vmatprep.subr.bf16.mxu0 0
  %2319 = vmatpush1.bf16.msra.mxu0 0
  %2320 = vmatprep.subr.bf16.mxu0 0
  %2321 = vmatpush1.bf16.msra.mxu0 0
  %2322 = vmatprep.subr.bf16.mxu0 0
  %2323 = vmatpush1.bf16.msra.mxu0 0
  %2324 = vmatprep.subr.bf16.mxu0 0
  %2325 = vmatpush1.bf16.msra.mxu0 0
  %2326 = vmatprep.subr.bf16.mxu0 0
  %2327 = vmatpush1.bf16.msra.mxu0 0
  %2328 = vmatprep.mubr.bf16.mxu0 0
  %2329 = vmatmul.mubr.bf16.gmra.mrb[0].mxu0 %v590
  %v2330 = vpop.f32.mrb[0].mxu0
  %v2331 = vadd.f32 %v2291, %v2330
  %v2332 = vpop.f32.mrb[0].mxu0
  %v2333 = vpop.f32.mrb[0].mxu0
  %v2334 = vpop.f32.mrb[0].mxu0
  %2335 = vdwg.mxu0
  %2336 = vst [vmem:[%s3] sm:$0x3] %v2331
  // Predicated region
  $region14: #{model_switch2_forward.5} parent=0 // pred_check
    _
  $region15: #{model_switch2_forward.5} parent=0 // pred_check_branch
    %2338 = sbr.rel (0) target = $region17
  $region16: #{model_switch2_forward.5} parent=0 // pred_region
    _
  $region17: #{model_switch2_forward.5} parent=0 // pred_fallthru
    _
  // Predicated region
  $region18: #{model_switch2_forward.5} parent=0 // pred_check
    _
  $region19: #{model_switch2_forward.5} parent=0 // pred_check_branch
    %2340 = sbr.rel (0) target = $region21
  $region20: #{model_switch2_forward.5} parent=0 // pred_region
    _
  $region21: #{model_switch2_forward.5} parent=0 // pred_fallthru
    _

</llo_original>
